<compile_context>
chip_gen: v7x
topology: tpu7x:2x2x1
jax: 0.10.0
libtpu: 0.0.40
codegen_flags: <defaults>
</compile_context>

<pallas_src>
import jax
import jax.numpy as jnp
from jax import lax
from jax.experimental import pallas as pl
from jax.experimental.pallas import tpu as pltpu


# ----------------------------------------------------------------------------
# Padding helpers (gate-block-aware: the 4H axis is [i | f | g | o]).
# ----------------------------------------------------------------------------
def _round_up(n, m):
    return ((n + m - 1) // m) * m


def _pad_gate_cols(w, H, Hp):
    """Pad the trailing (4H) gate axis to 4*Hp, padding each i/f/g/o block."""
    if H == Hp:
        return w
    pads = [(0, 0)] * (w.ndim - 1) + [(0, Hp - H)]
    parts = [jnp.pad(w[..., k * H:(k + 1) * H], pads) for k in range(4)]
    return jnp.concatenate(parts, axis=-1)


def _pad_rows(w, H, Hp):
    if H == Hp:
        return w
    return jnp.pad(w, [(0, Hp - H)] + [(0, 0)] * (w.ndim - 1))


# ----------------------------------------------------------------------------
# Pallas kernel: entire sequence in one invocation (no grid).
#   x_ref    : (seq, Bp, 1)    raw (padded) inputs
#   wih0_ref : (1, 4*Hp)       layer-0 input weights (input dim = 1)
#   b0_ref   : (1, 4*Hp)       layer-0 fused bias (b_ih + b_hh)
#   whh0_ref : (Hp, 4*Hp)      layer-0 recurrent weights
#   w1_ref   : (2*Hp, 4*Hp)    layer-1 [W_ih ; W_hh] stacked
#   b1_ref   : (1, 4*Hp)       layer-1 fused bias
#   wlin_ref : (Hp, Vp)        head weight^T
#   blin_ref : (1, Vp)         head bias
#   out_ref  : (seq*Bp, Vp)    logits, lane-dense
#   h1_seq   : (seq*Bp, Hp)    VMEM scratch holding the layer-1 h history
# ----------------------------------------------------------------------------
def _lstm_seq_kernel(x_ref, wih0_ref, b0_ref, whh0_ref, w1_ref, b1_ref,
                     wlin_ref, blin_ref, out_ref, h1_seq):
    seq, Bp, _ = x_ref.shape
    Hp = whh0_ref.shape[0]

    # Hoist only the SMALL broadcasts out of the loop (few vregs each).  The
    # big weight tensors are read from VMEM inside each dot so the register
    # allocator never has to keep 192 vregs of weights live across the loop.
    wih0_b = jnp.broadcast_to(wih0_ref[...], (Bp, 4 * Hp))
    b0_b = jnp.broadcast_to(b0_ref[...], (Bp, 4 * Hp))
    b1_b = jnp.broadcast_to(b1_ref[...], (Bp, 4 * Hp))

    def sigmoid_t(x):
        # 1 EUP op (tanh) + VPU mul/add instead of exp + reciprocal.
        return 0.5 * (1.0 + jnp.tanh(0.5 * x))

    def activate(gates, c_prev):
        # PyTorch gate order: i, f, g, o.  Each slice is a full 128-lane tile.
        i_g = sigmoid_t(gates[:, 0 * Hp:1 * Hp])
        f_g = sigmoid_t(gates[:, 1 * Hp:2 * Hp])
        g_g = jnp.tanh(gates[:, 2 * Hp:3 * Hp])
        o_g = sigmoid_t(gates[:, 3 * Hp:4 * Hp])
        c_new = f_g * c_prev + i_g * g_g
        h_new = o_g * jnp.tanh(c_new)
        return h_new, c_new

    def step(t, carry):
        h0, c0, h1, c1 = carry
        # Layer 0: input dim is 1 -> the input projection is one broadcast-mul.
        x_t = x_ref[t]                                        # (Bp, 1)
        g0 = (x_t * wih0_b + b0_b
              + jnp.dot(h0, whh0_ref[...],
                        preferred_element_type=jnp.float32))
        h0, c0 = activate(g0, c0)
        # Layer 1: single fused K=2*Hp contraction for [W_ih ; W_hh].
        h01 = jnp.concatenate([h0, h1], axis=-1)              # (Bp, 2*Hp)
        g1 = (jnp.dot(h01, w1_ref[...],
                      preferred_element_type=jnp.float32) + b1_b)
        h1, c1 = activate(g1, c1)
        # Record h1 for the (single) fused linear head at the end.
        row = pl.multiple_of(t * Bp, Bp)                      # aligned tile store
        h1_seq[pl.ds(row, Bp), :] = h1
        return (h0, c0, h1, c1)

    zeros = jnp.zeros((Bp, Hp), jnp.float32)
    # Full unroll only for short sequences; bounded partial unroll otherwise.
    unroll = True if seq <= 32 else 8
    lax.fori_loop(0, seq, step, (zeros, zeros, zeros, zeros), unroll=unroll)

    # Linear head: one lane-dense matmul + unmasked 128-wide store.
    out_ref[...] = (jnp.dot(h1_seq[...], wlin_ref[...],
                            preferred_element_type=jnp.float32)
                    + blin_ref[...])


# ----------------------------------------------------------------------------
# Wrapper: pad to vreg-friendly shapes, stack layer-1 weights, call the kernel.
# ----------------------------------------------------------------------------
@jax.jit
def lstm_text_model_forward(x, params):
    """Pallas forward for the len(x) > 1 branch of TextGenerationModel.

    x: (seq, batch, 1) float32; returns (seq, batch, vocab) float32 logits.
    """
    seq, B, _ = x.shape
    H = params["whh0_t"].shape[0]
    V = params["wlin_t"].shape[1]
    Bp = _round_up(max(B, 8), 8)      # full sublane tile
    Hp = _round_up(H, 128)            # full lane tile per gate
    Vp = _round_up(V, 128)            # lane-dense head output

    # ---- weight padding (zero padding is numerically inert) ----
    wih0 = _pad_gate_cols(params["wih0_t"], H, Hp)                      # (1, 4Hp)
    b0 = _pad_gate_cols(params["b0"], H, Hp)                            # (1, 4Hp)
    whh0 = _pad_rows(_pad_gate_cols(params["whh0_t"], H, Hp), H, Hp)    # (Hp, 4Hp)
    wih1 = _pad_rows(_pad_gate_cols(params["wih1_t"], H, Hp), H, Hp)
    whh1 = _pad_rows(_pad_gate_cols(params["whh1_t"], H, Hp), H, Hp)
    w1 = jnp.concatenate([wih1, whh1], axis=0)                          # (2Hp, 4Hp)
    b1 = _pad_gate_cols(params["b1"], H, Hp)                            # (1, 4Hp)
    wlin = jnp.pad(params["wlin_t"], ((0, Hp - H), (0, Vp - V)))        # (Hp, Vp)
    blin = jnp.pad(params["blin"], ((0, 0), (0, Vp - V)))               # (1, Vp)

    # ---- input padding only (no seq-scaled gate-padded precompute) ----
    x_p = jnp.pad(x, ((0, 0), (0, Bp - B), (0, 0)))                     # (seq, Bp, 1)

    # Explicit scoped-VMEM budget (weights + x + logits + h1 history, x2 margin).
    vmem_needed = 4 * (x_p.size + wih0.size + b0.size + whh0.size + w1.size
                       + b1.size + wlin.size + blin.size
                       + seq * Bp * Vp + seq * Bp * Hp)
    vmem_limit = int(min(max(2 * vmem_needed, 4 << 20), 48 << 20))

    out_padded = pl.pallas_call(
        _lstm_seq_kernel,
        out_shape=jax.ShapeDtypeStruct((seq * Bp, Vp), jnp.float32),
        scratch_shapes=[pltpu.VMEM((seq * Bp, Hp), jnp.float32)],
        compiler_params=pltpu.CompilerParams(vmem_limit_bytes=vmem_limit),
    )(x_p, wih0, b0, whh0, w1, b1, wlin, blin)

    return out_padded.reshape(seq, Bp, Vp)[:, :B, :V]


# ----------------------------------------------------------------------------
# Pure-JAX reference (same math, unpadded) for correctness checking.
# ----------------------------------------------------------------------------
def reference_forward(x, params):
    seq, B, _ = x.shape
    H = params["whh0_t"].shape[0]

    def cell(inp, h, c, wih, whh, b):
        gates = inp @ wih + h @ whh + b
        i_g = jax.nn.sigmoid(gates[:, 0 * H:1 * H])
        f_g = jax.nn.sigmoid(gates[:, 1 * H:2 * H])
        g_g = jnp.tanh(gates[:, 2 * H:3 * H])
        o_g = jax.nn.sigmoid(gates[:, 3 * H:4 * H])
        c_new = f_g * c + i_g * g_g
        h_new = o_g * jnp.tanh(c_new)
        return h_new, c_new

    def step(carry, x_t):
        h0, c0, h1, c1 = carry
        h0, c0 = cell(x_t, h0, c0, params["wih0_t"], params["whh0_t"], params["b0"])
        h1, c1 = cell(h0, h1, c1, params["wih1_t"], params["whh1_t"], params["b1"])
        logits = h1 @ params["wlin_t"] + params["blin"]
        return (h0, c0, h1, c1), logits

    init = tuple(jnp.zeros((B, H), jnp.float32) for _ in range(4))
    _, out = jax.lax.scan(step, init, x)
    return out  # (seq, B, V)


# ----------------------------------------------------------------------------
# Deterministic parameter construction (matches nn.LSTM(1, H, 2) + Linear(H,V)).
# ----------------------------------------------------------------------------
def make_params(key, hidden, vocab):
    ks = jax.random.split(key, 11)
    H, V = hidden, vocab
    scale = 1.0 / jnp.sqrt(jnp.float32(H))

    def u(k, shape):
        return jax.random.uniform(k, shape, jnp.float32, -scale, scale)

    # PyTorch stores W_ih (4H, in), W_hh (4H, H); we pre-transpose to (in, 4H).
    wih0_t = u(ks[0], (1, 4 * H))
    whh0_t = u(ks[1], (H, 4 * H))
    b0 = (u(ks[2], (1, 4 * H)) + u(ks[3], (1, 4 * H)))   # b_ih + b_hh fused
    wih1_t = u(ks[4], (H, 4 * H))
    whh1_t = u(ks[5], (H, 4 * H))
    b1 = (u(ks[6], (1, 4 * H)) + u(ks[7], (1, 4 * H)))
    wlin_t = u(ks[8], (H, V))                             # Linear weight^T
    blin = u(ks[9], (1, V))
    return dict(wih0_t=wih0_t, whh0_t=whh0_t, b0=b0,
                wih1_t=wih1_t, whh1_t=whh1_t, b1=b1,
                wlin_t=wlin_t, blin=blin)


# TODO(synk): the len(x)==1 autoregressive branch (argmax feedback of generated
# tokens) is data-dependent sequential decoding and is not implemented here.

if __name__ == "__main__":
    batch_size = 2
    seq_length = 8
    vocab_size = 32
    hidden = 32

    key = jax.random.PRNGKey(0)
    k_par, k_x = jax.random.split(key)
    params = make_params(k_par, hidden, vocab_size)

    # Integer token ids -> float, viewed time-major as (seq, batch, 1),
    # exactly like x.view(seq_length, -1, 1).float() in the PyTorch module.
    tokens = jax.random.randint(k_x, (seq_length, batch_size), 0, vocab_size)
    x = tokens.astype(jnp.float32).reshape(seq_length, batch_size, 1)

    out = lstm_text_model_forward(x, params)
    out = jax.block_until_ready(out)

    ref = reference_forward(x, params)
    assert out.shape == (seq_length, batch_size, vocab_size)
    assert jnp.allclose(out, ref, rtol=1e-4, atol=1e-4), "mismatch vs JAX reference"

    print("KERNEL_OK")
</pallas_src>

<mosaic_0001>
module attributes {stable_mosaic.version = 11 : i64} {
  func.func @_lstm_seq_kernel(%arg0: memref<8x8x1xf32, #tpu.memory_space<vmem>>, %arg1: memref<1x512xf32, #tpu.memory_space<vmem>>, %arg2: memref<1x512xf32, #tpu.memory_space<vmem>>, %arg3: memref<128x512xf32, #tpu.memory_space<vmem>>, %arg4: memref<256x512xf32, #tpu.memory_space<vmem>>, %arg5: memref<1x512xf32, #tpu.memory_space<vmem>>, %arg6: memref<128x128xf32, #tpu.memory_space<vmem>>, %arg7: memref<1x128xf32, #tpu.memory_space<vmem>>, %arg8: memref<64x128xf32, #tpu.memory_space<vmem>>, %arg9: memref<64x128xf32, #tpu.memory_space<vmem>>) attributes {dimension_semantics = [], scalar_prefetch = 0 : i64, scratch_operands = 1 : i64, tpu.core_type = #tpu.core_type<tc>} {
    %c0 = arith.constant 0 : index
    %c0_0 = arith.constant 0 : index
    %0 = vector.load %arg1[%c0, %c0_0] : memref<1x512xf32, #tpu.memory_space<vmem>>, vector<1x512xf32>
    %1 = vector.shape_cast %0 : vector<1x512xf32> to vector<1x512xf32>
    %2 = vector.broadcast %1 : vector<1x512xf32> to vector<8x512xf32>
    %c0_1 = arith.constant 0 : index
    %c0_2 = arith.constant 0 : index
    %3 = vector.load %arg2[%c0_1, %c0_2] : memref<1x512xf32, #tpu.memory_space<vmem>>, vector<1x512xf32>
    %4 = vector.shape_cast %3 : vector<1x512xf32> to vector<1x512xf32>
    %5 = vector.broadcast %4 : vector<1x512xf32> to vector<8x512xf32>
    %c0_3 = arith.constant 0 : index
    %c0_4 = arith.constant 0 : index
    %6 = vector.load %arg5[%c0_3, %c0_4] : memref<1x512xf32, #tpu.memory_space<vmem>>, vector<1x512xf32>
    %7 = vector.shape_cast %6 : vector<1x512xf32> to vector<1x512xf32>
    %8 = vector.broadcast %7 : vector<1x512xf32> to vector<8x512xf32>
    %cst = arith.constant 0.000000e+00 : f32
    %9 = vector.broadcast %cst : f32 to vector<8x128xf32>
    %c0_i32 = arith.constant 0 : i32
    %10 = arith.index_cast %c0_i32 : i32 to index
    %c0_5 = arith.constant 0 : index
    %c0_6 = arith.constant 0 : index
    %11 = vector.load %arg0[%10, %c0_5, %c0_6] : memref<8x8x1xf32, #tpu.memory_space<vmem>>, vector<1x8x1xf32>
    %12 = vector.shape_cast %11 : vector<1x8x1xf32> to vector<8x1xf32>
    %13 = vector.broadcast %12 : vector<8x1xf32> to vector<8x512xf32>
    %14 = arith.mulf %13, %2 : vector<8x512xf32>
    %15 = arith.addf %14, %5 : vector<8x512xf32>
    %c0_7 = arith.constant 0 : index
    %c0_8 = arith.constant 0 : index
    %16 = vector.load %arg3[%c0_7, %c0_8] : memref<128x512xf32, #tpu.memory_space<vmem>>, vector<128x512xf32>
    %cst_9 = arith.constant dense<0.000000e+00> : vector<8x512xf32>
    %17 = tpu.matmul %9, %16, %cst_9 {dimension_numbers = #tpu.dot_dimension_numbers<[1], [0], [0], [1], [0, 0, 1, 1], [], []>} : vector<8x128xf32>, vector<128x512xf32>, vector<8x512xf32> -> vector<8x512xf32>
    %18 = arith.addf %15, %17 : vector<8x512xf32>
    %19 = vector.extract_strided_slice %18 {offsets = [0, 0], sizes = [8, 128], strides = [1, 1]} : vector<8x512xf32> to vector<8x128xf32>
    %cst_10 = arith.constant 5.000000e-01 : f32
    %20 = vector.broadcast %cst_10 : f32 to vector<8x128xf32>
    %21 = arith.mulf %20, %19 : vector<8x128xf32>
    %22 = math.tanh %21 : vector<8x128xf32>
    %cst_11 = arith.constant 1.000000e+00 : f32
    %23 = vector.broadcast %cst_11 : f32 to vector<8x128xf32>
    %24 = arith.addf %23, %22 : vector<8x128xf32>
    %cst_12 = arith.constant 5.000000e-01 : f32
    %25 = vector.broadcast %cst_12 : f32 to vector<8x128xf32>
    %26 = arith.mulf %25, %24 : vector<8x128xf32>
    %27 = vector.extract_strided_slice %18 {offsets = [0, 128], sizes = [8, 128], strides = [1, 1]} : vector<8x512xf32> to vector<8x128xf32>
    %cst_13 = arith.constant 5.000000e-01 : f32
    %28 = vector.broadcast %cst_13 : f32 to vector<8x128xf32>
    %29 = arith.mulf %28, %27 : vector<8x128xf32>
    %30 = math.tanh %29 : vector<8x128xf32>
    %cst_14 = arith.constant 1.000000e+00 : f32
    %31 = vector.broadcast %cst_14 : f32 to vector<8x128xf32>
    %32 = arith.addf %31, %30 : vector<8x128xf32>
    %cst_15 = arith.constant 5.000000e-01 : f32
    %33 = vector.broadcast %cst_15 : f32 to vector<8x128xf32>
    %34 = arith.mulf %33, %32 : vector<8x128xf32>
    %35 = vector.extract_strided_slice %18 {offsets = [0, 256], sizes = [8, 128], strides = [1, 1]} : vector<8x512xf32> to vector<8x128xf32>
    %36 = math.tanh %35 : vector<8x128xf32>
    %37 = vector.extract_strided_slice %18 {offsets = [0, 384], sizes = [8, 128], strides = [1, 1]} : vector<8x512xf32> to vector<8x128xf32>
    %cst_16 = arith.constant 5.000000e-01 : f32
    %38 = vector.broadcast %cst_16 : f32 to vector<8x128xf32>
    %39 = arith.mulf %38, %37 : vector<8x128xf32>
    %40 = math.tanh %39 : vector<8x128xf32>
    %cst_17 = arith.constant 1.000000e+00 : f32
    %41 = vector.broadcast %cst_17 : f32 to vector<8x128xf32>
    %42 = arith.addf %41, %40 : vector<8x128xf32>
    %cst_18 = arith.constant 5.000000e-01 : f32
    %43 = vector.broadcast %cst_18 : f32 to vector<8x128xf32>
    %44 = arith.mulf %43, %42 : vector<8x128xf32>
    %45 = arith.mulf %34, %9 : vector<8x128xf32>
    %46 = arith.mulf %26, %36 : vector<8x128xf32>
    %47 = arith.addf %45, %46 : vector<8x128xf32>
    %48 = math.tanh %47 : vector<8x128xf32>
    %49 = arith.mulf %44, %48 : vector<8x128xf32>
    %50 = tpu.concatenate %49, %9 in 1 : vector<8x128xf32>, vector<8x128xf32> -> vector<8x256xf32>
    %c0_19 = arith.constant 0 : index
    %c0_20 = arith.constant 0 : index
    %51 = vector.load %arg4[%c0_19, %c0_20] : memref<256x512xf32, #tpu.memory_space<vmem>>, vector<256x512xf32>
    %cst_21 = arith.constant dense<0.000000e+00> : vector<8x512xf32>
    %52 = tpu.matmul %50, %51, %cst_21 {dimension_numbers = #tpu.dot_dimension_numbers<[1], [0], [0], [1], [0, 0, 1, 1], [], []>} : vector<8x256xf32>, vector<256x512xf32>, vector<8x512xf32> -> vector<8x512xf32>
    %53 = arith.addf %52, %8 : vector<8x512xf32>
    %54 = vector.extract_strided_slice %53 {offsets = [0, 0], sizes = [8, 128], strides = [1, 1]} : vector<8x512xf32> to vector<8x128xf32>
    %cst_22 = arith.constant 5.000000e-01 : f32
    %55 = vector.broadcast %cst_22 : f32 to vector<8x128xf32>
    %56 = arith.mulf %55, %54 : vector<8x128xf32>
    %57 = math.tanh %56 : vector<8x128xf32>
    %cst_23 = arith.constant 1.000000e+00 : f32
    %58 = vector.broadcast %cst_23 : f32 to vector<8x128xf32>
    %59 = arith.addf %58, %57 : vector<8x128xf32>
    %cst_24 = arith.constant 5.000000e-01 : f32
    %60 = vector.broadcast %cst_24 : f32 to vector<8x128xf32>
    %61 = arith.mulf %60, %59 : vector<8x128xf32>
    %62 = vector.extract_strided_slice %53 {offsets = [0, 128], sizes = [8, 128], strides = [1, 1]} : vector<8x512xf32> to vector<8x128xf32>
    %cst_25 = arith.constant 5.000000e-01 : f32
    %63 = vector.broadcast %cst_25 : f32 to vector<8x128xf32>
    %64 = arith.mulf %63, %62 : vector<8x128xf32>
    %65 = math.tanh %64 : vector<8x128xf32>
    %cst_26 = arith.constant 1.000000e+00 : f32
    %66 = vector.broadcast %cst_26 : f32 to vector<8x128xf32>
    %67 = arith.addf %66, %65 : vector<8x128xf32>
    %cst_27 = arith.constant 5.000000e-01 : f32
    %68 = vector.broadcast %cst_27 : f32 to vector<8x128xf32>
    %69 = arith.mulf %68, %67 : vector<8x128xf32>
    %70 = vector.extract_strided_slice %53 {offsets = [0, 256], sizes = [8, 128], strides = [1, 1]} : vector<8x512xf32> to vector<8x128xf32>
    %71 = math.tanh %70 : vector<8x128xf32>
    %72 = vector.extract_strided_slice %53 {offsets = [0, 384], sizes = [8, 128], strides = [1, 1]} : vector<8x512xf32> to vector<8x128xf32>
    %cst_28 = arith.constant 5.000000e-01 : f32
    %73 = vector.broadcast %cst_28 : f32 to vector<8x128xf32>
    %74 = arith.mulf %73, %72 : vector<8x128xf32>
    %75 = math.tanh %74 : vector<8x128xf32>
    %cst_29 = arith.constant 1.000000e+00 : f32
    %76 = vector.broadcast %cst_29 : f32 to vector<8x128xf32>
    %77 = arith.addf %76, %75 : vector<8x128xf32>
    %cst_30 = arith.constant 5.000000e-01 : f32
    %78 = vector.broadcast %cst_30 : f32 to vector<8x128xf32>
    %79 = arith.mulf %78, %77 : vector<8x128xf32>
    %80 = arith.mulf %69, %9 : vector<8x128xf32>
    %81 = arith.mulf %61, %71 : vector<8x128xf32>
    %82 = arith.addf %80, %81 : vector<8x128xf32>
    %83 = math.tanh %82 : vector<8x128xf32>
    %84 = arith.mulf %79, %83 : vector<8x128xf32>
    %c8_i32 = arith.constant 8 : i32
    %85 = arith.muli %c0_i32, %c8_i32 : i32
    %86 = tpu.assume_multiple %85, 8 : i32
    %87 = arith.index_cast %86 : i32 to index
    %c0_31 = arith.constant 0 : index
    %88 = vector.load %arg9[%87, %c0_31] : memref<64x128xf32, #tpu.memory_space<vmem>>, vector<8x128xf32>
    tpu.vector_store %arg9[%87, %c0_31], %84 {strides = array<i32>} : memref<64x128xf32, #tpu.memory_space<vmem>>, vector<8x128xf32>,
    %c1_i32 = arith.constant 1 : i32
    %89 = arith.index_cast %c1_i32 : i32 to index
    %c0_32 = arith.constant 0 : index
    %c0_33 = arith.constant 0 : index
    %90 = vector.load %arg0[%89, %c0_32, %c0_33] : memref<8x8x1xf32, #tpu.memory_space<vmem>>, vector<1x8x1xf32>
    %91 = vector.shape_cast %90 : vector<1x8x1xf32> to vector<8x1xf32>
    %92 = vector.broadcast %91 : vector<8x1xf32> to vector<8x512xf32>
    %93 = arith.mulf %92, %2 : vector<8x512xf32>
    %94 = arith.addf %93, %5 : vector<8x512xf32>
    %c0_34 = arith.constant 0 : index
    %c0_35 = arith.constant 0 : index
    %95 = vector.load %arg3[%c0_34, %c0_35] : memref<128x512xf32, #tpu.memory_space<vmem>>, vector<128x512xf32>
    %cst_36 = arith.constant dense<0.000000e+00> : vector<8x512xf32>
    %96 = tpu.matmul %49, %95, %cst_36 {dimension_numbers = #tpu.dot_dimension_numbers<[1], [0], [0], [1], [0, 0, 1, 1], [], []>} : vector<8x128xf32>, vector<128x512xf32>, vector<8x512xf32> -> vector<8x512xf32>
    %97 = arith.addf %94, %96 : vector<8x512xf32>
    %98 = vector.extract_strided_slice %97 {offsets = [0, 0], sizes = [8, 128], strides = [1, 1]} : vector<8x512xf32> to vector<8x128xf32>
    %cst_37 = arith.constant 5.000000e-01 : f32
    %99 = vector.broadcast %cst_37 : f32 to vector<8x128xf32>
    %100 = arith.mulf %99, %98 : vector<8x128xf32>
    %101 = math.tanh %100 : vector<8x128xf32>
    %cst_38 = arith.constant 1.000000e+00 : f32
    %102 = vector.broadcast %cst_38 : f32 to vector<8x128xf32>
    %103 = arith.addf %102, %101 : vector<8x128xf32>
    %cst_39 = arith.constant 5.000000e-01 : f32
    %104 = vector.broadcast %cst_39 : f32 to vector<8x128xf32>
    %105 = arith.mulf %104, %103 : vector<8x128xf32>
    %106 = vector.extract_strided_slice %97 {offsets = [0, 128], sizes = [8, 128], strides = [1, 1]} : vector<8x512xf32> to vector<8x128xf32>
    %cst_40 = arith.constant 5.000000e-01 : f32
    %107 = vector.broadcast %cst_40 : f32 to vector<8x128xf32>
    %108 = arith.mulf %107, %106 : vector<8x128xf32>
    %109 = math.tanh %108 : vector<8x128xf32>
    %cst_41 = arith.constant 1.000000e+00 : f32
    %110 = vector.broadcast %cst_41 : f32 to vector<8x128xf32>
    %111 = arith.addf %110, %109 : vector<8x128xf32>
    %cst_42 = arith.constant 5.000000e-01 : f32
    %112 = vector.broadcast %cst_42 : f32 to vector<8x128xf32>
    %113 = arith.mulf %112, %111 : vector<8x128xf32>
    %114 = vector.extract_strided_slice %97 {offsets = [0, 256], sizes = [8, 128], strides = [1, 1]} : vector<8x512xf32> to vector<8x128xf32>
    %115 = math.tanh %114 : vector<8x128xf32>
    %116 = vector.extract_strided_slice %97 {offsets = [0, 384], sizes = [8, 128], strides = [1, 1]} : vector<8x512xf32> to vector<8x128xf32>
    %cst_43 = arith.constant 5.000000e-01 : f32
    %117 = vector.broadcast %cst_43 : f32 to vector<8x128xf32>
    %118 = arith.mulf %117, %116 : vector<8x128xf32>
    %119 = math.tanh %118 : vector<8x128xf32>
    %cst_44 = arith.constant 1.000000e+00 : f32
    %120 = vector.broadcast %cst_44 : f32 to vector<8x128xf32>
    %121 = arith.addf %120, %119 : vector<8x128xf32>
    %cst_45 = arith.constant 5.000000e-01 : f32
    %122 = vector.broadcast %cst_45 : f32 to vector<8x128xf32>
    %123 = arith.mulf %122, %121 : vector<8x128xf32>
    %124 = arith.mulf %113, %47 : vector<8x128xf32>
    %125 = arith.mulf %105, %115 : vector<8x128xf32>
    %126 = arith.addf %124, %125 : vector<8x128xf32>
    %127 = math.tanh %126 : vector<8x128xf32>
    %128 = arith.mulf %123, %127 : vector<8x128xf32>
    %129 = tpu.concatenate %128, %84 in 1 : vector<8x128xf32>, vector<8x128xf32> -> vector<8x256xf32>
    %c0_46 = arith.constant 0 : index
    %c0_47 = arith.constant 0 : index
    %130 = vector.load %arg4[%c0_46, %c0_47] : memref<256x512xf32, #tpu.memory_space<vmem>>, vector<256x512xf32>
    %cst_48 = arith.constant dense<0.000000e+00> : vector<8x512xf32>
    %131 = tpu.matmul %129, %130, %cst_48 {dimension_numbers = #tpu.dot_dimension_numbers<[1], [0], [0], [1], [0, 0, 1, 1], [], []>} : vector<8x256xf32>, vector<256x512xf32>, vector<8x512xf32> -> vector<8x512xf32>
    %132 = arith.addf %131, %8 : vector<8x512xf32>
    %133 = vector.extract_strided_slice %132 {offsets = [0, 0], sizes = [8, 128], strides = [1, 1]} : vector<8x512xf32> to vector<8x128xf32>
    %cst_49 = arith.constant 5.000000e-01 : f32
    %134 = vector.broadcast %cst_49 : f32 to vector<8x128xf32>
    %135 = arith.mulf %134, %133 : vector<8x128xf32>
    %136 = math.tanh %135 : vector<8x128xf32>
    %cst_50 = arith.constant 1.000000e+00 : f32
    %137 = vector.broadcast %cst_50 : f32 to vector<8x128xf32>
    %138 = arith.addf %137, %136 : vector<8x128xf32>
    %cst_51 = arith.constant 5.000000e-01 : f32
    %139 = vector.broadcast %cst_51 : f32 to vector<8x128xf32>
    %140 = arith.mulf %139, %138 : vector<8x128xf32>
    %141 = vector.extract_strided_slice %132 {offsets = [0, 128], sizes = [8, 128], strides = [1, 1]} : vector<8x512xf32> to vector<8x128xf32>
    %cst_52 = arith.constant 5.000000e-01 : f32
    %142 = vector.broadcast %cst_52 : f32 to vector<8x128xf32>
    %143 = arith.mulf %142, %141 : vector<8x128xf32>
    %144 = math.tanh %143 : vector<8x128xf32>
    %cst_53 = arith.constant 1.000000e+00 : f32
    %145 = vector.broadcast %cst_53 : f32 to vector<8x128xf32>
    %146 = arith.addf %145, %144 : vector<8x128xf32>
    %cst_54 = arith.constant 5.000000e-01 : f32
    %147 = vector.broadcast %cst_54 : f32 to vector<8x128xf32>
    %148 = arith.mulf %147, %146 : vector<8x128xf32>
    %149 = vector.extract_strided_slice %132 {offsets = [0, 256], sizes = [8, 128], strides = [1, 1]} : vector<8x512xf32> to vector<8x128xf32>
    %150 = math.tanh %149 : vector<8x128xf32>
    %151 = vector.extract_strided_slice %132 {offsets = [0, 384], sizes = [8, 128], strides = [1, 1]} : vector<8x512xf32> to vector<8x128xf32>
    %cst_55 = arith.constant 5.000000e-01 : f32
    %152 = vector.broadcast %cst_55 : f32 to vector<8x128xf32>
    %153 = arith.mulf %152, %151 : vector<8x128xf32>
    %154 = math.tanh %153 : vector<8x128xf32>
    %cst_56 = arith.constant 1.000000e+00 : f32
    %155 = vector.broadcast %cst_56 : f32 to vector<8x128xf32>
    %156 = arith.addf %155, %154 : vector<8x128xf32>
    %cst_57 = arith.constant 5.000000e-01 : f32
    %157 = vector.broadcast %cst_57 : f32 to vector<8x128xf32>
    %158 = arith.mulf %157, %156 : vector<8x128xf32>
    %159 = arith.mulf %148, %82 : vector<8x128xf32>
    %160 = arith.mulf %140, %150 : vector<8x128xf32>
    %161 = arith.addf %159, %160 : vector<8x128xf32>
    %162 = math.tanh %161 : vector<8x128xf32>
    %163 = arith.mulf %158, %162 : vector<8x128xf32>
    %c8_i32_58 = arith.constant 8 : i32
    %164 = arith.muli %c1_i32, %c8_i32_58 : i32
    %165 = tpu.assume_multiple %164, 8 : i32
    %166 = arith.index_cast %165 : i32 to index
    %c0_59 = arith.constant 0 : index
    %167 = vector.load %arg9[%166, %c0_59] : memref<64x128xf32, #tpu.memory_space<vmem>>, vector<8x128xf32>
    tpu.vector_store %arg9[%166, %c0_59], %163 {strides = array<i32>} : memref<64x128xf32, #tpu.memory_space<vmem>>, vector<8x128xf32>,
    %c2_i32 = arith.constant 2 : i32
    %168 = arith.index_cast %c2_i32 : i32 to index
    %c0_60 = arith.constant 0 : index
    %c0_61 = arith.constant 0 : index
    %169 = vector.load %arg0[%168, %c0_60, %c0_61] : memref<8x8x1xf32, #tpu.memory_space<vmem>>, vector<1x8x1xf32>
    %170 = vector.shape_cast %169 : vector<1x8x1xf32> to vector<8x1xf32>
    %171 = vector.broadcast %170 : vector<8x1xf32> to vector<8x512xf32>
    %172 = arith.mulf %171, %2 : vector<8x512xf32>
    %173 = arith.addf %172, %5 : vector<8x512xf32>
    %c0_62 = arith.constant 0 : index
    %c0_63 = arith.constant 0 : index
    %174 = vector.load %arg3[%c0_62, %c0_63] : memref<128x512xf32, #tpu.memory_space<vmem>>, vector<128x512xf32>
    %cst_64 = arith.constant dense<0.000000e+00> : vector<8x512xf32>
    %175 = tpu.matmul %128, %174, %cst_64 {dimension_numbers = #tpu.dot_dimension_numbers<[1], [0], [0], [1], [0, 0, 1, 1], [], []>} : vector<8x128xf32>, vector<128x512xf32>, vector<8x512xf32> -> vector<8x512xf32>
    %176 = arith.addf %173, %175 : vector<8x512xf32>
    %177 = vector.extract_strided_slice %176 {offsets = [0, 0], sizes = [8, 128], strides = [1, 1]} : vector<8x512xf32> to vector<8x128xf32>
    %cst_65 = arith.constant 5.000000e-01 : f32
    %178 = vector.broadcast %cst_65 : f32 to vector<8x128xf32>
    %179 = arith.mulf %178, %177 : vector<8x128xf32>
    %180 = math.tanh %179 : vector<8x128xf32>
    %cst_66 = arith.constant 1.000000e+00 : f32
    %181 = vector.broadcast %cst_66 : f32 to vector<8x128xf32>
    %182 = arith.addf %181, %180 : vector<8x128xf32>
    %cst_67 = arith.constant 5.000000e-01 : f32
    %183 = vector.broadcast %cst_67 : f32 to vector<8x128xf32>
    %184 = arith.mulf %183, %182 : vector<8x128xf32>
    %185 = vector.extract_strided_slice %176 {offsets = [0, 128], sizes = [8, 128], strides = [1, 1]} : vector<8x512xf32> to vector<8x128xf32>
    %cst_68 = arith.constant 5.000000e-01 : f32
    %186 = vector.broadcast %cst_68 : f32 to vector<8x128xf32>
    %187 = arith.mulf %186, %185 : vector<8x128xf32>
    %188 = math.tanh %187 : vector<8x128xf32>
    %cst_69 = arith.constant 1.000000e+00 : f32
    %189 = vector.broadcast %cst_69 : f32 to vector<8x128xf32>
    %190 = arith.addf %189, %188 : vector<8x128xf32>
    %cst_70 = arith.constant 5.000000e-01 : f32
    %191 = vector.broadcast %cst_70 : f32 to vector<8x128xf32>
    %192 = arith.mulf %191, %190 : vector<8x128xf32>
    %193 = vector.extract_strided_slice %176 {offsets = [0, 256], sizes = [8, 128], strides = [1, 1]} : vector<8x512xf32> to vector<8x128xf32>
    %194 = math.tanh %193 : vector<8x128xf32>
    %195 = vector.extract_strided_slice %176 {offsets = [0, 384], sizes = [8, 128], strides = [1, 1]} : vector<8x512xf32> to vector<8x128xf32>
    %cst_71 = arith.constant 5.000000e-01 : f32
    %196 = vector.broadcast %cst_71 : f32 to vector<8x128xf32>
    %197 = arith.mulf %196, %195 : vector<8x128xf32>
    %198 = math.tanh %197 : vector<8x128xf32>
    %cst_72 = arith.constant 1.000000e+00 : f32
    %199 = vector.broadcast %cst_72 : f32 to vector<8x128xf32>
    %200 = arith.addf %199, %198 : vector<8x128xf32>
    %cst_73 = arith.constant 5.000000e-01 : f32
    %201 = vector.broadcast %cst_73 : f32 to vector<8x128xf32>
    %202 = arith.mulf %201, %200 : vector<8x128xf32>
    %203 = arith.mulf %192, %126 : vector<8x128xf32>
    %204 = arith.mulf %184, %194 : vector<8x128xf32>
    %205 = arith.addf %203, %204 : vector<8x128xf32>
    %206 = math.tanh %205 : vector<8x128xf32>
    %207 = arith.mulf %202, %206 : vector<8x128xf32>
    %208 = tpu.concatenate %207, %163 in 1 : vector<8x128xf32>, vector<8x128xf32> -> vector<8x256xf32>
    %c0_74 = arith.constant 0 : index
    %c0_75 = arith.constant 0 : index
    %209 = vector.load %arg4[%c0_74, %c0_75] : memref<256x512xf32, #tpu.memory_space<vmem>>, vector<256x512xf32>
    %cst_76 = arith.constant dense<0.000000e+00> : vector<8x512xf32>
    %210 = tpu.matmul %208, %209, %cst_76 {dimension_numbers = #tpu.dot_dimension_numbers<[1], [0], [0], [1], [0, 0, 1, 1], [], []>} : vector<8x256xf32>, vector<256x512xf32>, vector<8x512xf32> -> vector<8x512xf32>
    %211 = arith.addf %210, %8 : vector<8x512xf32>
    %212 = vector.extract_strided_slice %211 {offsets = [0, 0], sizes = [8, 128], strides = [1, 1]} : vector<8x512xf32> to vector<8x128xf32>
    %cst_77 = arith.constant 5.000000e-01 : f32
    %213 = vector.broadcast %cst_77 : f32 to vector<8x128xf32>
    %214 = arith.mulf %213, %212 : vector<8x128xf32>
    %215 = math.tanh %214 : vector<8x128xf32>
    %cst_78 = arith.constant 1.000000e+00 : f32
    %216 = vector.broadcast %cst_78 : f32 to vector<8x128xf32>
    %217 = arith.addf %216, %215 : vector<8x128xf32>
    %cst_79 = arith.constant 5.000000e-01 : f32
    %218 = vector.broadcast %cst_79 : f32 to vector<8x128xf32>
    %219 = arith.mulf %218, %217 : vector<8x128xf32>
    %220 = vector.extract_strided_slice %211 {offsets = [0, 128], sizes = [8, 128], strides = [1, 1]} : vector<8x512xf32> to vector<8x128xf32>
    %cst_80 = arith.constant 5.000000e-01 : f32
    %221 = vector.broadcast %cst_80 : f32 to vector<8x128xf32>
    %222 = arith.mulf %221, %220 : vector<8x128xf32>
    %223 = math.tanh %222 : vector<8x128xf32>
    %cst_81 = arith.constant 1.000000e+00 : f32
    %224 = vector.broadcast %cst_81 : f32 to vector<8x128xf32>
    %225 = arith.addf %224, %223 : vector<8x128xf32>
    %cst_82 = arith.constant 5.000000e-01 : f32
    %226 = vector.broadcast %cst_82 : f32 to vector<8x128xf32>
    %227 = arith.mulf %226, %225 : vector<8x128xf32>
    %228 = vector.extract_strided_slice %211 {offsets = [0, 256], sizes = [8, 128], strides = [1, 1]} : vector<8x512xf32> to vector<8x128xf32>
    %229 = math.tanh %228 : vector<8x128xf32>
    %230 = vector.extract_strided_slice %211 {offsets = [0, 384], sizes = [8, 128], strides = [1, 1]} : vector<8x512xf32> to vector<8x128xf32>
    %cst_83 = arith.constant 5.000000e-01 : f32
    %231 = vector.broadcast %cst_83 : f32 to vector<8x128xf32>
    %232 = arith.mulf %231, %230 : vector<8x128xf32>
    %233 = math.tanh %232 : vector<8x128xf32>
    %cst_84 = arith.constant 1.000000e+00 : f32
    %234 = vector.broadcast %cst_84 : f32 to vector<8x128xf32>
    %235 = arith.addf %234, %233 : vector<8x128xf32>
    %cst_85 = arith.constant 5.000000e-01 : f32
    %236 = vector.broadcast %cst_85 : f32 to vector<8x128xf32>
    %237 = arith.mulf %236, %235 : vector<8x128xf32>
    %238 = arith.mulf %227, %161 : vector<8x128xf32>
    %239 = arith.mulf %219, %229 : vector<8x128xf32>
    %240 = arith.addf %238, %239 : vector<8x128xf32>
    %241 = math.tanh %240 : vector<8x128xf32>
    %242 = arith.mulf %237, %241 : vector<8x128xf32>
    %c8_i32_86 = arith.constant 8 : i32
    %243 = arith.muli %c2_i32, %c8_i32_86 : i32
    %244 = tpu.assume_multiple %243, 8 : i32
    %245 = arith.index_cast %244 : i32 to index
    %c0_87 = arith.constant 0 : index
    %246 = vector.load %arg9[%245, %c0_87] : memref<64x128xf32, #tpu.memory_space<vmem>>, vector<8x128xf32>
    tpu.vector_store %arg9[%245, %c0_87], %242 {strides = array<i32>} : memref<64x128xf32, #tpu.memory_space<vmem>>, vector<8x128xf32>,
    %c3_i32 = arith.constant 3 : i32
    %247 = arith.index_cast %c3_i32 : i32 to index
    %c0_88 = arith.constant 0 : index
    %c0_89 = arith.constant 0 : index
    %248 = vector.load %arg0[%247, %c0_88, %c0_89] : memref<8x8x1xf32, #tpu.memory_space<vmem>>, vector<1x8x1xf32>
    %249 = vector.shape_cast %248 : vector<1x8x1xf32> to vector<8x1xf32>
    %250 = vector.broadcast %249 : vector<8x1xf32> to vector<8x512xf32>
    %251 = arith.mulf %250, %2 : vector<8x512xf32>
    %252 = arith.addf %251, %5 : vector<8x512xf32>
    %c0_90 = arith.constant 0 : index
    %c0_91 = arith.constant 0 : index
    %253 = vector.load %arg3[%c0_90, %c0_91] : memref<128x512xf32, #tpu.memory_space<vmem>>, vector<128x512xf32>
    %cst_92 = arith.constant dense<0.000000e+00> : vector<8x512xf32>
    %254 = tpu.matmul %207, %253, %cst_92 {dimension_numbers = #tpu.dot_dimension_numbers<[1], [0], [0], [1], [0, 0, 1, 1], [], []>} : vector<8x128xf32>, vector<128x512xf32>, vector<8x512xf32> -> vector<8x512xf32>
    %255 = arith.addf %252, %254 : vector<8x512xf32>
    %256 = vector.extract_strided_slice %255 {offsets = [0, 0], sizes = [8, 128], strides = [1, 1]} : vector<8x512xf32> to vector<8x128xf32>
    %cst_93 = arith.constant 5.000000e-01 : f32
    %257 = vector.broadcast %cst_93 : f32 to vector<8x128xf32>
    %258 = arith.mulf %257, %256 : vector<8x128xf32>
    %259 = math.tanh %258 : vector<8x128xf32>
    %cst_94 = arith.constant 1.000000e+00 : f32
    %260 = vector.broadcast %cst_94 : f32 to vector<8x128xf32>
    %261 = arith.addf %260, %259 : vector<8x128xf32>
    %cst_95 = arith.constant 5.000000e-01 : f32
    %262 = vector.broadcast %cst_95 : f32 to vector<8x128xf32>
    %263 = arith.mulf %262, %261 : vector<8x128xf32>
    %264 = vector.extract_strided_slice %255 {offsets = [0, 128], sizes = [8, 128], strides = [1, 1]} : vector<8x512xf32> to vector<8x128xf32>
    %cst_96 = arith.constant 5.000000e-01 : f32
    %265 = vector.broadcast %cst_96 : f32 to vector<8x128xf32>
    %266 = arith.mulf %265, %264 : vector<8x128xf32>
    %267 = math.tanh %266 : vector<8x128xf32>
    %cst_97 = arith.constant 1.000000e+00 : f32
    %268 = vector.broadcast %cst_97 : f32 to vector<8x128xf32>
    %269 = arith.addf %268, %267 : vector<8x128xf32>
    %cst_98 = arith.constant 5.000000e-01 : f32
    %270 = vector.broadcast %cst_98 : f32 to vector<8x128xf32>
    %271 = arith.mulf %270, %269 : vector<8x128xf32>
    %272 = vector.extract_strided_slice %255 {offsets = [0, 256], sizes = [8, 128], strides = [1, 1]} : vector<8x512xf32> to vector<8x128xf32>
    %273 = math.tanh %272 : vector<8x128xf32>
    %274 = vector.extract_strided_slice %255 {offsets = [0, 384], sizes = [8, 128], strides = [1, 1]} : vector<8x512xf32> to vector<8x128xf32>
    %cst_99 = arith.constant 5.000000e-01 : f32
    %275 = vector.broadcast %cst_99 : f32 to vector<8x128xf32>
    %276 = arith.mulf %275, %274 : vector<8x128xf32>
    %277 = math.tanh %276 : vector<8x128xf32>
    %cst_100 = arith.constant 1.000000e+00 : f32
    %278 = vector.broadcast %cst_100 : f32 to vector<8x128xf32>
    %279 = arith.addf %278, %277 : vector<8x128xf32>
    %cst_101 = arith.constant 5.000000e-01 : f32
    %280 = vector.broadcast %cst_101 : f32 to vector<8x128xf32>
    %281 = arith.mulf %280, %279 : vector<8x128xf32>
    %282 = arith.mulf %271, %205 : vector<8x128xf32>
    %283 = arith.mulf %263, %273 : vector<8x128xf32>
    %284 = arith.addf %282, %283 : vector<8x128xf32>
    %285 = math.tanh %284 : vector<8x128xf32>
    %286 = arith.mulf %281, %285 : vector<8x128xf32>
    %287 = tpu.concatenate %286, %242 in 1 : vector<8x128xf32>, vector<8x128xf32> -> vector<8x256xf32>
    %c0_102 = arith.constant 0 : index
    %c0_103 = arith.constant 0 : index
    %288 = vector.load %arg4[%c0_102, %c0_103] : memref<256x512xf32, #tpu.memory_space<vmem>>, vector<256x512xf32>
    %cst_104 = arith.constant dense<0.000000e+00> : vector<8x512xf32>
    %289 = tpu.matmul %287, %288, %cst_104 {dimension_numbers = #tpu.dot_dimension_numbers<[1], [0], [0], [1], [0, 0, 1, 1], [], []>} : vector<8x256xf32>, vector<256x512xf32>, vector<8x512xf32> -> vector<8x512xf32>
    %290 = arith.addf %289, %8 : vector<8x512xf32>
    %291 = vector.extract_strided_slice %290 {offsets = [0, 0], sizes = [8, 128], strides = [1, 1]} : vector<8x512xf32> to vector<8x128xf32>
    %cst_105 = arith.constant 5.000000e-01 : f32
    %292 = vector.broadcast %cst_105 : f32 to vector<8x128xf32>
    %293 = arith.mulf %292, %291 : vector<8x128xf32>
    %294 = math.tanh %293 : vector<8x128xf32>
    %cst_106 = arith.constant 1.000000e+00 : f32
    %295 = vector.broadcast %cst_106 : f32 to vector<8x128xf32>
    %296 = arith.addf %295, %294 : vector<8x128xf32>
    %cst_107 = arith.constant 5.000000e-01 : f32
    %297 = vector.broadcast %cst_107 : f32 to vector<8x128xf32>
    %298 = arith.mulf %297, %296 : vector<8x128xf32>
    %299 = vector.extract_strided_slice %290 {offsets = [0, 128], sizes = [8, 128], strides = [1, 1]} : vector<8x512xf32> to vector<8x128xf32>
    %cst_108 = arith.constant 5.000000e-01 : f32
    %300 = vector.broadcast %cst_108 : f32 to vector<8x128xf32>
    %301 = arith.mulf %300, %299 : vector<8x128xf32>
    %302 = math.tanh %301 : vector<8x128xf32>
    %cst_109 = arith.constant 1.000000e+00 : f32
    %303 = vector.broadcast %cst_109 : f32 to vector<8x128xf32>
    %304 = arith.addf %303, %302 : vector<8x128xf32>
    %cst_110 = arith.constant 5.000000e-01 : f32
    %305 = vector.broadcast %cst_110 : f32 to vector<8x128xf32>
    %306 = arith.mulf %305, %304 : vector<8x128xf32>
    %307 = vector.extract_strided_slice %290 {offsets = [0, 256], sizes = [8, 128], strides = [1, 1]} : vector<8x512xf32> to vector<8x128xf32>
    %308 = math.tanh %307 : vector<8x128xf32>
    %309 = vector.extract_strided_slice %290 {offsets = [0, 384], sizes = [8, 128], strides = [1, 1]} : vector<8x512xf32> to vector<8x128xf32>
    %cst_111 = arith.constant 5.000000e-01 : f32
    %310 = vector.broadcast %cst_111 : f32 to vector<8x128xf32>
    %311 = arith.mulf %310, %309 : vector<8x128xf32>
    %312 = math.tanh %311 : vector<8x128xf32>
    %cst_112 = arith.constant 1.000000e+00 : f32
    %313 = vector.broadcast %cst_112 : f32 to vector<8x128xf32>
    %314 = arith.addf %313, %312 : vector<8x128xf32>
    %cst_113 = arith.constant 5.000000e-01 : f32
    %315 = vector.broadcast %cst_113 : f32 to vector<8x128xf32>
    %316 = arith.mulf %315, %314 : vector<8x128xf32>
    %317 = arith.mulf %306, %240 : vector<8x128xf32>
    %318 = arith.mulf %298, %308 : vector<8x128xf32>
    %319 = arith.addf %317, %318 : vector<8x128xf32>
    %320 = math.tanh %319 : vector<8x128xf32>
    %321 = arith.mulf %316, %320 : vector<8x128xf32>
    %c8_i32_114 = arith.constant 8 : i32
    %322 = arith.muli %c3_i32, %c8_i32_114 : i32
    %323 = tpu.assume_multiple %322, 8 : i32
    %324 = arith.index_cast %323 : i32 to index
    %c0_115 = arith.constant 0 : index
    %325 = vector.load %arg9[%324, %c0_115] : memref<64x128xf32, #tpu.memory_space<vmem>>, vector<8x128xf32>
    tpu.vector_store %arg9[%324, %c0_115], %321 {strides = array<i32>} : memref<64x128xf32, #tpu.memory_space<vmem>>, vector<8x128xf32>,
    %c4_i32 = arith.constant 4 : i32
    %326 = arith.index_cast %c4_i32 : i32 to index
    %c0_116 = arith.constant 0 : index
    %c0_117 = arith.constant 0 : index
    %327 = vector.load %arg0[%326, %c0_116, %c0_117] : memref<8x8x1xf32, #tpu.memory_space<vmem>>, vector<1x8x1xf32>
    %328 = vector.shape_cast %327 : vector<1x8x1xf32> to vector<8x1xf32>
    %329 = vector.broadcast %328 : vector<8x1xf32> to vector<8x512xf32>
    %330 = arith.mulf %329, %2 : vector<8x512xf32>
    %331 = arith.addf %330, %5 : vector<8x512xf32>
    %c0_118 = arith.constant 0 : index
    %c0_119 = arith.constant 0 : index
    %332 = vector.load %arg3[%c0_118, %c0_119] : memref<128x512xf32, #tpu.memory_space<vmem>>, vector<128x512xf32>
    %cst_120 = arith.constant dense<0.000000e+00> : vector<8x512xf32>
    %333 = tpu.matmul %286, %332, %cst_120 {dimension_numbers = #tpu.dot_dimension_numbers<[1], [0], [0], [1], [0, 0, 1, 1], [], []>} : vector<8x128xf32>, vector<128x512xf32>, vector<8x512xf32> -> vector<8x512xf32>
    %334 = arith.addf %331, %333 : vector<8x512xf32>
    %335 = vector.extract_strided_slice %334 {offsets = [0, 0], sizes = [8, 128], strides = [1, 1]} : vector<8x512xf32> to vector<8x128xf32>
    %cst_121 = arith.constant 5.000000e-01 : f32
    %336 = vector.broadcast %cst_121 : f32 to vector<8x128xf32>
    %337 = arith.mulf %336, %335 : vector<8x128xf32>
    %338 = math.tanh %337 : vector<8x128xf32>
    %cst_122 = arith.constant 1.000000e+00 : f32
    %339 = vector.broadcast %cst_122 : f32 to vector<8x128xf32>
    %340 = arith.addf %339, %338 : vector<8x128xf32>
    %cst_123 = arith.constant 5.000000e-01 : f32
    %341 = vector.broadcast %cst_123 : f32 to vector<8x128xf32>
    %342 = arith.mulf %341, %340 : vector<8x128xf32>
    %343 = vector.extract_strided_slice %334 {offsets = [0, 128], sizes = [8, 128], strides = [1, 1]} : vector<8x512xf32> to vector<8x128xf32>
    %cst_124 = arith.constant 5.000000e-01 : f32
    %344 = vector.broadcast %cst_124 : f32 to vector<8x128xf32>
    %345 = arith.mulf %344, %343 : vector<8x128xf32>
    %346 = math.tanh %345 : vector<8x128xf32>
    %cst_125 = arith.constant 1.000000e+00 : f32
    %347 = vector.broadcast %cst_125 : f32 to vector<8x128xf32>
    %348 = arith.addf %347, %346 : vector<8x128xf32>
    %cst_126 = arith.constant 5.000000e-01 : f32
    %349 = vector.broadcast %cst_126 : f32 to vector<8x128xf32>
    %350 = arith.mulf %349, %348 : vector<8x128xf32>
    %351 = vector.extract_strided_slice %334 {offsets = [0, 256], sizes = [8, 128], strides = [1, 1]} : vector<8x512xf32> to vector<8x128xf32>
    %352 = math.tanh %351 : vector<8x128xf32>
    %353 = vector.extract_strided_slice %334 {offsets = [0, 384], sizes = [8, 128], strides = [1, 1]} : vector<8x512xf32> to vector<8x128xf32>
    %cst_127 = arith.constant 5.000000e-01 : f32
    %354 = vector.broadcast %cst_127 : f32 to vector<8x128xf32>
    %355 = arith.mulf %354, %353 : vector<8x128xf32>
    %356 = math.tanh %355 : vector<8x128xf32>
    %cst_128 = arith.constant 1.000000e+00 : f32
    %357 = vector.broadcast %cst_128 : f32 to vector<8x128xf32>
    %358 = arith.addf %357, %356 : vector<8x128xf32>
    %cst_129 = arith.constant 5.000000e-01 : f32
    %359 = vector.broadcast %cst_129 : f32 to vector<8x128xf32>
    %360 = arith.mulf %359, %358 : vector<8x128xf32>
    %361 = arith.mulf %350, %284 : vector<8x128xf32>
    %362 = arith.mulf %342, %352 : vector<8x128xf32>
    %363 = arith.addf %361, %362 : vector<8x128xf32>
    %364 = math.tanh %363 : vector<8x128xf32>
    %365 = arith.mulf %360, %364 : vector<8x128xf32>
    %366 = tpu.concatenate %365, %321 in 1 : vector<8x128xf32>, vector<8x128xf32> -> vector<8x256xf32>
    %c0_130 = arith.constant 0 : index
    %c0_131 = arith.constant 0 : index
    %367 = vector.load %arg4[%c0_130, %c0_131] : memref<256x512xf32, #tpu.memory_space<vmem>>, vector<256x512xf32>
    %cst_132 = arith.constant dense<0.000000e+00> : vector<8x512xf32>
    %368 = tpu.matmul %366, %367, %cst_132 {dimension_numbers = #tpu.dot_dimension_numbers<[1], [0], [0], [1], [0, 0, 1, 1], [], []>} : vector<8x256xf32>, vector<256x512xf32>, vector<8x512xf32> -> vector<8x512xf32>
    %369 = arith.addf %368, %8 : vector<8x512xf32>
    %370 = vector.extract_strided_slice %369 {offsets = [0, 0], sizes = [8, 128], strides = [1, 1]} : vector<8x512xf32> to vector<8x128xf32>
    %cst_133 = arith.constant 5.000000e-01 : f32
    %371 = vector.broadcast %cst_133 : f32 to vector<8x128xf32>
    %372 = arith.mulf %371, %370 : vector<8x128xf32>
    %373 = math.tanh %372 : vector<8x128xf32>
    %cst_134 = arith.constant 1.000000e+00 : f32
    %374 = vector.broadcast %cst_134 : f32 to vector<8x128xf32>
    %375 = arith.addf %374, %373 : vector<8x128xf32>
    %cst_135 = arith.constant 5.000000e-01 : f32
    %376 = vector.broadcast %cst_135 : f32 to vector<8x128xf32>
    %377 = arith.mulf %376, %375 : vector<8x128xf32>
    %378 = vector.extract_strided_slice %369 {offsets = [0, 128], sizes = [8, 128], strides = [1, 1]} : vector<8x512xf32> to vector<8x128xf32>
    %cst_136 = arith.constant 5.000000e-01 : f32
    %379 = vector.broadcast %cst_136 : f32 to vector<8x128xf32>
    %380 = arith.mulf %379, %378 : vector<8x128xf32>
    %381 = math.tanh %380 : vector<8x128xf32>
    %cst_137 = arith.constant 1.000000e+00 : f32
    %382 = vector.broadcast %cst_137 : f32 to vector<8x128xf32>
    %383 = arith.addf %382, %381 : vector<8x128xf32>
    %cst_138 = arith.constant 5.000000e-01 : f32
    %384 = vector.broadcast %cst_138 : f32 to vector<8x128xf32>
    %385 = arith.mulf %384, %383 : vector<8x128xf32>
    %386 = vector.extract_strided_slice %369 {offsets = [0, 256], sizes = [8, 128], strides = [1, 1]} : vector<8x512xf32> to vector<8x128xf32>
    %387 = math.tanh %386 : vector<8x128xf32>
    %388 = vector.extract_strided_slice %369 {offsets = [0, 384], sizes = [8, 128], strides = [1, 1]} : vector<8x512xf32> to vector<8x128xf32>
    %cst_139 = arith.constant 5.000000e-01 : f32
    %389 = vector.broadcast %cst_139 : f32 to vector<8x128xf32>
    %390 = arith.mulf %389, %388 : vector<8x128xf32>
    %391 = math.tanh %390 : vector<8x128xf32>
    %cst_140 = arith.constant 1.000000e+00 : f32
    %392 = vector.broadcast %cst_140 : f32 to vector<8x128xf32>
    %393 = arith.addf %392, %391 : vector<8x128xf32>
    %cst_141 = arith.constant 5.000000e-01 : f32
    %394 = vector.broadcast %cst_141 : f32 to vector<8x128xf32>
    %395 = arith.mulf %394, %393 : vector<8x128xf32>
    %396 = arith.mulf %385, %319 : vector<8x128xf32>
    %397 = arith.mulf %377, %387 : vector<8x128xf32>
    %398 = arith.addf %396, %397 : vector<8x128xf32>
    %399 = math.tanh %398 : vector<8x128xf32>
    %400 = arith.mulf %395, %399 : vector<8x128xf32>
    %c8_i32_142 = arith.constant 8 : i32
    %401 = arith.muli %c4_i32, %c8_i32_142 : i32
    %402 = tpu.assume_multiple %401, 8 : i32
    %403 = arith.index_cast %402 : i32 to index
    %c0_143 = arith.constant 0 : index
    %404 = vector.load %arg9[%403, %c0_143] : memref<64x128xf32, #tpu.memory_space<vmem>>, vector<8x128xf32>
    tpu.vector_store %arg9[%403, %c0_143], %400 {strides = array<i32>} : memref<64x128xf32, #tpu.memory_space<vmem>>, vector<8x128xf32>,
    %c5_i32 = arith.constant 5 : i32
    %405 = arith.index_cast %c5_i32 : i32 to index
    %c0_144 = arith.constant 0 : index
    %c0_145 = arith.constant 0 : index
    %406 = vector.load %arg0[%405, %c0_144, %c0_145] : memref<8x8x1xf32, #tpu.memory_space<vmem>>, vector<1x8x1xf32>
    %407 = vector.shape_cast %406 : vector<1x8x1xf32> to vector<8x1xf32>
    %408 = vector.broadcast %407 : vector<8x1xf32> to vector<8x512xf32>
    %409 = arith.mulf %408, %2 : vector<8x512xf32>
    %410 = arith.addf %409, %5 : vector<8x512xf32>
    %c0_146 = arith.constant 0 : index
    %c0_147 = arith.constant 0 : index
    %411 = vector.load %arg3[%c0_146, %c0_147] : memref<128x512xf32, #tpu.memory_space<vmem>>, vector<128x512xf32>
    %cst_148 = arith.constant dense<0.000000e+00> : vector<8x512xf32>
    %412 = tpu.matmul %365, %411, %cst_148 {dimension_numbers = #tpu.dot_dimension_numbers<[1], [0], [0], [1], [0, 0, 1, 1], [], []>} : vector<8x128xf32>, vector<128x512xf32>, vector<8x512xf32> -> vector<8x512xf32>
    %413 = arith.addf %410, %412 : vector<8x512xf32>
    %414 = vector.extract_strided_slice %413 {offsets = [0, 0], sizes = [8, 128], strides = [1, 1]} : vector<8x512xf32> to vector<8x128xf32>
    %cst_149 = arith.constant 5.000000e-01 : f32
    %415 = vector.broadcast %cst_149 : f32 to vector<8x128xf32>
    %416 = arith.mulf %415, %414 : vector<8x128xf32>
    %417 = math.tanh %416 : vector<8x128xf32>
    %cst_150 = arith.constant 1.000000e+00 : f32
    %418 = vector.broadcast %cst_150 : f32 to vector<8x128xf32>
    %419 = arith.addf %418, %417 : vector<8x128xf32>
    %cst_151 = arith.constant 5.000000e-01 : f32
    %420 = vector.broadcast %cst_151 : f32 to vector<8x128xf32>
    %421 = arith.mulf %420, %419 : vector<8x128xf32>
    %422 = vector.extract_strided_slice %413 {offsets = [0, 128], sizes = [8, 128], strides = [1, 1]} : vector<8x512xf32> to vector<8x128xf32>
    %cst_152 = arith.constant 5.000000e-01 : f32
    %423 = vector.broadcast %cst_152 : f32 to vector<8x128xf32>
    %424 = arith.mulf %423, %422 : vector<8x128xf32>
    %425 = math.tanh %424 : vector<8x128xf32>
    %cst_153 = arith.constant 1.000000e+00 : f32
    %426 = vector.broadcast %cst_153 : f32 to vector<8x128xf32>
    %427 = arith.addf %426, %425 : vector<8x128xf32>
    %cst_154 = arith.constant 5.000000e-01 : f32
    %428 = vector.broadcast %cst_154 : f32 to vector<8x128xf32>
    %429 = arith.mulf %428, %427 : vector<8x128xf32>
    %430 = vector.extract_strided_slice %413 {offsets = [0, 256], sizes = [8, 128], strides = [1, 1]} : vector<8x512xf32> to vector<8x128xf32>
    %431 = math.tanh %430 : vector<8x128xf32>
    %432 = vector.extract_strided_slice %413 {offsets = [0, 384], sizes = [8, 128], strides = [1, 1]} : vector<8x512xf32> to vector<8x128xf32>
    %cst_155 = arith.constant 5.000000e-01 : f32
    %433 = vector.broadcast %cst_155 : f32 to vector<8x128xf32>
    %434 = arith.mulf %433, %432 : vector<8x128xf32>
    %435 = math.tanh %434 : vector<8x128xf32>
    %cst_156 = arith.constant 1.000000e+00 : f32
    %436 = vector.broadcast %cst_156 : f32 to vector<8x128xf32>
    %437 = arith.addf %436, %435 : vector<8x128xf32>
    %cst_157 = arith.constant 5.000000e-01 : f32
    %438 = vector.broadcast %cst_157 : f32 to vector<8x128xf32>
    %439 = arith.mulf %438, %437 : vector<8x128xf32>
    %440 = arith.mulf %429, %363 : vector<8x128xf32>
    %441 = arith.mulf %421, %431 : vector<8x128xf32>
    %442 = arith.addf %440, %441 : vector<8x128xf32>
    %443 = math.tanh %442 : vector<8x128xf32>
    %444 = arith.mulf %439, %443 : vector<8x128xf32>
    %445 = tpu.concatenate %444, %400 in 1 : vector<8x128xf32>, vector<8x128xf32> -> vector<8x256xf32>
    %c0_158 = arith.constant 0 : index
    %c0_159 = arith.constant 0 : index
    %446 = vector.load %arg4[%c0_158, %c0_159] : memref<256x512xf32, #tpu.memory_space<vmem>>, vector<256x512xf32>
    %cst_160 = arith.constant dense<0.000000e+00> : vector<8x512xf32>
    %447 = tpu.matmul %445, %446, %cst_160 {dimension_numbers = #tpu.dot_dimension_numbers<[1], [0], [0], [1], [0, 0, 1, 1], [], []>} : vector<8x256xf32>, vector<256x512xf32>, vector<8x512xf32> -> vector<8x512xf32>
    %448 = arith.addf %447, %8 : vector<8x512xf32>
    %449 = vector.extract_strided_slice %448 {offsets = [0, 0], sizes = [8, 128], strides = [1, 1]} : vector<8x512xf32> to vector<8x128xf32>
    %cst_161 = arith.constant 5.000000e-01 : f32
    %450 = vector.broadcast %cst_161 : f32 to vector<8x128xf32>
    %451 = arith.mulf %450, %449 : vector<8x128xf32>
    %452 = math.tanh %451 : vector<8x128xf32>
    %cst_162 = arith.constant 1.000000e+00 : f32
    %453 = vector.broadcast %cst_162 : f32 to vector<8x128xf32>
    %454 = arith.addf %453, %452 : vector<8x128xf32>
    %cst_163 = arith.constant 5.000000e-01 : f32
    %455 = vector.broadcast %cst_163 : f32 to vector<8x128xf32>
    %456 = arith.mulf %455, %454 : vector<8x128xf32>
    %457 = vector.extract_strided_slice %448 {offsets = [0, 128], sizes = [8, 128], strides = [1, 1]} : vector<8x512xf32> to vector<8x128xf32>
    %cst_164 = arith.constant 5.000000e-01 : f32
    %458 = vector.broadcast %cst_164 : f32 to vector<8x128xf32>
    %459 = arith.mulf %458, %457 : vector<8x128xf32>
    %460 = math.tanh %459 : vector<8x128xf32>
    %cst_165 = arith.constant 1.000000e+00 : f32
    %461 = vector.broadcast %cst_165 : f32 to vector<8x128xf32>
    %462 = arith.addf %461, %460 : vector<8x128xf32>
    %cst_166 = arith.constant 5.000000e-01 : f32
    %463 = vector.broadcast %cst_166 : f32 to vector<8x128xf32>
    %464 = arith.mulf %463, %462 : vector<8x128xf32>
    %465 = vector.extract_strided_slice %448 {offsets = [0, 256], sizes = [8, 128], strides = [1, 1]} : vector<8x512xf32> to vector<8x128xf32>
    %466 = math.tanh %465 : vector<8x128xf32>
    %467 = vector.extract_strided_slice %448 {offsets = [0, 384], sizes = [8, 128], strides = [1, 1]} : vector<8x512xf32> to vector<8x128xf32>
    %cst_167 = arith.constant 5.000000e-01 : f32
    %468 = vector.broadcast %cst_167 : f32 to vector<8x128xf32>
    %469 = arith.mulf %468, %467 : vector<8x128xf32>
    %470 = math.tanh %469 : vector<8x128xf32>
    %cst_168 = arith.constant 1.000000e+00 : f32
    %471 = vector.broadcast %cst_168 : f32 to vector<8x128xf32>
    %472 = arith.addf %471, %470 : vector<8x128xf32>
    %cst_169 = arith.constant 5.000000e-01 : f32
    %473 = vector.broadcast %cst_169 : f32 to vector<8x128xf32>
    %474 = arith.mulf %473, %472 : vector<8x128xf32>
    %475 = arith.mulf %464, %398 : vector<8x128xf32>
    %476 = arith.mulf %456, %466 : vector<8x128xf32>
    %477 = arith.addf %475, %476 : vector<8x128xf32>
    %478 = math.tanh %477 : vector<8x128xf32>
    %479 = arith.mulf %474, %478 : vector<8x128xf32>
    %c8_i32_170 = arith.constant 8 : i32
    %480 = arith.muli %c5_i32, %c8_i32_170 : i32
    %481 = tpu.assume_multiple %480, 8 : i32
    %482 = arith.index_cast %481 : i32 to index
    %c0_171 = arith.constant 0 : index
    %483 = vector.load %arg9[%482, %c0_171] : memref<64x128xf32, #tpu.memory_space<vmem>>, vector<8x128xf32>
    tpu.vector_store %arg9[%482, %c0_171], %479 {strides = array<i32>} : memref<64x128xf32, #tpu.memory_space<vmem>>, vector<8x128xf32>,
    %c6_i32 = arith.constant 6 : i32
    %484 = arith.index_cast %c6_i32 : i32 to index
    %c0_172 = arith.constant 0 : index
    %c0_173 = arith.constant 0 : index
    %485 = vector.load %arg0[%484, %c0_172, %c0_173] : memref<8x8x1xf32, #tpu.memory_space<vmem>>, vector<1x8x1xf32>
    %486 = vector.shape_cast %485 : vector<1x8x1xf32> to vector<8x1xf32>
    %487 = vector.broadcast %486 : vector<8x1xf32> to vector<8x512xf32>
    %488 = arith.mulf %487, %2 : vector<8x512xf32>
    %489 = arith.addf %488, %5 : vector<8x512xf32>
    %c0_174 = arith.constant 0 : index
    %c0_175 = arith.constant 0 : index
    %490 = vector.load %arg3[%c0_174, %c0_175] : memref<128x512xf32, #tpu.memory_space<vmem>>, vector<128x512xf32>
    %cst_176 = arith.constant dense<0.000000e+00> : vector<8x512xf32>
    %491 = tpu.matmul %444, %490, %cst_176 {dimension_numbers = #tpu.dot_dimension_numbers<[1], [0], [0], [1], [0, 0, 1, 1], [], []>} : vector<8x128xf32>, vector<128x512xf32>, vector<8x512xf32> -> vector<8x512xf32>
    %492 = arith.addf %489, %491 : vector<8x512xf32>
    %493 = vector.extract_strided_slice %492 {offsets = [0, 0], sizes = [8, 128], strides = [1, 1]} : vector<8x512xf32> to vector<8x128xf32>
    %cst_177 = arith.constant 5.000000e-01 : f32
    %494 = vector.broadcast %cst_177 : f32 to vector<8x128xf32>
    %495 = arith.mulf %494, %493 : vector<8x128xf32>
    %496 = math.tanh %495 : vector<8x128xf32>
    %cst_178 = arith.constant 1.000000e+00 : f32
    %497 = vector.broadcast %cst_178 : f32 to vector<8x128xf32>
    %498 = arith.addf %497, %496 : vector<8x128xf32>
    %cst_179 = arith.constant 5.000000e-01 : f32
    %499 = vector.broadcast %cst_179 : f32 to vector<8x128xf32>
    %500 = arith.mulf %499, %498 : vector<8x128xf32>
    %501 = vector.extract_strided_slice %492 {offsets = [0, 128], sizes = [8, 128], strides = [1, 1]} : vector<8x512xf32> to vector<8x128xf32>
    %cst_180 = arith.constant 5.000000e-01 : f32
    %502 = vector.broadcast %cst_180 : f32 to vector<8x128xf32>
    %503 = arith.mulf %502, %501 : vector<8x128xf32>
    %504 = math.tanh %503 : vector<8x128xf32>
    %cst_181 = arith.constant 1.000000e+00 : f32
    %505 = vector.broadcast %cst_181 : f32 to vector<8x128xf32>
    %506 = arith.addf %505, %504 : vector<8x128xf32>
    %cst_182 = arith.constant 5.000000e-01 : f32
    %507 = vector.broadcast %cst_182 : f32 to vector<8x128xf32>
    %508 = arith.mulf %507, %506 : vector<8x128xf32>
    %509 = vector.extract_strided_slice %492 {offsets = [0, 256], sizes = [8, 128], strides = [1, 1]} : vector<8x512xf32> to vector<8x128xf32>
    %510 = math.tanh %509 : vector<8x128xf32>
    %511 = vector.extract_strided_slice %492 {offsets = [0, 384], sizes = [8, 128], strides = [1, 1]} : vector<8x512xf32> to vector<8x128xf32>
    %cst_183 = arith.constant 5.000000e-01 : f32
    %512 = vector.broadcast %cst_183 : f32 to vector<8x128xf32>
    %513 = arith.mulf %512, %511 : vector<8x128xf32>
    %514 = math.tanh %513 : vector<8x128xf32>
    %cst_184 = arith.constant 1.000000e+00 : f32
    %515 = vector.broadcast %cst_184 : f32 to vector<8x128xf32>
    %516 = arith.addf %515, %514 : vector<8x128xf32>
    %cst_185 = arith.constant 5.000000e-01 : f32
    %517 = vector.broadcast %cst_185 : f32 to vector<8x128xf32>
    %518 = arith.mulf %517, %516 : vector<8x128xf32>
    %519 = arith.mulf %508, %442 : vector<8x128xf32>
    %520 = arith.mulf %500, %510 : vector<8x128xf32>
    %521 = arith.addf %519, %520 : vector<8x128xf32>
    %522 = math.tanh %521 : vector<8x128xf32>
    %523 = arith.mulf %518, %522 : vector<8x128xf32>
    %524 = tpu.concatenate %523, %479 in 1 : vector<8x128xf32>, vector<8x128xf32> -> vector<8x256xf32>
    %c0_186 = arith.constant 0 : index
    %c0_187 = arith.constant 0 : index
    %525 = vector.load %arg4[%c0_186, %c0_187] : memref<256x512xf32, #tpu.memory_space<vmem>>, vector<256x512xf32>
    %cst_188 = arith.constant dense<0.000000e+00> : vector<8x512xf32>
    %526 = tpu.matmul %524, %525, %cst_188 {dimension_numbers = #tpu.dot_dimension_numbers<[1], [0], [0], [1], [0, 0, 1, 1], [], []>} : vector<8x256xf32>, vector<256x512xf32>, vector<8x512xf32> -> vector<8x512xf32>
    %527 = arith.addf %526, %8 : vector<8x512xf32>
    %528 = vector.extract_strided_slice %527 {offsets = [0, 0], sizes = [8, 128], strides = [1, 1]} : vector<8x512xf32> to vector<8x128xf32>
    %cst_189 = arith.constant 5.000000e-01 : f32
    %529 = vector.broadcast %cst_189 : f32 to vector<8x128xf32>
    %530 = arith.mulf %529, %528 : vector<8x128xf32>
    %531 = math.tanh %530 : vector<8x128xf32>
    %cst_190 = arith.constant 1.000000e+00 : f32
    %532 = vector.broadcast %cst_190 : f32 to vector<8x128xf32>
    %533 = arith.addf %532, %531 : vector<8x128xf32>
    %cst_191 = arith.constant 5.000000e-01 : f32
    %534 = vector.broadcast %cst_191 : f32 to vector<8x128xf32>
    %535 = arith.mulf %534, %533 : vector<8x128xf32>
    %536 = vector.extract_strided_slice %527 {offsets = [0, 128], sizes = [8, 128], strides = [1, 1]} : vector<8x512xf32> to vector<8x128xf32>
    %cst_192 = arith.constant 5.000000e-01 : f32
    %537 = vector.broadcast %cst_192 : f32 to vector<8x128xf32>
    %538 = arith.mulf %537, %536 : vector<8x128xf32>
    %539 = math.tanh %538 : vector<8x128xf32>
    %cst_193 = arith.constant 1.000000e+00 : f32
    %540 = vector.broadcast %cst_193 : f32 to vector<8x128xf32>
    %541 = arith.addf %540, %539 : vector<8x128xf32>
    %cst_194 = arith.constant 5.000000e-01 : f32
    %542 = vector.broadcast %cst_194 : f32 to vector<8x128xf32>
    %543 = arith.mulf %542, %541 : vector<8x128xf32>
    %544 = vector.extract_strided_slice %527 {offsets = [0, 256], sizes = [8, 128], strides = [1, 1]} : vector<8x512xf32> to vector<8x128xf32>
    %545 = math.tanh %544 : vector<8x128xf32>
    %546 = vector.extract_strided_slice %527 {offsets = [0, 384], sizes = [8, 128], strides = [1, 1]} : vector<8x512xf32> to vector<8x128xf32>
    %cst_195 = arith.constant 5.000000e-01 : f32
    %547 = vector.broadcast %cst_195 : f32 to vector<8x128xf32>
    %548 = arith.mulf %547, %546 : vector<8x128xf32>
    %549 = math.tanh %548 : vector<8x128xf32>
    %cst_196 = arith.constant 1.000000e+00 : f32
    %550 = vector.broadcast %cst_196 : f32 to vector<8x128xf32>
    %551 = arith.addf %550, %549 : vector<8x128xf32>
    %cst_197 = arith.constant 5.000000e-01 : f32
    %552 = vector.broadcast %cst_197 : f32 to vector<8x128xf32>
    %553 = arith.mulf %552, %551 : vector<8x128xf32>
    %554 = arith.mulf %543, %477 : vector<8x128xf32>
    %555 = arith.mulf %535, %545 : vector<8x128xf32>
    %556 = arith.addf %554, %555 : vector<8x128xf32>
    %557 = math.tanh %556 : vector<8x128xf32>
    %558 = arith.mulf %553, %557 : vector<8x128xf32>
    %c8_i32_198 = arith.constant 8 : i32
    %559 = arith.muli %c6_i32, %c8_i32_198 : i32
    %560 = tpu.assume_multiple %559, 8 : i32
    %561 = arith.index_cast %560 : i32 to index
    %c0_199 = arith.constant 0 : index
    %562 = vector.load %arg9[%561, %c0_199] : memref<64x128xf32, #tpu.memory_space<vmem>>, vector<8x128xf32>
    tpu.vector_store %arg9[%561, %c0_199], %558 {strides = array<i32>} : memref<64x128xf32, #tpu.memory_space<vmem>>, vector<8x128xf32>,
    %c7_i32 = arith.constant 7 : i32
    %563 = arith.index_cast %c7_i32 : i32 to index
    %c0_200 = arith.constant 0 : index
    %c0_201 = arith.constant 0 : index
    %564 = vector.load %arg0[%563, %c0_200, %c0_201] : memref<8x8x1xf32, #tpu.memory_space<vmem>>, vector<1x8x1xf32>
    %565 = vector.shape_cast %564 : vector<1x8x1xf32> to vector<8x1xf32>
    %566 = vector.broadcast %565 : vector<8x1xf32> to vector<8x512xf32>
    %567 = arith.mulf %566, %2 : vector<8x512xf32>
    %568 = arith.addf %567, %5 : vector<8x512xf32>
    %c0_202 = arith.constant 0 : index
    %c0_203 = arith.constant 0 : index
    %569 = vector.load %arg3[%c0_202, %c0_203] : memref<128x512xf32, #tpu.memory_space<vmem>>, vector<128x512xf32>
    %cst_204 = arith.constant dense<0.000000e+00> : vector<8x512xf32>
    %570 = tpu.matmul %523, %569, %cst_204 {dimension_numbers = #tpu.dot_dimension_numbers<[1], [0], [0], [1], [0, 0, 1, 1], [], []>} : vector<8x128xf32>, vector<128x512xf32>, vector<8x512xf32> -> vector<8x512xf32>
    %571 = arith.addf %568, %570 : vector<8x512xf32>
    %572 = vector.extract_strided_slice %571 {offsets = [0, 0], sizes = [8, 128], strides = [1, 1]} : vector<8x512xf32> to vector<8x128xf32>
    %cst_205 = arith.constant 5.000000e-01 : f32
    %573 = vector.broadcast %cst_205 : f32 to vector<8x128xf32>
    %574 = arith.mulf %573, %572 : vector<8x128xf32>
    %575 = math.tanh %574 : vector<8x128xf32>
    %cst_206 = arith.constant 1.000000e+00 : f32
    %576 = vector.broadcast %cst_206 : f32 to vector<8x128xf32>
    %577 = arith.addf %576, %575 : vector<8x128xf32>
    %cst_207 = arith.constant 5.000000e-01 : f32
    %578 = vector.broadcast %cst_207 : f32 to vector<8x128xf32>
    %579 = arith.mulf %578, %577 : vector<8x128xf32>
    %580 = vector.extract_strided_slice %571 {offsets = [0, 128], sizes = [8, 128], strides = [1, 1]} : vector<8x512xf32> to vector<8x128xf32>
    %cst_208 = arith.constant 5.000000e-01 : f32
    %581 = vector.broadcast %cst_208 : f32 to vector<8x128xf32>
    %582 = arith.mulf %581, %580 : vector<8x128xf32>
    %583 = math.tanh %582 : vector<8x128xf32>
    %cst_209 = arith.constant 1.000000e+00 : f32
    %584 = vector.broadcast %cst_209 : f32 to vector<8x128xf32>
    %585 = arith.addf %584, %583 : vector<8x128xf32>
    %cst_210 = arith.constant 5.000000e-01 : f32
    %586 = vector.broadcast %cst_210 : f32 to vector<8x128xf32>
    %587 = arith.mulf %586, %585 : vector<8x128xf32>
    %588 = vector.extract_strided_slice %571 {offsets = [0, 256], sizes = [8, 128], strides = [1, 1]} : vector<8x512xf32> to vector<8x128xf32>
    %589 = math.tanh %588 : vector<8x128xf32>
    %590 = vector.extract_strided_slice %571 {offsets = [0, 384], sizes = [8, 128], strides = [1, 1]} : vector<8x512xf32> to vector<8x128xf32>
    %cst_211 = arith.constant 5.000000e-01 : f32
    %591 = vector.broadcast %cst_211 : f32 to vector<8x128xf32>
    %592 = arith.mulf %591, %590 : vector<8x128xf32>
    %593 = math.tanh %592 : vector<8x128xf32>
    %cst_212 = arith.constant 1.000000e+00 : f32
    %594 = vector.broadcast %cst_212 : f32 to vector<8x128xf32>
    %595 = arith.addf %594, %593 : vector<8x128xf32>
    %cst_213 = arith.constant 5.000000e-01 : f32
    %596 = vector.broadcast %cst_213 : f32 to vector<8x128xf32>
    %597 = arith.mulf %596, %595 : vector<8x128xf32>
    %598 = arith.mulf %587, %521 : vector<8x128xf32>
    %599 = arith.mulf %579, %589 : vector<8x128xf32>
    %600 = arith.addf %598, %599 : vector<8x128xf32>
    %601 = math.tanh %600 : vector<8x128xf32>
    %602 = arith.mulf %597, %601 : vector<8x128xf32>
    %603 = tpu.concatenate %602, %558 in 1 : vector<8x128xf32>, vector<8x128xf32> -> vector<8x256xf32>
    %c0_214 = arith.constant 0 : index
    %c0_215 = arith.constant 0 : index
    %604 = vector.load %arg4[%c0_214, %c0_215] : memref<256x512xf32, #tpu.memory_space<vmem>>, vector<256x512xf32>
    %cst_216 = arith.constant dense<0.000000e+00> : vector<8x512xf32>
    %605 = tpu.matmul %603, %604, %cst_216 {dimension_numbers = #tpu.dot_dimension_numbers<[1], [0], [0], [1], [0, 0, 1, 1], [], []>} : vector<8x256xf32>, vector<256x512xf32>, vector<8x512xf32> -> vector<8x512xf32>
    %606 = arith.addf %605, %8 : vector<8x512xf32>
    %607 = vector.extract_strided_slice %606 {offsets = [0, 0], sizes = [8, 128], strides = [1, 1]} : vector<8x512xf32> to vector<8x128xf32>
    %cst_217 = arith.constant 5.000000e-01 : f32
    %608 = vector.broadcast %cst_217 : f32 to vector<8x128xf32>
    %609 = arith.mulf %608, %607 : vector<8x128xf32>
    %610 = math.tanh %609 : vector<8x128xf32>
    %cst_218 = arith.constant 1.000000e+00 : f32
    %611 = vector.broadcast %cst_218 : f32 to vector<8x128xf32>
    %612 = arith.addf %611, %610 : vector<8x128xf32>
    %cst_219 = arith.constant 5.000000e-01 : f32
    %613 = vector.broadcast %cst_219 : f32 to vector<8x128xf32>
    %614 = arith.mulf %613, %612 : vector<8x128xf32>
    %615 = vector.extract_strided_slice %606 {offsets = [0, 128], sizes = [8, 128], strides = [1, 1]} : vector<8x512xf32> to vector<8x128xf32>
    %cst_220 = arith.constant 5.000000e-01 : f32
    %616 = vector.broadcast %cst_220 : f32 to vector<8x128xf32>
    %617 = arith.mulf %616, %615 : vector<8x128xf32>
    %618 = math.tanh %617 : vector<8x128xf32>
    %cst_221 = arith.constant 1.000000e+00 : f32
    %619 = vector.broadcast %cst_221 : f32 to vector<8x128xf32>
    %620 = arith.addf %619, %618 : vector<8x128xf32>
    %cst_222 = arith.constant 5.000000e-01 : f32
    %621 = vector.broadcast %cst_222 : f32 to vector<8x128xf32>
    %622 = arith.mulf %621, %620 : vector<8x128xf32>
    %623 = vector.extract_strided_slice %606 {offsets = [0, 256], sizes = [8, 128], strides = [1, 1]} : vector<8x512xf32> to vector<8x128xf32>
    %624 = math.tanh %623 : vector<8x128xf32>
    %625 = vector.extract_strided_slice %606 {offsets = [0, 384], sizes = [8, 128], strides = [1, 1]} : vector<8x512xf32> to vector<8x128xf32>
    %cst_223 = arith.constant 5.000000e-01 : f32
    %626 = vector.broadcast %cst_223 : f32 to vector<8x128xf32>
    %627 = arith.mulf %626, %625 : vector<8x128xf32>
    %628 = math.tanh %627 : vector<8x128xf32>
    %cst_224 = arith.constant 1.000000e+00 : f32
    %629 = vector.broadcast %cst_224 : f32 to vector<8x128xf32>
    %630 = arith.addf %629, %628 : vector<8x128xf32>
    %cst_225 = arith.constant 5.000000e-01 : f32
    %631 = vector.broadcast %cst_225 : f32 to vector<8x128xf32>
    %632 = arith.mulf %631, %630 : vector<8x128xf32>
    %633 = arith.mulf %622, %556 : vector<8x128xf32>
    %634 = arith.mulf %614, %624 : vector<8x128xf32>
    %635 = arith.addf %633, %634 : vector<8x128xf32>
    %636 = math.tanh %635 : vector<8x128xf32>
    %637 = arith.mulf %632, %636 : vector<8x128xf32>
    %c8_i32_226 = arith.constant 8 : i32
    %638 = arith.muli %c7_i32, %c8_i32_226 : i32
    %639 = tpu.assume_multiple %638, 8 : i32
    %640 = arith.index_cast %639 : i32 to index
    %c0_227 = arith.constant 0 : index
    %641 = vector.load %arg9[%640, %c0_227] : memref<64x128xf32, #tpu.memory_space<vmem>>, vector<8x128xf32>
    tpu.vector_store %arg9[%640, %c0_227], %637 {strides = array<i32>} : memref<64x128xf32, #tpu.memory_space<vmem>>, vector<8x128xf32>,
    %c8_i32_228 = arith.constant 8 : i32
    %c0_229 = arith.constant 0 : index
    %c0_230 = arith.constant 0 : index
    %642 = vector.load %arg9[%c0_229, %c0_230] : memref<64x128xf32, #tpu.memory_space<vmem>>, vector<64x128xf32>
    %c0_231 = arith.constant 0 : index
    %c0_232 = arith.constant 0 : index
    %643 = vector.load %arg6[%c0_231, %c0_232] : memref<128x128xf32, #tpu.memory_space<vmem>>, vector<128x128xf32>
    %cst_233 = arith.constant dense<0.000000e+00> : vector<64x128xf32>
    %644 = tpu.matmul %642, %643, %cst_233 {dimension_numbers = #tpu.dot_dimension_numbers<[1], [0], [0], [1], [0, 0, 1, 1], [], []>} : vector<64x128xf32>, vector<128x128xf32>, vector<64x128xf32> -> vector<64x128xf32>
    %c0_234 = arith.constant 0 : index
    %c0_235 = arith.constant 0 : index
    %645 = vector.load %arg7[%c0_234, %c0_235] : memref<1x128xf32, #tpu.memory_space<vmem>>, vector<1x128xf32>
    %646 = vector.broadcast %645 : vector<1x128xf32> to vector<64x128xf32>
    %647 = arith.addf %644, %646 : vector<64x128xf32>
    %c0_236 = arith.constant 0 : index
    %c0_237 = arith.constant 0 : index
    %648 = vector.load %arg8[%c0_236, %c0_237] : memref<64x128xf32, #tpu.memory_space<vmem>>, vector<64x128xf32>
    tpu.vector_store %arg8[%c0_236, %c0_237], %647 {strides = array<i32>} : memref<64x128xf32, #tpu.memory_space<vmem>>, vector<64x128xf32>,
    return
  }
}

</mosaic_0001>

<llo_original>
// kernel: lstm_text_model_forward.1
$region0: #{lstm_text_model_forward.1}
  #allocation0 [shape = 'u32[]', space=smem, size = 0x4, offset = 0x4, fixed_abs, tag = 'smem constant byte address 0x4 - core index']
  #allocation1 [shape = 'u32[144,128]{1,0:T(1,128)}', space=vmem, size = 0x12000, scoped, tag = 'internal scratch']
  #allocation2 [shape = 'f32[64,128]{1,0:T(8,128)}', space=vmem, size = 0x8000, scoped, tag = 'scratch operand']
  %s0 = inlined_call_operand.vmem [shape: f32[8,8,1], index: 0, kind: input, shape index: {}]
  %s1 = inlined_call_operand.vmem [shape: f32[1,512], index: 1, kind: input, shape index: {}]
  %s2 = inlined_call_operand.vmem [shape: f32[1,512], index: 2, kind: input, shape index: {}]
  %s3 = inlined_call_operand.vmem [shape: f32[128,512], index: 3, kind: input, shape index: {}]
  %s4 = inlined_call_operand.vmem [shape: f32[256,512], index: 4, kind: input, shape index: {}]
  %s5 = inlined_call_operand.vmem [shape: f32[1,512], index: 5, kind: input, shape index: {}]
  %s6 = inlined_call_operand.vmem [shape: f32[128,128], index: 6, kind: input, shape index: {}]
  %s7 = inlined_call_operand.vmem [shape: f32[1,128], index: 7, kind: input, shape index: {}]
  %s8 = inlined_call_operand.vmem [shape: f32[64,128], index: 8, kind: output, shape index: {}]
  %s9 = sld [smem:[#allocation0]]
  $region42: #{lstm_text_model_forward.1} parent=0
    _
  %s11 = ssub.s32 1, %s9
  %s12 = scalar_select 0, %s11, %s9
  // Predicated region
  $region2: #{lstm_text_model_forward.1} parent=0 // pred_check
    _
  $region3: #{lstm_text_model_forward.1} parent=0 // pred_check_branch
    %14 = sbr.rel (0) target = $region5
  $region4: #{lstm_text_model_forward.1} parent=0 // pred_region
    _
  $region5: #{lstm_text_model_forward.1} parent=0 // pred_fallthru
    _
  // Predicated region
  $region6: #{lstm_text_model_forward.1} parent=0 // pred_check
    _
  $region7: #{lstm_text_model_forward.1} parent=0 // pred_check_branch
    %16 = sbr.rel (0) target = $region9
  $region8: #{lstm_text_model_forward.1} parent=0 // pred_region
    _
  $region9: #{lstm_text_model_forward.1} parent=0 // pred_fallthru
    _
  // Predicated region
  $region10: #{lstm_text_model_forward.1} parent=0 // pred_check
    _
  $region11: #{lstm_text_model_forward.1} parent=0 // pred_check_branch
    %18 = sbr.rel (0) target = $region13
  $region12: #{lstm_text_model_forward.1} parent=0 // pred_region
    _
  $region13: #{lstm_text_model_forward.1} parent=0 // pred_fallthru
    _
  // Predicated region
  $region14: #{lstm_text_model_forward.1} parent=0 // pred_check
    _
  $region15: #{lstm_text_model_forward.1} parent=0 // pred_check_branch
    %20 = sbr.rel (0) target = $region17
  $region16: #{lstm_text_model_forward.1} parent=0 // pred_region
    _
  $region17: #{lstm_text_model_forward.1} parent=0 // pred_fallthru
    _
  // Predicated region
  $region18: #{lstm_text_model_forward.1} parent=0 // pred_check
    _
  $region19: #{lstm_text_model_forward.1} parent=0 // pred_check_branch
    %22 = sbr.rel (0) target = $region21
  $region20: #{lstm_text_model_forward.1} parent=0 // pred_region
    _
  $region21: #{lstm_text_model_forward.1} parent=0 // pred_fallthru
    _
  // Predicated region
  $region22: #{lstm_text_model_forward.1} parent=0 // pred_check
    _
  $region23: #{lstm_text_model_forward.1} parent=0 // pred_check_branch
    %24 = sbr.rel (0) target = $region25
  $region24: #{lstm_text_model_forward.1} parent=0 // pred_region
    _
  $region25: #{lstm_text_model_forward.1} parent=0 // pred_fallthru
    _
  // Predicated region
  $region26: #{lstm_text_model_forward.1} parent=0 // pred_check
    _
  $region27: #{lstm_text_model_forward.1} parent=0 // pred_check_branch
    %26 = sbr.rel (0) target = $region29
  $region28: #{lstm_text_model_forward.1} parent=0 // pred_region
    _
  $region29: #{lstm_text_model_forward.1} parent=0 // pred_fallthru
    _
  // Predicated region
  $region30: #{lstm_text_model_forward.1} parent=0 // pred_check
    _
  $region31: #{lstm_text_model_forward.1} parent=0 // pred_check_branch
    %28 = sbr.rel (0) target = $region33
  $region32: #{lstm_text_model_forward.1} parent=0 // pred_region
    _
  $region33: #{lstm_text_model_forward.1} parent=0 // pred_fallthru
    _
  %v29 = vld [vmem:[%s1] sm:$0xf]
  %v31 = vlaneseq
  %v32 = vshrl.u32 %v31, 7
  %v33 = vsub.s32 0, %v32
  %v34 = vrot.slane %v29, %v33
  %v35 = vlaneseq
  %v36 = vshrl.u32 %v35, 7
  %v37 = vsub.s32 1, %v36
  %v38 = vrot.slane %v29, %v37
  %v39 = vlaneseq
  %v40 = vshrl.u32 %v39, 7
  %v41 = vsub.s32 2, %v40
  %v42 = vrot.slane %v29, %v41
  %v43 = vlaneseq
  %v44 = vshrl.u32 %v43, 7
  %v45 = vsub.s32 3, %v44
  %v46 = vrot.slane %v29, %v45
  %v51 = vld [vmem:[%s2] sm:$0xf]
  %v53 = vlaneseq
  %v54 = vshrl.u32 %v53, 7
  %v55 = vsub.s32 0, %v54
  %v56 = vrot.slane %v51, %v55
  %v57 = vlaneseq
  %v58 = vshrl.u32 %v57, 7
  %v59 = vsub.s32 1, %v58
  %v60 = vrot.slane %v51, %v59
  %v61 = vlaneseq
  %v62 = vshrl.u32 %v61, 7
  %v63 = vsub.s32 2, %v62
  %v64 = vrot.slane %v51, %v63
  %v65 = vlaneseq
  %v66 = vshrl.u32 %v65, 7
  %v67 = vsub.s32 3, %v66
  %v68 = vrot.slane %v51, %v67
  %v73 = vld [vmem:[%s5] sm:$0xf]
  %v75 = vlaneseq
  %v76 = vshrl.u32 %v75, 7
  %v77 = vsub.s32 0, %v76
  %v78 = vrot.slane %v73, %v77
  %v79 = vlaneseq
  %v80 = vshrl.u32 %v79, 7
  %v81 = vsub.s32 1, %v80
  %v82 = vrot.slane %v73, %v81
  %v83 = vlaneseq
  %v84 = vshrl.u32 %v83, 7
  %v85 = vsub.s32 2, %v84
  %v86 = vrot.slane %v73, %v85
  %v87 = vlaneseq
  %v88 = vshrl.u32 %v87, 7
  %v89 = vsub.s32 3, %v88
  %v90 = vrot.slane %v73, %v89
  %v95 = vld [vmem:[%s0] sm:$0xff]
  %97 = vset.pattern.permute.xlu0 0
  %98 = vperm.xlu0 %97, %v95
  %v99 = vpop.permute.xlu0 %98
  %v101 = vmul.f32 %v99, %v34
  %v102 = vmul.f32 %v99, %v38
  %v103 = vmul.f32 %v99, %v42
  %v104 = vmul.f32 %v99, %v46
  %v105 = vadd.f32 %v101, %v56
  %v106 = vadd.f32 %v102, %v60
  %v107 = vadd.f32 %v103, %v64
  %v108 = vadd.f32 %v104, %v68
  %v109 = vld [vmem:[%s3] sm:$0xff]
  %v110 = vld [vmem:[%s3 + $0x8] sm:$0xff]
  %v111 = vld [vmem:[%s3 + $0x10] sm:$0xff]
  %v112 = vld [vmem:[%s3 + $0x18] sm:$0xff]
  %v113 = vld [vmem:[%s3 + $0x20] sm:$0xff]
  %v114 = vld [vmem:[%s3 + $0x28] sm:$0xff]
  %v115 = vld [vmem:[%s3 + $0x30] sm:$0xff]
  %v116 = vld [vmem:[%s3 + $0x38] sm:$0xff]
  %v117 = vld [vmem:[%s3 + $0x40] sm:$0xff]
  %v118 = vld [vmem:[%s3 + $0x48] sm:$0xff]
  %v119 = vld [vmem:[%s3 + $0x50] sm:$0xff]
  %v120 = vld [vmem:[%s3 + $0x58] sm:$0xff]
  %v121 = vld [vmem:[%s3 + $0x60] sm:$0xff]
  %v122 = vld [vmem:[%s3 + $0x68] sm:$0xff]
  %v123 = vld [vmem:[%s3 + $0x70] sm:$0xff]
  %v124 = vld [vmem:[%s3 + $0x78] sm:$0xff]
  %v125 = vld [vmem:[%s3 + $0x80] sm:$0xff]
  %v126 = vld [vmem:[%s3 + $0x88] sm:$0xff]
  %v127 = vld [vmem:[%s3 + $0x90] sm:$0xff]
  %v128 = vld [vmem:[%s3 + $0x98] sm:$0xff]
  %v129 = vld [vmem:[%s3 + $0xa0] sm:$0xff]
  %v130 = vld [vmem:[%s3 + $0xa8] sm:$0xff]
  %v131 = vld [vmem:[%s3 + $0xb0] sm:$0xff]
  %v132 = vld [vmem:[%s3 + $0xb8] sm:$0xff]
  %v133 = vld [vmem:[%s3 + $0xc0] sm:$0xff]
  %v134 = vld [vmem:[%s3 + $0xc8] sm:$0xff]
  %v135 = vld [vmem:[%s3 + $0xd0] sm:$0xff]
  %v136 = vld [vmem:[%s3 + $0xd8] sm:$0xff]
  %v137 = vld [vmem:[%s3 + $0xe0] sm:$0xff]
  %v138 = vld [vmem:[%s3 + $0xe8] sm:$0xff]
  %v139 = vld [vmem:[%s3 + $0xf0] sm:$0xff]
  %v140 = vld [vmem:[%s3 + $0xf8] sm:$0xff]
  %v141 = vld [vmem:[%s3 + $0x100] sm:$0xff]
  %v142 = vld [vmem:[%s3 + $0x108] sm:$0xff]
  %v143 = vld [vmem:[%s3 + $0x110] sm:$0xff]
  %v144 = vld [vmem:[%s3 + $0x118] sm:$0xff]
  %v145 = vld [vmem:[%s3 + $0x120] sm:$0xff]
  %v146 = vld [vmem:[%s3 + $0x128] sm:$0xff]
  %v147 = vld [vmem:[%s3 + $0x130] sm:$0xff]
  %v148 = vld [vmem:[%s3 + $0x138] sm:$0xff]
  %v149 = vld [vmem:[%s3 + $0x140] sm:$0xff]
  %v150 = vld [vmem:[%s3 + $0x148] sm:$0xff]
  %v151 = vld [vmem:[%s3 + $0x150] sm:$0xff]
  %v152 = vld [vmem:[%s3 + $0x158] sm:$0xff]
  %v153 = vld [vmem:[%s3 + $0x160] sm:$0xff]
  %v154 = vld [vmem:[%s3 + $0x168] sm:$0xff]
  %v155 = vld [vmem:[%s3 + $0x170] sm:$0xff]
  %v156 = vld [vmem:[%s3 + $0x178] sm:$0xff]
  %v157 = vld [vmem:[%s3 + $0x180] sm:$0xff]
  %v158 = vld [vmem:[%s3 + $0x188] sm:$0xff]
  %v159 = vld [vmem:[%s3 + $0x190] sm:$0xff]
  %v160 = vld [vmem:[%s3 + $0x198] sm:$0xff]
  %v161 = vld [vmem:[%s3 + $0x1a0] sm:$0xff]
  %v162 = vld [vmem:[%s3 + $0x1a8] sm:$0xff]
  %v163 = vld [vmem:[%s3 + $0x1b0] sm:$0xff]
  %v164 = vld [vmem:[%s3 + $0x1b8] sm:$0xff]
  %v165 = vld [vmem:[%s3 + $0x1c0] sm:$0xff]
  %v166 = vld [vmem:[%s3 + $0x1c8] sm:$0xff]
  %v167 = vld [vmem:[%s3 + $0x1d0] sm:$0xff]
  %v168 = vld [vmem:[%s3 + $0x1d8] sm:$0xff]
  %v169 = vld [vmem:[%s3 + $0x1e0] sm:$0xff]
  %v170 = vld [vmem:[%s3 + $0x1e8] sm:$0xff]
  %v171 = vld [vmem:[%s3 + $0x1f0] sm:$0xff]
  %v172 = vld [vmem:[%s3 + $0x1f8] sm:$0xff]
  %173 = vmatprep.subr.mxu0 %v110
  %174 = vmatpush1.msra.mxu0 %v109
  %175 = vmatprep.subr.mxu0 %v114
  %176 = vmatpush1.msra.mxu0 %v113
  %177 = vmatprep.subr.mxu0 %v118
  %178 = vmatpush1.msra.mxu0 %v117
  %179 = vmatprep.subr.mxu0 %v122
  %180 = vmatpush1.msra.mxu0 %v121
  %181 = vmatprep.subr.mxu0 %v126
  %182 = vmatpush1.msra.mxu0 %v125
  %183 = vmatprep.subr.mxu0 %v130
  %184 = vmatpush1.msra.mxu0 %v129
  %185 = vmatprep.subr.mxu0 %v134
  %186 = vmatpush1.msra.mxu0 %v133
  %187 = vmatprep.subr.mxu0 %v138
  %188 = vmatpush1.msra.mxu0 %v137
  %189 = vmatprep.subr.mxu0 %v142
  %190 = vmatpush1.msra.mxu0 %v141
  %191 = vmatprep.subr.mxu0 %v146
  %192 = vmatpush1.msra.mxu0 %v145
  %193 = vmatprep.subr.mxu0 %v150
  %194 = vmatpush1.msra.mxu0 %v149
  %195 = vmatprep.subr.mxu0 %v154
  %196 = vmatpush1.msra.mxu0 %v153
  %197 = vmatprep.subr.mxu0 %v158
  %198 = vmatpush1.msra.mxu0 %v157
  %199 = vmatprep.subr.mxu0 %v162
  %200 = vmatpush1.msra.mxu0 %v161
  %201 = vmatprep.subr.mxu0 %v166
  %202 = vmatpush1.msra.mxu0 %v165
  %203 = vmatprep.subr.mxu0 %v170
  %204 = vmatpush1.msra.mxu0 %v169
  %205 = vmatprep.subr.mxu0 0.0
  %206 = vmatpush1.msra.mxu0 0.0
  %207 = vmatprep.subr.mxu0 0.0
  %208 = vmatpush1.msra.mxu0 0.0
  %209 = vmatprep.subr.mxu0 0.0
  %210 = vmatpush1.msra.mxu0 0.0
  %211 = vmatprep.subr.mxu0 0.0
  %212 = vmatpush1.msra.mxu0 0.0
  %213 = vmatprep.subr.mxu0 0.0
  %214 = vmatpush1.msra.mxu0 0.0
  %215 = vmatprep.subr.mxu0 0.0
  %216 = vmatpush1.msra.mxu0 0.0
  %217 = vmatprep.subr.mxu0 0.0
  %218 = vmatpush1.msra.mxu0 0.0
  %219 = vmatprep.subr.mxu0 0.0
  %220 = vmatpush1.msra.mxu0 0.0
  %221 = vmatprep.subr.mxu0 0.0
  %222 = vmatpush1.msra.mxu0 0.0
  %223 = vmatprep.subr.mxu0 0.0
  %224 = vmatpush1.msra.mxu0 0.0
  %225 = vmatprep.subr.mxu0 0.0
  %226 = vmatpush1.msra.mxu0 0.0
  %227 = vmatprep.subr.mxu0 0.0
  %228 = vmatpush1.msra.mxu0 0.0
  %229 = vmatprep.subr.mxu0 0.0
  %230 = vmatpush1.msra.mxu0 0.0
  %231 = vmatprep.subr.mxu0 0.0
  %232 = vmatpush1.msra.mxu0 0.0
  %233 = vmatprep.subr.mxu0 0.0
  %234 = vmatpush1.msra.mxu0 0.0
  %235 = vmatprep.subr.mxu0 0.0
  %236 = vmatpush1.msra.mxu0 0.0
  %237 = vmatprep.mubr.f32.mxu0 0.0
  %238 = vmatmul.mubr.f32.gmra.mrb[0].mxu0 0.0
  %v239 = vpop.f32.mrb[0].mxu0
  %v240 = vadd.f32 0.0, %v239
  %v241 = vpop.f32.mrb[0].mxu0
  %v242 = vadd.f32 0.0, %v241
  %243 = vdwg.mxu0
  %244 = vmatprep.subr.mxu0 %v112
  %245 = vmatpush1.msra.mxu0 %v111
  %246 = vmatprep.subr.mxu0 %v116
  %247 = vmatpush1.msra.mxu0 %v115
  %248 = vmatprep.subr.mxu0 %v120
  %249 = vmatpush1.msra.mxu0 %v119
  %250 = vmatprep.subr.mxu0 %v124
  %251 = vmatpush1.msra.mxu0 %v123
  %252 = vmatprep.subr.mxu0 %v128
  %253 = vmatpush1.msra.mxu0 %v127
  %254 = vmatprep.subr.mxu0 %v132
  %255 = vmatpush1.msra.mxu0 %v131
  %256 = vmatprep.subr.mxu0 %v136
  %257 = vmatpush1.msra.mxu0 %v135
  %258 = vmatprep.subr.mxu0 %v140
  %259 = vmatpush1.msra.mxu0 %v139
  %260 = vmatprep.subr.mxu0 %v144
  %261 = vmatpush1.msra.mxu0 %v143
  %262 = vmatprep.subr.mxu0 %v148
  %263 = vmatpush1.msra.mxu0 %v147
  %264 = vmatprep.subr.mxu0 %v152
  %265 = vmatpush1.msra.mxu0 %v151
  %266 = vmatprep.subr.mxu0 %v156
  %267 = vmatpush1.msra.mxu0 %v155
  %268 = vmatprep.subr.mxu0 %v160
  %269 = vmatpush1.msra.mxu0 %v159
  %270 = vmatprep.subr.mxu0 %v164
  %271 = vmatpush1.msra.mxu0 %v163
  %272 = vmatprep.subr.mxu0 %v168
  %273 = vmatpush1.msra.mxu0 %v167
  %274 = vmatprep.subr.mxu0 %v172
  %275 = vmatpush1.msra.mxu0 %v171
  %276 = vmatprep.subr.mxu0 0.0
  %277 = vmatpush1.msra.mxu0 0.0
  %278 = vmatprep.subr.mxu0 0.0
  %279 = vmatpush1.msra.mxu0 0.0
  %280 = vmatprep.subr.mxu0 0.0
  %281 = vmatpush1.msra.mxu0 0.0
  %282 = vmatprep.subr.mxu0 0.0
  %283 = vmatpush1.msra.mxu0 0.0
  %284 = vmatprep.subr.mxu0 0.0
  %285 = vmatpush1.msra.mxu0 0.0
  %286 = vmatprep.subr.mxu0 0.0
  %287 = vmatpush1.msra.mxu0 0.0
  %288 = vmatprep.subr.mxu0 0.0
  %289 = vmatpush1.msra.mxu0 0.0
  %290 = vmatprep.subr.mxu0 0.0
  %291 = vmatpush1.msra.mxu0 0.0
  %292 = vmatprep.subr.mxu0 0.0
  %293 = vmatpush1.msra.mxu0 0.0
  %294 = vmatprep.subr.mxu0 0.0
  %295 = vmatpush1.msra.mxu0 0.0
  %296 = vmatprep.subr.mxu0 0.0
  %297 = vmatpush1.msra.mxu0 0.0
  %298 = vmatprep.subr.mxu0 0.0
  %299 = vmatpush1.msra.mxu0 0.0
  %300 = vmatprep.subr.mxu0 0.0
  %301 = vmatpush1.msra.mxu0 0.0
  %302 = vmatprep.subr.mxu0 0.0
  %303 = vmatpush1.msra.mxu0 0.0
  %304 = vmatprep.subr.mxu0 0.0
  %305 = vmatpush1.msra.mxu0 0.0
  %306 = vmatprep.subr.mxu0 0.0
  %307 = vmatpush1.msra.mxu0 0.0
  %308 = vmatprep.mubr.f32.mxu0 0.0
  %309 = vmatmul.mubr.f32.gmra.mrb[0].mxu0 0.0
  %v310 = vpop.f32.mrb[0].mxu0
  %v311 = vadd.f32 0.0, %v310
  %v312 = vpop.f32.mrb[0].mxu0
  %v313 = vadd.f32 0.0, %v312
  %314 = vdwg.mxu0
  %v315 = vadd.f32 %v105, %v240
  %v316 = vadd.f32 %v106, %v242
  %v317 = vadd.f32 %v107, %v311
  %v318 = vadd.f32 %v108, %v313
  %v319 = vmul.f32 %v315, 0.5
  %v320 = vtanh.pop %v319
  %v321 = vadd.f32 %v320, 1.0
  %v322 = vmul.f32 %v321, 0.5
  %v323 = vmul.f32 %v316, 0.5
  %v324 = vtanh.pop %v323
  %v325 = vadd.f32 %v324, 1.0
  %v326 = vmul.f32 %v325, 0.5
  %v327 = vtanh.pop %v317
  %v328 = vmul.f32 %v318, 0.5
  %v329 = vtanh.pop %v328
  %v330 = vadd.f32 %v329, 1.0
  %v331 = vmul.f32 %v330, 0.5
  %v332 = vmul.f32 %v326, 0.0
  %v333 = vmul.f32 %v322, %v327
  %v334 = vadd.f32 %v332, %v333
  %v335 = vtanh.pop %v334
  %v336 = vmul.f32 %v331, %v335
  %v337 = vld [vmem:[%s4] sm:$0xff]
  %v338 = vld [vmem:[%s4 + $0x8] sm:$0xff]
  %v339 = vld [vmem:[%s4 + $0x10] sm:$0xff]
  %v340 = vld [vmem:[%s4 + $0x18] sm:$0xff]
  %v341 = vld [vmem:[%s4 + $0x20] sm:$0xff]
  %v342 = vld [vmem:[%s4 + $0x28] sm:$0xff]
  %v343 = vld [vmem:[%s4 + $0x30] sm:$0xff]
  %v344 = vld [vmem:[%s4 + $0x38] sm:$0xff]
  %v345 = vld [vmem:[%s4 + $0x40] sm:$0xff]
  %v346 = vld [vmem:[%s4 + $0x48] sm:$0xff]
  %v347 = vld [vmem:[%s4 + $0x50] sm:$0xff]
  %v348 = vld [vmem:[%s4 + $0x58] sm:$0xff]
  %v349 = vld [vmem:[%s4 + $0x60] sm:$0xff]
  %v350 = vld [vmem:[%s4 + $0x68] sm:$0xff]
  %v351 = vld [vmem:[%s4 + $0x70] sm:$0xff]
  %v352 = vld [vmem:[%s4 + $0x78] sm:$0xff]
  %v353 = vld [vmem:[%s4 + $0x80] sm:$0xff]
  %v354 = vld [vmem:[%s4 + $0x88] sm:$0xff]
  %v355 = vld [vmem:[%s4 + $0x90] sm:$0xff]
  %v356 = vld [vmem:[%s4 + $0x98] sm:$0xff]
  %v357 = vld [vmem:[%s4 + $0xa0] sm:$0xff]
  %v358 = vld [vmem:[%s4 + $0xa8] sm:$0xff]
  %v359 = vld [vmem:[%s4 + $0xb0] sm:$0xff]
  %v360 = vld [vmem:[%s4 + $0xb8] sm:$0xff]
  %v361 = vld [vmem:[%s4 + $0xc0] sm:$0xff]
  %v362 = vld [vmem:[%s4 + $0xc8] sm:$0xff]
  %v363 = vld [vmem:[%s4 + $0xd0] sm:$0xff]
  %v364 = vld [vmem:[%s4 + $0xd8] sm:$0xff]
  %v365 = vld [vmem:[%s4 + $0xe0] sm:$0xff]
  %v366 = vld [vmem:[%s4 + $0xe8] sm:$0xff]
  %v367 = vld [vmem:[%s4 + $0xf0] sm:$0xff]
  %v368 = vld [vmem:[%s4 + $0xf8] sm:$0xff]
  %v369 = vld [vmem:[%s4 + $0x100] sm:$0xff]
  %v370 = vld [vmem:[%s4 + $0x108] sm:$0xff]
  %v371 = vld [vmem:[%s4 + $0x110] sm:$0xff]
  %v372 = vld [vmem:[%s4 + $0x118] sm:$0xff]
  %v373 = vld [vmem:[%s4 + $0x120] sm:$0xff]
  %v374 = vld [vmem:[%s4 + $0x128] sm:$0xff]
  %v375 = vld [vmem:[%s4 + $0x130] sm:$0xff]
  %v376 = vld [vmem:[%s4 + $0x138] sm:$0xff]
  %v377 = vld [vmem:[%s4 + $0x140] sm:$0xff]
  %v378 = vld [vmem:[%s4 + $0x148] sm:$0xff]
  %v379 = vld [vmem:[%s4 + $0x150] sm:$0xff]
  %v380 = vld [vmem:[%s4 + $0x158] sm:$0xff]
  %v381 = vld [vmem:[%s4 + $0x160] sm:$0xff]
  %v382 = vld [vmem:[%s4 + $0x168] sm:$0xff]
  %v383 = vld [vmem:[%s4 + $0x170] sm:$0xff]
  %v384 = vld [vmem:[%s4 + $0x178] sm:$0xff]
  %v385 = vld [vmem:[%s4 + $0x180] sm:$0xff]
  %v386 = vld [vmem:[%s4 + $0x188] sm:$0xff]
  %v387 = vld [vmem:[%s4 + $0x190] sm:$0xff]
  %v388 = vld [vmem:[%s4 + $0x198] sm:$0xff]
  %v389 = vld [vmem:[%s4 + $0x1a0] sm:$0xff]
  %v390 = vld [vmem:[%s4 + $0x1a8] sm:$0xff]
  %v391 = vld [vmem:[%s4 + $0x1b0] sm:$0xff]
  %v392 = vld [vmem:[%s4 + $0x1b8] sm:$0xff]
  %v393 = vld [vmem:[%s4 + $0x1c0] sm:$0xff]
  %v394 = vld [vmem:[%s4 + $0x1c8] sm:$0xff]
  %v395 = vld [vmem:[%s4 + $0x1d0] sm:$0xff]
  %v396 = vld [vmem:[%s4 + $0x1d8] sm:$0xff]
  %v397 = vld [vmem:[%s4 + $0x1e0] sm:$0xff]
  %v398 = vld [vmem:[%s4 + $0x1e8] sm:$0xff]
  %v399 = vld [vmem:[%s4 + $0x1f0] sm:$0xff]
  %v400 = vld [vmem:[%s4 + $0x1f8] sm:$0xff]
  %v401 = vld [vmem:[%s4 + $0x200] sm:$0xff]
  %v402 = vld [vmem:[%s4 + $0x208] sm:$0xff]
  %v403 = vld [vmem:[%s4 + $0x210] sm:$0xff]
  %v404 = vld [vmem:[%s4 + $0x218] sm:$0xff]
  %v405 = vld [vmem:[%s4 + $0x220] sm:$0xff]
  %v406 = vld [vmem:[%s4 + $0x228] sm:$0xff]
  %v407 = vld [vmem:[%s4 + $0x230] sm:$0xff]
  %v408 = vld [vmem:[%s4 + $0x238] sm:$0xff]
  %v409 = vld [vmem:[%s4 + $0x240] sm:$0xff]
  %v410 = vld [vmem:[%s4 + $0x248] sm:$0xff]
  %v411 = vld [vmem:[%s4 + $0x250] sm:$0xff]
  %v412 = vld [vmem:[%s4 + $0x258] sm:$0xff]
  %v413 = vld [vmem:[%s4 + $0x260] sm:$0xff]
  %v414 = vld [vmem:[%s4 + $0x268] sm:$0xff]
  %v415 = vld [vmem:[%s4 + $0x270] sm:$0xff]
  %v416 = vld [vmem:[%s4 + $0x278] sm:$0xff]
  %v417 = vld [vmem:[%s4 + $0x280] sm:$0xff]
  %v418 = vld [vmem:[%s4 + $0x288] sm:$0xff]
  %v419 = vld [vmem:[%s4 + $0x290] sm:$0xff]
  %v420 = vld [vmem:[%s4 + $0x298] sm:$0xff]
  %v421 = vld [vmem:[%s4 + $0x2a0] sm:$0xff]
  %v422 = vld [vmem:[%s4 + $0x2a8] sm:$0xff]
  %v423 = vld [vmem:[%s4 + $0x2b0] sm:$0xff]
  %v424 = vld [vmem:[%s4 + $0x2b8] sm:$0xff]
  %v425 = vld [vmem:[%s4 + $0x2c0] sm:$0xff]
  %v426 = vld [vmem:[%s4 + $0x2c8] sm:$0xff]
  %v427 = vld [vmem:[%s4 + $0x2d0] sm:$0xff]
  %v428 = vld [vmem:[%s4 + $0x2d8] sm:$0xff]
  %v429 = vld [vmem:[%s4 + $0x2e0] sm:$0xff]
  %v430 = vld [vmem:[%s4 + $0x2e8] sm:$0xff]
  %v431 = vld [vmem:[%s4 + $0x2f0] sm:$0xff]
  %v432 = vld [vmem:[%s4 + $0x2f8] sm:$0xff]
  %v433 = vld [vmem:[%s4 + $0x300] sm:$0xff]
  %v434 = vld [vmem:[%s4 + $0x308] sm:$0xff]
  %v435 = vld [vmem:[%s4 + $0x310] sm:$0xff]
  %v436 = vld [vmem:[%s4 + $0x318] sm:$0xff]
  %v437 = vld [vmem:[%s4 + $0x320] sm:$0xff]
  %v438 = vld [vmem:[%s4 + $0x328] sm:$0xff]
  %v439 = vld [vmem:[%s4 + $0x330] sm:$0xff]
  %v440 = vld [vmem:[%s4 + $0x338] sm:$0xff]
  %v441 = vld [vmem:[%s4 + $0x340] sm:$0xff]
  %v442 = vld [vmem:[%s4 + $0x348] sm:$0xff]
  %v443 = vld [vmem:[%s4 + $0x350] sm:$0xff]
  %v444 = vld [vmem:[%s4 + $0x358] sm:$0xff]
  %v445 = vld [vmem:[%s4 + $0x360] sm:$0xff]
  %v446 = vld [vmem:[%s4 + $0x368] sm:$0xff]
  %v447 = vld [vmem:[%s4 + $0x370] sm:$0xff]
  %v448 = vld [vmem:[%s4 + $0x378] sm:$0xff]
  %v449 = vld [vmem:[%s4 + $0x380] sm:$0xff]
  %v450 = vld [vmem:[%s4 + $0x388] sm:$0xff]
  %v451 = vld [vmem:[%s4 + $0x390] sm:$0xff]
  %v452 = vld [vmem:[%s4 + $0x398] sm:$0xff]
  %v453 = vld [vmem:[%s4 + $0x3a0] sm:$0xff]
  %v454 = vld [vmem:[%s4 + $0x3a8] sm:$0xff]
  %v455 = vld [vmem:[%s4 + $0x3b0] sm:$0xff]
  %v456 = vld [vmem:[%s4 + $0x3b8] sm:$0xff]
  %v457 = vld [vmem:[%s4 + $0x3c0] sm:$0xff]
  %v458 = vld [vmem:[%s4 + $0x3c8] sm:$0xff]
  %v459 = vld [vmem:[%s4 + $0x3d0] sm:$0xff]
  %v460 = vld [vmem:[%s4 + $0x3d8] sm:$0xff]
  %v461 = vld [vmem:[%s4 + $0x3e0] sm:$0xff]
  %v462 = vld [vmem:[%s4 + $0x3e8] sm:$0xff]
  %v463 = vld [vmem:[%s4 + $0x3f0] sm:$0xff]
  %v464 = vld [vmem:[%s4 + $0x3f8] sm:$0xff]
  %465 = vmatprep.subr.mxu0 %v338
  %466 = vmatpush1.msra.mxu0 %v337
  %467 = vmatprep.subr.mxu0 %v342
  %468 = vmatpush1.msra.mxu0 %v341
  %469 = vmatprep.subr.mxu0 %v346
  %470 = vmatpush1.msra.mxu0 %v345
  %471 = vmatprep.subr.mxu0 %v350
  %472 = vmatpush1.msra.mxu0 %v349
  %473 = vmatprep.subr.mxu0 %v354
  %474 = vmatpush1.msra.mxu0 %v353
  %475 = vmatprep.subr.mxu0 %v358
  %476 = vmatpush1.msra.mxu0 %v357
  %477 = vmatprep.subr.mxu0 %v362
  %478 = vmatpush1.msra.mxu0 %v361
  %479 = vmatprep.subr.mxu0 %v366
  %480 = vmatpush1.msra.mxu0 %v365
  %481 = vmatprep.subr.mxu0 %v370
  %482 = vmatpush1.msra.mxu0 %v369
  %483 = vmatprep.subr.mxu0 %v374
  %484 = vmatpush1.msra.mxu0 %v373
  %485 = vmatprep.subr.mxu0 %v378
  %486 = vmatpush1.msra.mxu0 %v377
  %487 = vmatprep.subr.mxu0 %v382
  %488 = vmatpush1.msra.mxu0 %v381
  %489 = vmatprep.subr.mxu0 %v386
  %490 = vmatpush1.msra.mxu0 %v385
  %491 = vmatprep.subr.mxu0 %v390
  %492 = vmatpush1.msra.mxu0 %v389
  %493 = vmatprep.subr.mxu0 %v394
  %494 = vmatpush1.msra.mxu0 %v393
  %495 = vmatprep.subr.mxu0 %v398
  %496 = vmatpush1.msra.mxu0 %v397
  %497 = vmatprep.subr.mxu0 %v402
  %498 = vmatpush1.msra.mxu0 %v401
  %499 = vmatprep.subr.mxu0 %v406
  %500 = vmatpush1.msra.mxu0 %v405
  %501 = vmatprep.subr.mxu0 %v410
  %502 = vmatpush1.msra.mxu0 %v409
  %503 = vmatprep.subr.mxu0 %v414
  %504 = vmatpush1.msra.mxu0 %v413
  %505 = vmatprep.subr.mxu0 %v418
  %506 = vmatpush1.msra.mxu0 %v417
  %507 = vmatprep.subr.mxu0 %v422
  %508 = vmatpush1.msra.mxu0 %v421
  %509 = vmatprep.subr.mxu0 %v426
  %510 = vmatpush1.msra.mxu0 %v425
  %511 = vmatprep.subr.mxu0 %v430
  %512 = vmatpush1.msra.mxu0 %v429
  %513 = vmatprep.subr.mxu0 %v434
  %514 = vmatpush1.msra.mxu0 %v433
  %515 = vmatprep.subr.mxu0 %v438
  %516 = vmatpush1.msra.mxu0 %v437
  %517 = vmatprep.subr.mxu0 %v442
  %518 = vmatpush1.msra.mxu0 %v441
  %519 = vmatprep.subr.mxu0 %v446
  %520 = vmatpush1.msra.mxu0 %v445
  %521 = vmatprep.subr.mxu0 %v450
  %522 = vmatpush1.msra.mxu0 %v449
  %523 = vmatprep.subr.mxu0 %v454
  %524 = vmatpush1.msra.mxu0 %v453
  %525 = vmatprep.subr.mxu0 %v458
  %526 = vmatpush1.msra.mxu0 %v457
  %527 = vmatprep.subr.mxu0 %v462
  %528 = vmatpush1.msra.mxu0 %v461
  %529 = vmatprep.mubr.f32.mxu0 0.0
  %530 = vmatmul.mubr.f32.gmra.mrb[0].mxu0 %v336
  %v531 = vpop.f32.mrb[0].mxu0
  %v532 = vadd.f32 %v78, %v531
  %v533 = vpop.f32.mrb[0].mxu0
  %v534 = vadd.f32 %v82, %v533
  %535 = vdwg.mxu0
  %536 = vmatprep.subr.mxu0 %v340
  %537 = vmatpush1.msra.mxu0 %v339
  %538 = vmatprep.subr.mxu0 %v344
  %539 = vmatpush1.msra.mxu0 %v343
  %540 = vmatprep.subr.mxu0 %v348
  %541 = vmatpush1.msra.mxu0 %v347
  %542 = vmatprep.subr.mxu0 %v352
  %543 = vmatpush1.msra.mxu0 %v351
  %544 = vmatprep.subr.mxu0 %v356
  %545 = vmatpush1.msra.mxu0 %v355
  %546 = vmatprep.subr.mxu0 %v360
  %547 = vmatpush1.msra.mxu0 %v359
  %548 = vmatprep.subr.mxu0 %v364
  %549 = vmatpush1.msra.mxu0 %v363
  %550 = vmatprep.subr.mxu0 %v368
  %551 = vmatpush1.msra.mxu0 %v367
  %552 = vmatprep.subr.mxu0 %v372
  %553 = vmatpush1.msra.mxu0 %v371
  %554 = vmatprep.subr.mxu0 %v376
  %555 = vmatpush1.msra.mxu0 %v375
  %556 = vmatprep.subr.mxu0 %v380
  %557 = vmatpush1.msra.mxu0 %v379
  %558 = vmatprep.subr.mxu0 %v384
  %559 = vmatpush1.msra.mxu0 %v383
  %560 = vmatprep.subr.mxu0 %v388
  %561 = vmatpush1.msra.mxu0 %v387
  %562 = vmatprep.subr.mxu0 %v392
  %563 = vmatpush1.msra.mxu0 %v391
  %564 = vmatprep.subr.mxu0 %v396
  %565 = vmatpush1.msra.mxu0 %v395
  %566 = vmatprep.subr.mxu0 %v400
  %567 = vmatpush1.msra.mxu0 %v399
  %568 = vmatprep.subr.mxu0 %v404
  %569 = vmatpush1.msra.mxu0 %v403
  %570 = vmatprep.subr.mxu0 %v408
  %571 = vmatpush1.msra.mxu0 %v407
  %572 = vmatprep.subr.mxu0 %v412
  %573 = vmatpush1.msra.mxu0 %v411
  %574 = vmatprep.subr.mxu0 %v416
  %575 = vmatpush1.msra.mxu0 %v415
  %576 = vmatprep.subr.mxu0 %v420
  %577 = vmatpush1.msra.mxu0 %v419
  %578 = vmatprep.subr.mxu0 %v424
  %579 = vmatpush1.msra.mxu0 %v423
  %580 = vmatprep.subr.mxu0 %v428
  %581 = vmatpush1.msra.mxu0 %v427
  %582 = vmatprep.subr.mxu0 %v432
  %583 = vmatpush1.msra.mxu0 %v431
  %584 = vmatprep.subr.mxu0 %v436
  %585 = vmatpush1.msra.mxu0 %v435
  %586 = vmatprep.subr.mxu0 %v440
  %587 = vmatpush1.msra.mxu0 %v439
  %588 = vmatprep.subr.mxu0 %v444
  %589 = vmatpush1.msra.mxu0 %v443
  %590 = vmatprep.subr.mxu0 %v448
  %591 = vmatpush1.msra.mxu0 %v447
  %592 = vmatprep.subr.mxu0 %v452
  %593 = vmatpush1.msra.mxu0 %v451
  %594 = vmatprep.subr.mxu0 %v456
  %595 = vmatpush1.msra.mxu0 %v455
  %596 = vmatprep.subr.mxu0 %v460
  %597 = vmatpush1.msra.mxu0 %v459
  %598 = vmatprep.subr.mxu0 %v464
  %599 = vmatpush1.msra.mxu0 %v463
  %600 = vmatprep.mubr.f32.mxu0 0.0
  %601 = vmatmul.mubr.f32.gmra.mrb[0].mxu0 %v336
  %v602 = vpop.f32.mrb[0].mxu0
  %v603 = vadd.f32 %v86, %v602
  %v604 = vpop.f32.mrb[0].mxu0
  %v605 = vadd.f32 %v90, %v604
  %606 = vdwg.mxu0
  %v607 = vmul.f32 %v532, 0.5
  %v608 = vtanh.pop %v607
  %v609 = vadd.f32 %v608, 1.0
  %v610 = vmul.f32 %v609, 0.5
  %v611 = vmul.f32 %v534, 0.5
  %v612 = vtanh.pop %v611
  %v613 = vadd.f32 %v612, 1.0
  %v614 = vmul.f32 %v613, 0.5
  %v615 = vtanh.pop %v603
  %v616 = vmul.f32 %v605, 0.5
  %v617 = vtanh.pop %v616
  %v618 = vadd.f32 %v617, 1.0
  %v619 = vmul.f32 %v618, 0.5
  %v620 = vmul.f32 %v614, 0.0
  %v621 = vmul.f32 %v610, %v615
  %v622 = vadd.f32 %v620, %v621
  %v623 = vtanh.pop %v622
  %v624 = vmul.f32 %v619, %v623
  %625 = vst [vmem:[#allocation2] sm:$0xff] %v624
  %s626 = scalar_lea.vmem %s0, 8
  %v627 = vld [vmem:[%s626] sm:$0xff]
  %629 = vset.pattern.permute.xlu0 0
  %630 = vperm.xlu0 %629, %v627
  %v631 = vpop.permute.xlu0 %630
  %v633 = vmul.f32 %v631, %v34
  %v634 = vmul.f32 %v631, %v38
  %v635 = vmul.f32 %v631, %v42
  %v636 = vmul.f32 %v631, %v46
  %v637 = vadd.f32 %v633, %v56
  %v638 = vadd.f32 %v634, %v60
  %v639 = vadd.f32 %v635, %v64
  %v640 = vadd.f32 %v636, %v68
  %v641 = vld [vmem:[%s3] sm:$0xff]
  %v642 = vld [vmem:[%s3 + $0x8] sm:$0xff]
  %v643 = vld [vmem:[%s3 + $0x10] sm:$0xff]
  %v644 = vld [vmem:[%s3 + $0x18] sm:$0xff]
  %v645 = vld [vmem:[%s3 + $0x20] sm:$0xff]
  %v646 = vld [vmem:[%s3 + $0x28] sm:$0xff]
  %v647 = vld [vmem:[%s3 + $0x30] sm:$0xff]
  %v648 = vld [vmem:[%s3 + $0x38] sm:$0xff]
  %v649 = vld [vmem:[%s3 + $0x40] sm:$0xff]
  %v650 = vld [vmem:[%s3 + $0x48] sm:$0xff]
  %v651 = vld [vmem:[%s3 + $0x50] sm:$0xff]
  %v652 = vld [vmem:[%s3 + $0x58] sm:$0xff]
  %v653 = vld [vmem:[%s3 + $0x60] sm:$0xff]
  %v654 = vld [vmem:[%s3 + $0x68] sm:$0xff]
  %v655 = vld [vmem:[%s3 + $0x70] sm:$0xff]
  %v656 = vld [vmem:[%s3 + $0x78] sm:$0xff]
  %v657 = vld [vmem:[%s3 + $0x80] sm:$0xff]
  %v658 = vld [vmem:[%s3 + $0x88] sm:$0xff]
  %v659 = vld [vmem:[%s3 + $0x90] sm:$0xff]
  %v660 = vld [vmem:[%s3 + $0x98] sm:$0xff]
  %v661 = vld [vmem:[%s3 + $0xa0] sm:$0xff]
  %v662 = vld [vmem:[%s3 + $0xa8] sm:$0xff]
  %v663 = vld [vmem:[%s3 + $0xb0] sm:$0xff]
  %v664 = vld [vmem:[%s3 + $0xb8] sm:$0xff]
  %v665 = vld [vmem:[%s3 + $0xc0] sm:$0xff]
  %v666 = vld [vmem:[%s3 + $0xc8] sm:$0xff]
  %v667 = vld [vmem:[%s3 + $0xd0] sm:$0xff]
  %v668 = vld [vmem:[%s3 + $0xd8] sm:$0xff]
  %v669 = vld [vmem:[%s3 + $0xe0] sm:$0xff]
  %v670 = vld [vmem:[%s3 + $0xe8] sm:$0xff]
  %v671 = vld [vmem:[%s3 + $0xf0] sm:$0xff]
  %v672 = vld [vmem:[%s3 + $0xf8] sm:$0xff]
  %v673 = vld [vmem:[%s3 + $0x100] sm:$0xff]
  %v674 = vld [vmem:[%s3 + $0x108] sm:$0xff]
  %v675 = vld [vmem:[%s3 + $0x110] sm:$0xff]
  %v676 = vld [vmem:[%s3 + $0x118] sm:$0xff]
  %v677 = vld [vmem:[%s3 + $0x120] sm:$0xff]
  %v678 = vld [vmem:[%s3 + $0x128] sm:$0xff]
  %v679 = vld [vmem:[%s3 + $0x130] sm:$0xff]
  %v680 = vld [vmem:[%s3 + $0x138] sm:$0xff]
  %v681 = vld [vmem:[%s3 + $0x140] sm:$0xff]
  %v682 = vld [vmem:[%s3 + $0x148] sm:$0xff]
  %v683 = vld [vmem:[%s3 + $0x150] sm:$0xff]
  %v684 = vld [vmem:[%s3 + $0x158] sm:$0xff]
  %v685 = vld [vmem:[%s3 + $0x160] sm:$0xff]
  %v686 = vld [vmem:[%s3 + $0x168] sm:$0xff]
  %v687 = vld [vmem:[%s3 + $0x170] sm:$0xff]
  %v688 = vld [vmem:[%s3 + $0x178] sm:$0xff]
  %v689 = vld [vmem:[%s3 + $0x180] sm:$0xff]
  %v690 = vld [vmem:[%s3 + $0x188] sm:$0xff]
  %v691 = vld [vmem:[%s3 + $0x190] sm:$0xff]
  %v692 = vld [vmem:[%s3 + $0x198] sm:$0xff]
  %v693 = vld [vmem:[%s3 + $0x1a0] sm:$0xff]
  %v694 = vld [vmem:[%s3 + $0x1a8] sm:$0xff]
  %v695 = vld [vmem:[%s3 + $0x1b0] sm:$0xff]
  %v696 = vld [vmem:[%s3 + $0x1b8] sm:$0xff]
  %v697 = vld [vmem:[%s3 + $0x1c0] sm:$0xff]
  %v698 = vld [vmem:[%s3 + $0x1c8] sm:$0xff]
  %v699 = vld [vmem:[%s3 + $0x1d0] sm:$0xff]
  %v700 = vld [vmem:[%s3 + $0x1d8] sm:$0xff]
  %v701 = vld [vmem:[%s3 + $0x1e0] sm:$0xff]
  %v702 = vld [vmem:[%s3 + $0x1e8] sm:$0xff]
  %v703 = vld [vmem:[%s3 + $0x1f0] sm:$0xff]
  %v704 = vld [vmem:[%s3 + $0x1f8] sm:$0xff]
  %705 = vmatprep.subr.mxu0 %v642
  %706 = vmatpush1.msra.mxu0 %v641
  %707 = vmatprep.subr.mxu0 %v646
  %708 = vmatpush1.msra.mxu0 %v645
  %709 = vmatprep.subr.mxu0 %v650
  %710 = vmatpush1.msra.mxu0 %v649
  %711 = vmatprep.subr.mxu0 %v654
  %712 = vmatpush1.msra.mxu0 %v653
  %713 = vmatprep.subr.mxu0 %v658
  %714 = vmatpush1.msra.mxu0 %v657
  %715 = vmatprep.subr.mxu0 %v662
  %716 = vmatpush1.msra.mxu0 %v661
  %717 = vmatprep.subr.mxu0 %v666
  %718 = vmatpush1.msra.mxu0 %v665
  %719 = vmatprep.subr.mxu0 %v670
  %720 = vmatpush1.msra.mxu0 %v669
  %721 = vmatprep.subr.mxu0 %v674
  %722 = vmatpush1.msra.mxu0 %v673
  %723 = vmatprep.subr.mxu0 %v678
  %724 = vmatpush1.msra.mxu0 %v677
  %725 = vmatprep.subr.mxu0 %v682
  %726 = vmatpush1.msra.mxu0 %v681
  %727 = vmatprep.subr.mxu0 %v686
  %728 = vmatpush1.msra.mxu0 %v685
  %729 = vmatprep.subr.mxu0 %v690
  %730 = vmatpush1.msra.mxu0 %v689
  %731 = vmatprep.subr.mxu0 %v694
  %732 = vmatpush1.msra.mxu0 %v693
  %733 = vmatprep.subr.mxu0 %v698
  %734 = vmatpush1.msra.mxu0 %v697
  %735 = vmatprep.subr.mxu0 %v702
  %736 = vmatpush1.msra.mxu0 %v701
  %737 = vmatprep.subr.mxu0 0.0
  %738 = vmatpush1.msra.mxu0 0.0
  %739 = vmatprep.subr.mxu0 0.0
  %740 = vmatpush1.msra.mxu0 0.0
  %741 = vmatprep.subr.mxu0 0.0
  %742 = vmatpush1.msra.mxu0 0.0
  %743 = vmatprep.subr.mxu0 0.0
  %744 = vmatpush1.msra.mxu0 0.0
  %745 = vmatprep.subr.mxu0 0.0
  %746 = vmatpush1.msra.mxu0 0.0
  %747 = vmatprep.subr.mxu0 0.0
  %748 = vmatpush1.msra.mxu0 0.0
  %749 = vmatprep.subr.mxu0 0.0
  %750 = vmatpush1.msra.mxu0 0.0
  %751 = vmatprep.subr.mxu0 0.0
  %752 = vmatpush1.msra.mxu0 0.0
  %753 = vmatprep.subr.mxu0 0.0
  %754 = vmatpush1.msra.mxu0 0.0
  %755 = vmatprep.subr.mxu0 0.0
  %756 = vmatpush1.msra.mxu0 0.0
  %757 = vmatprep.subr.mxu0 0.0
  %758 = vmatpush1.msra.mxu0 0.0
  %759 = vmatprep.subr.mxu0 0.0
  %760 = vmatpush1.msra.mxu0 0.0
  %761 = vmatprep.subr.mxu0 0.0
  %762 = vmatpush1.msra.mxu0 0.0
  %763 = vmatprep.subr.mxu0 0.0
  %764 = vmatpush1.msra.mxu0 0.0
  %765 = vmatprep.subr.mxu0 0.0
  %766 = vmatpush1.msra.mxu0 0.0
  %767 = vmatprep.subr.mxu0 0.0
  %768 = vmatpush1.msra.mxu0 0.0
  %769 = vmatprep.mubr.f32.mxu0 0.0
  %770 = vmatmul.mubr.f32.gmra.mrb[0].mxu0 %v336
  %v771 = vpop.f32.mrb[0].mxu0
  %v772 = vadd.f32 0.0, %v771
  %v773 = vpop.f32.mrb[0].mxu0
  %v774 = vadd.f32 0.0, %v773
  %775 = vdwg.mxu0
  %776 = vmatprep.subr.mxu0 %v644
  %777 = vmatpush1.msra.mxu0 %v643
  %778 = vmatprep.subr.mxu0 %v648
  %779 = vmatpush1.msra.mxu0 %v647
  %780 = vmatprep.subr.mxu0 %v652
  %781 = vmatpush1.msra.mxu0 %v651
  %782 = vmatprep.subr.mxu0 %v656
  %783 = vmatpush1.msra.mxu0 %v655
  %784 = vmatprep.subr.mxu0 %v660
  %785 = vmatpush1.msra.mxu0 %v659
  %786 = vmatprep.subr.mxu0 %v664
  %787 = vmatpush1.msra.mxu0 %v663
  %788 = vmatprep.subr.mxu0 %v668
  %789 = vmatpush1.msra.mxu0 %v667
  %790 = vmatprep.subr.mxu0 %v672
  %791 = vmatpush1.msra.mxu0 %v671
  %792 = vmatprep.subr.mxu0 %v676
  %793 = vmatpush1.msra.mxu0 %v675
  %794 = vmatprep.subr.mxu0 %v680
  %795 = vmatpush1.msra.mxu0 %v679
  %796 = vmatprep.subr.mxu0 %v684
  %797 = vmatpush1.msra.mxu0 %v683
  %798 = vmatprep.subr.mxu0 %v688
  %799 = vmatpush1.msra.mxu0 %v687
  %800 = vmatprep.subr.mxu0 %v692
  %801 = vmatpush1.msra.mxu0 %v691
  %802 = vmatprep.subr.mxu0 %v696
  %803 = vmatpush1.msra.mxu0 %v695
  %804 = vmatprep.subr.mxu0 %v700
  %805 = vmatpush1.msra.mxu0 %v699
  %806 = vmatprep.subr.mxu0 %v704
  %807 = vmatpush1.msra.mxu0 %v703
  %808 = vmatprep.subr.mxu0 0.0
  %809 = vmatpush1.msra.mxu0 0.0
  %810 = vmatprep.subr.mxu0 0.0
  %811 = vmatpush1.msra.mxu0 0.0
  %812 = vmatprep.subr.mxu0 0.0
  %813 = vmatpush1.msra.mxu0 0.0
  %814 = vmatprep.subr.mxu0 0.0
  %815 = vmatpush1.msra.mxu0 0.0
  %816 = vmatprep.subr.mxu0 0.0
  %817 = vmatpush1.msra.mxu0 0.0
  %818 = vmatprep.subr.mxu0 0.0
  %819 = vmatpush1.msra.mxu0 0.0
  %820 = vmatprep.subr.mxu0 0.0
  %821 = vmatpush1.msra.mxu0 0.0
  %822 = vmatprep.subr.mxu0 0.0
  %823 = vmatpush1.msra.mxu0 0.0
  %824 = vmatprep.subr.mxu0 0.0
  %825 = vmatpush1.msra.mxu0 0.0
  %826 = vmatprep.subr.mxu0 0.0
  %827 = vmatpush1.msra.mxu0 0.0
  %828 = vmatprep.subr.mxu0 0.0
  %829 = vmatpush1.msra.mxu0 0.0
  %830 = vmatprep.subr.mxu0 0.0
  %831 = vmatpush1.msra.mxu0 0.0
  %832 = vmatprep.subr.mxu0 0.0
  %833 = vmatpush1.msra.mxu0 0.0
  %834 = vmatprep.subr.mxu0 0.0
  %835 = vmatpush1.msra.mxu0 0.0
  %836 = vmatprep.subr.mxu0 0.0
  %837 = vmatpush1.msra.mxu0 0.0
  %838 = vmatprep.subr.mxu0 0.0
  %839 = vmatpush1.msra.mxu0 0.0
  %840 = vmatprep.mubr.f32.mxu0 0.0
  %841 = vmatmul.mubr.f32.gmra.mrb[0].mxu0 %v336
  %v842 = vpop.f32.mrb[0].mxu0
  %v843 = vadd.f32 0.0, %v842
  %v844 = vpop.f32.mrb[0].mxu0
  %v845 = vadd.f32 0.0, %v844
  %846 = vdwg.mxu0
  %v847 = vadd.f32 %v637, %v772
  %v848 = vadd.f32 %v638, %v774
  %v849 = vadd.f32 %v639, %v843
  %v850 = vadd.f32 %v640, %v845
  %v851 = vmul.f32 %v847, 0.5
  %v852 = vtanh.pop %v851
  %v853 = vadd.f32 %v852, 1.0
  %v854 = vmul.f32 %v853, 0.5
  %v855 = vmul.f32 %v848, 0.5
  %v856 = vtanh.pop %v855
  %v857 = vadd.f32 %v856, 1.0
  %v858 = vmul.f32 %v857, 0.5
  %v859 = vtanh.pop %v849
  %v860 = vmul.f32 %v850, 0.5
  %v861 = vtanh.pop %v860
  %v862 = vadd.f32 %v861, 1.0
  %v863 = vmul.f32 %v862, 0.5
  %v864 = vmul.f32 %v858, %v334
  %v865 = vmul.f32 %v854, %v859
  %v866 = vadd.f32 %v864, %v865
  %v867 = vtanh.pop %v866
  %v868 = vmul.f32 %v863, %v867
  %v869 = vld [vmem:[%s4] sm:$0xff]
  %v870 = vld [vmem:[%s4 + $0x8] sm:$0xff]
  %v871 = vld [vmem:[%s4 + $0x10] sm:$0xff]
  %v872 = vld [vmem:[%s4 + $0x18] sm:$0xff]
  %v873 = vld [vmem:[%s4 + $0x20] sm:$0xff]
  %v874 = vld [vmem:[%s4 + $0x28] sm:$0xff]
  %v875 = vld [vmem:[%s4 + $0x30] sm:$0xff]
  %v876 = vld [vmem:[%s4 + $0x38] sm:$0xff]
  %v877 = vld [vmem:[%s4 + $0x40] sm:$0xff]
  %v878 = vld [vmem:[%s4 + $0x48] sm:$0xff]
  %v879 = vld [vmem:[%s4 + $0x50] sm:$0xff]
  %v880 = vld [vmem:[%s4 + $0x58] sm:$0xff]
  %v881 = vld [vmem:[%s4 + $0x60] sm:$0xff]
  %v882 = vld [vmem:[%s4 + $0x68] sm:$0xff]
  %v883 = vld [vmem:[%s4 + $0x70] sm:$0xff]
  %v884 = vld [vmem:[%s4 + $0x78] sm:$0xff]
  %v885 = vld [vmem:[%s4 + $0x80] sm:$0xff]
  %v886 = vld [vmem:[%s4 + $0x88] sm:$0xff]
  %v887 = vld [vmem:[%s4 + $0x90] sm:$0xff]
  %v888 = vld [vmem:[%s4 + $0x98] sm:$0xff]
  %v889 = vld [vmem:[%s4 + $0xa0] sm:$0xff]
  %v890 = vld [vmem:[%s4 + $0xa8] sm:$0xff]
  %v891 = vld [vmem:[%s4 + $0xb0] sm:$0xff]
  %v892 = vld [vmem:[%s4 + $0xb8] sm:$0xff]
  %v893 = vld [vmem:[%s4 + $0xc0] sm:$0xff]
  %v894 = vld [vmem:[%s4 + $0xc8] sm:$0xff]
  %v895 = vld [vmem:[%s4 + $0xd0] sm:$0xff]
  %v896 = vld [vmem:[%s4 + $0xd8] sm:$0xff]
  %v897 = vld [vmem:[%s4 + $0xe0] sm:$0xff]
  %v898 = vld [vmem:[%s4 + $0xe8] sm:$0xff]
  %v899 = vld [vmem:[%s4 + $0xf0] sm:$0xff]
  %v900 = vld [vmem:[%s4 + $0xf8] sm:$0xff]
  %v901 = vld [vmem:[%s4 + $0x100] sm:$0xff]
  %v902 = vld [vmem:[%s4 + $0x108] sm:$0xff]
  %v903 = vld [vmem:[%s4 + $0x110] sm:$0xff]
  %v904 = vld [vmem:[%s4 + $0x118] sm:$0xff]
  %v905 = vld [vmem:[%s4 + $0x120] sm:$0xff]
  %v906 = vld [vmem:[%s4 + $0x128] sm:$0xff]
  %v907 = vld [vmem:[%s4 + $0x130] sm:$0xff]
  %v908 = vld [vmem:[%s4 + $0x138] sm:$0xff]
  %v909 = vld [vmem:[%s4 + $0x140] sm:$0xff]
  %v910 = vld [vmem:[%s4 + $0x148] sm:$0xff]
  %v911 = vld [vmem:[%s4 + $0x150] sm:$0xff]
  %v912 = vld [vmem:[%s4 + $0x158] sm:$0xff]
  %v913 = vld [vmem:[%s4 + $0x160] sm:$0xff]
  %v914 = vld [vmem:[%s4 + $0x168] sm:$0xff]
  %v915 = vld [vmem:[%s4 + $0x170] sm:$0xff]
  %v916 = vld [vmem:[%s4 + $0x178] sm:$0xff]
  %v917 = vld [vmem:[%s4 + $0x180] sm:$0xff]
  %v918 = vld [vmem:[%s4 + $0x188] sm:$0xff]
  %v919 = vld [vmem:[%s4 + $0x190] sm:$0xff]
  %v920 = vld [vmem:[%s4 + $0x198] sm:$0xff]
  %v921 = vld [vmem:[%s4 + $0x1a0] sm:$0xff]
  %v922 = vld [vmem:[%s4 + $0x1a8] sm:$0xff]
  %v923 = vld [vmem:[%s4 + $0x1b0] sm:$0xff]
  %v924 = vld [vmem:[%s4 + $0x1b8] sm:$0xff]
  %v925 = vld [vmem:[%s4 + $0x1c0] sm:$0xff]
  %v926 = vld [vmem:[%s4 + $0x1c8] sm:$0xff]
  %v927 = vld [vmem:[%s4 + $0x1d0] sm:$0xff]
  %v928 = vld [vmem:[%s4 + $0x1d8] sm:$0xff]
  %v929 = vld [vmem:[%s4 + $0x1e0] sm:$0xff]
  %v930 = vld [vmem:[%s4 + $0x1e8] sm:$0xff]
  %v931 = vld [vmem:[%s4 + $0x1f0] sm:$0xff]
  %v932 = vld [vmem:[%s4 + $0x1f8] sm:$0xff]
  %v933 = vld [vmem:[%s4 + $0x200] sm:$0xff]
  %v934 = vld [vmem:[%s4 + $0x208] sm:$0xff]
  %v935 = vld [vmem:[%s4 + $0x210] sm:$0xff]
  %v936 = vld [vmem:[%s4 + $0x218] sm:$0xff]
  %v937 = vld [vmem:[%s4 + $0x220] sm:$0xff]
  %v938 = vld [vmem:[%s4 + $0x228] sm:$0xff]
  %v939 = vld [vmem:[%s4 + $0x230] sm:$0xff]
  %v940 = vld [vmem:[%s4 + $0x238] sm:$0xff]
  %v941 = vld [vmem:[%s4 + $0x240] sm:$0xff]
  %v942 = vld [vmem:[%s4 + $0x248] sm:$0xff]
  %v943 = vld [vmem:[%s4 + $0x250] sm:$0xff]
  %v944 = vld [vmem:[%s4 + $0x258] sm:$0xff]
  %v945 = vld [vmem:[%s4 + $0x260] sm:$0xff]
  %v946 = vld [vmem:[%s4 + $0x268] sm:$0xff]
  %v947 = vld [vmem:[%s4 + $0x270] sm:$0xff]
  %v948 = vld [vmem:[%s4 + $0x278] sm:$0xff]
  %v949 = vld [vmem:[%s4 + $0x280] sm:$0xff]
  %v950 = vld [vmem:[%s4 + $0x288] sm:$0xff]
  %v951 = vld [vmem:[%s4 + $0x290] sm:$0xff]
  %v952 = vld [vmem:[%s4 + $0x298] sm:$0xff]
  %v953 = vld [vmem:[%s4 + $0x2a0] sm:$0xff]
  %v954 = vld [vmem:[%s4 + $0x2a8] sm:$0xff]
  %v955 = vld [vmem:[%s4 + $0x2b0] sm:$0xff]
  %v956 = vld [vmem:[%s4 + $0x2b8] sm:$0xff]
  %v957 = vld [vmem:[%s4 + $0x2c0] sm:$0xff]
  %v958 = vld [vmem:[%s4 + $0x2c8] sm:$0xff]
  %v959 = vld [vmem:[%s4 + $0x2d0] sm:$0xff]
  %v960 = vld [vmem:[%s4 + $0x2d8] sm:$0xff]
  %v961 = vld [vmem:[%s4 + $0x2e0] sm:$0xff]
  %v962 = vld [vmem:[%s4 + $0x2e8] sm:$0xff]
  %v963 = vld [vmem:[%s4 + $0x2f0] sm:$0xff]
  %v964 = vld [vmem:[%s4 + $0x2f8] sm:$0xff]
  %v965 = vld [vmem:[%s4 + $0x300] sm:$0xff]
  %v966 = vld [vmem:[%s4 + $0x308] sm:$0xff]
  %v967 = vld [vmem:[%s4 + $0x310] sm:$0xff]
  %v968 = vld [vmem:[%s4 + $0x318] sm:$0xff]
  %v969 = vld [vmem:[%s4 + $0x320] sm:$0xff]
  %v970 = vld [vmem:[%s4 + $0x328] sm:$0xff]
  %v971 = vld [vmem:[%s4 + $0x330] sm:$0xff]
  %v972 = vld [vmem:[%s4 + $0x338] sm:$0xff]
  %v973 = vld [vmem:[%s4 + $0x340] sm:$0xff]
  %v974 = vld [vmem:[%s4 + $0x348] sm:$0xff]
  %v975 = vld [vmem:[%s4 + $0x350] sm:$0xff]
  %v976 = vld [vmem:[%s4 + $0x358] sm:$0xff]
  %v977 = vld [vmem:[%s4 + $0x360] sm:$0xff]
  %v978 = vld [vmem:[%s4 + $0x368] sm:$0xff]
  %v979 = vld [vmem:[%s4 + $0x370] sm:$0xff]
  %v980 = vld [vmem:[%s4 + $0x378] sm:$0xff]
  %v981 = vld [vmem:[%s4 + $0x380] sm:$0xff]
  %v982 = vld [vmem:[%s4 + $0x388] sm:$0xff]
  %v983 = vld [vmem:[%s4 + $0x390] sm:$0xff]
  %v984 = vld [vmem:[%s4 + $0x398] sm:$0xff]
  %v985 = vld [vmem:[%s4 + $0x3a0] sm:$0xff]
  %v986 = vld [vmem:[%s4 + $0x3a8] sm:$0xff]
  %v987 = vld [vmem:[%s4 + $0x3b0] sm:$0xff]
  %v988 = vld [vmem:[%s4 + $0x3b8] sm:$0xff]
  %v989 = vld [vmem:[%s4 + $0x3c0] sm:$0xff]
  %v990 = vld [vmem:[%s4 + $0x3c8] sm:$0xff]
  %v991 = vld [vmem:[%s4 + $0x3d0] sm:$0xff]
  %v992 = vld [vmem:[%s4 + $0x3d8] sm:$0xff]
  %v993 = vld [vmem:[%s4 + $0x3e0] sm:$0xff]
  %v994 = vld [vmem:[%s4 + $0x3e8] sm:$0xff]
  %v995 = vld [vmem:[%s4 + $0x3f0] sm:$0xff]
  %v996 = vld [vmem:[%s4 + $0x3f8] sm:$0xff]
  %997 = vmatprep.subr.mxu0 %v870
  %998 = vmatpush1.msra.mxu0 %v869
  %999 = vmatprep.subr.mxu0 %v874
  %1000 = vmatpush1.msra.mxu0 %v873
  %1001 = vmatprep.subr.mxu0 %v878
  %1002 = vmatpush1.msra.mxu0 %v877
  %1003 = vmatprep.subr.mxu0 %v882
  %1004 = vmatpush1.msra.mxu0 %v881
  %1005 = vmatprep.subr.mxu0 %v886
  %1006 = vmatpush1.msra.mxu0 %v885
  %1007 = vmatprep.subr.mxu0 %v890
  %1008 = vmatpush1.msra.mxu0 %v889
  %1009 = vmatprep.subr.mxu0 %v894
  %1010 = vmatpush1.msra.mxu0 %v893
  %1011 = vmatprep.subr.mxu0 %v898
  %1012 = vmatpush1.msra.mxu0 %v897
  %1013 = vmatprep.subr.mxu0 %v902
  %1014 = vmatpush1.msra.mxu0 %v901
  %1015 = vmatprep.subr.mxu0 %v906
  %1016 = vmatpush1.msra.mxu0 %v905
  %1017 = vmatprep.subr.mxu0 %v910
  %1018 = vmatpush1.msra.mxu0 %v909
  %1019 = vmatprep.subr.mxu0 %v914
  %1020 = vmatpush1.msra.mxu0 %v913
  %1021 = vmatprep.subr.mxu0 %v918
  %1022 = vmatpush1.msra.mxu0 %v917
  %1023 = vmatprep.subr.mxu0 %v922
  %1024 = vmatpush1.msra.mxu0 %v921
  %1025 = vmatprep.subr.mxu0 %v926
  %1026 = vmatpush1.msra.mxu0 %v925
  %1027 = vmatprep.subr.mxu0 %v930
  %1028 = vmatpush1.msra.mxu0 %v929
  %1029 = vmatprep.subr.mxu0 %v934
  %1030 = vmatpush1.msra.mxu0 %v933
  %1031 = vmatprep.subr.mxu0 %v938
  %1032 = vmatpush1.msra.mxu0 %v937
  %1033 = vmatprep.subr.mxu0 %v942
  %1034 = vmatpush1.msra.mxu0 %v941
  %1035 = vmatprep.subr.mxu0 %v946
  %1036 = vmatpush1.msra.mxu0 %v945
  %1037 = vmatprep.subr.mxu0 %v950
  %1038 = vmatpush1.msra.mxu0 %v949
  %1039 = vmatprep.subr.mxu0 %v954
  %1040 = vmatpush1.msra.mxu0 %v953
  %1041 = vmatprep.subr.mxu0 %v958
  %1042 = vmatpush1.msra.mxu0 %v957
  %1043 = vmatprep.subr.mxu0 %v962
  %1044 = vmatpush1.msra.mxu0 %v961
  %1045 = vmatprep.subr.mxu0 %v966
  %1046 = vmatpush1.msra.mxu0 %v965
  %1047 = vmatprep.subr.mxu0 %v970
  %1048 = vmatpush1.msra.mxu0 %v969
  %1049 = vmatprep.subr.mxu0 %v974
  %1050 = vmatpush1.msra.mxu0 %v973
  %1051 = vmatprep.subr.mxu0 %v978
  %1052 = vmatpush1.msra.mxu0 %v977
  %1053 = vmatprep.subr.mxu0 %v982
  %1054 = vmatpush1.msra.mxu0 %v981
  %1055 = vmatprep.subr.mxu0 %v986
  %1056 = vmatpush1.msra.mxu0 %v985
  %1057 = vmatprep.subr.mxu0 %v990
  %1058 = vmatpush1.msra.mxu0 %v989
  %1059 = vmatprep.subr.mxu0 %v994
  %1060 = vmatpush1.msra.mxu0 %v993
  %1061 = vmatprep.mubr.f32.mxu0 %v624
  %1062 = vmatmul.mubr.f32.gmra.mrb[0].mxu0 %v868
  %v1063 = vpop.f32.mrb[0].mxu0
  %v1064 = vadd.f32 %v78, %v1063
  %v1065 = vpop.f32.mrb[0].mxu0
  %v1066 = vadd.f32 %v82, %v1065
  %1067 = vdwg.mxu0
  %1068 = vmatprep.subr.mxu0 %v872
  %1069 = vmatpush1.msra.mxu0 %v871
  %1070 = vmatprep.subr.mxu0 %v876
  %1071 = vmatpush1.msra.mxu0 %v875
  %1072 = vmatprep.subr.mxu0 %v880
  %1073 = vmatpush1.msra.mxu0 %v879
  %1074 = vmatprep.subr.mxu0 %v884
  %1075 = vmatpush1.msra.mxu0 %v883
  %1076 = vmatprep.subr.mxu0 %v888
  %1077 = vmatpush1.msra.mxu0 %v887
  %1078 = vmatprep.subr.mxu0 %v892
  %1079 = vmatpush1.msra.mxu0 %v891
  %1080 = vmatprep.subr.mxu0 %v896
  %1081 = vmatpush1.msra.mxu0 %v895
  %1082 = vmatprep.subr.mxu0 %v900
  %1083 = vmatpush1.msra.mxu0 %v899
  %1084 = vmatprep.subr.mxu0 %v904
  %1085 = vmatpush1.msra.mxu0 %v903
  %1086 = vmatprep.subr.mxu0 %v908
  %1087 = vmatpush1.msra.mxu0 %v907
  %1088 = vmatprep.subr.mxu0 %v912
  %1089 = vmatpush1.msra.mxu0 %v911
  %1090 = vmatprep.subr.mxu0 %v916
  %1091 = vmatpush1.msra.mxu0 %v915
  %1092 = vmatprep.subr.mxu0 %v920
  %1093 = vmatpush1.msra.mxu0 %v919
  %1094 = vmatprep.subr.mxu0 %v924
  %1095 = vmatpush1.msra.mxu0 %v923
  %1096 = vmatprep.subr.mxu0 %v928
  %1097 = vmatpush1.msra.mxu0 %v927
  %1098 = vmatprep.subr.mxu0 %v932
  %1099 = vmatpush1.msra.mxu0 %v931
  %1100 = vmatprep.subr.mxu0 %v936
  %1101 = vmatpush1.msra.mxu0 %v935
  %1102 = vmatprep.subr.mxu0 %v940
  %1103 = vmatpush1.msra.mxu0 %v939
  %1104 = vmatprep.subr.mxu0 %v944
  %1105 = vmatpush1.msra.mxu0 %v943
  %1106 = vmatprep.subr.mxu0 %v948
  %1107 = vmatpush1.msra.mxu0 %v947
  %1108 = vmatprep.subr.mxu0 %v952
  %1109 = vmatpush1.msra.mxu0 %v951
  %1110 = vmatprep.subr.mxu0 %v956
  %1111 = vmatpush1.msra.mxu0 %v955
  %1112 = vmatprep.subr.mxu0 %v960
  %1113 = vmatpush1.msra.mxu0 %v959
  %1114 = vmatprep.subr.mxu0 %v964
  %1115 = vmatpush1.msra.mxu0 %v963
  %1116 = vmatprep.subr.mxu0 %v968
  %1117 = vmatpush1.msra.mxu0 %v967
  %1118 = vmatprep.subr.mxu0 %v972
  %1119 = vmatpush1.msra.mxu0 %v971
  %1120 = vmatprep.subr.mxu0 %v976
  %1121 = vmatpush1.msra.mxu0 %v975
  %1122 = vmatprep.subr.mxu0 %v980
  %1123 = vmatpush1.msra.mxu0 %v979
  %1124 = vmatprep.subr.mxu0 %v984
  %1125 = vmatpush1.msra.mxu0 %v983
  %1126 = vmatprep.subr.mxu0 %v988
  %1127 = vmatpush1.msra.mxu0 %v987
  %1128 = vmatprep.subr.mxu0 %v992
  %1129 = vmatpush1.msra.mxu0 %v991
  %1130 = vmatprep.subr.mxu0 %v996
  %1131 = vmatpush1.msra.mxu0 %v995
  %1132 = vmatprep.mubr.f32.mxu0 %v624
  %1133 = vmatmul.mubr.f32.gmra.mrb[0].mxu0 %v868
  %v1134 = vpop.f32.mrb[0].mxu0
  %v1135 = vadd.f32 %v86, %v1134
  %v1136 = vpop.f32.mrb[0].mxu0
  %v1137 = vadd.f32 %v90, %v1136
  %1138 = vdwg.mxu0
  %v1139 = vmul.f32 %v1064, 0.5
  %v1140 = vtanh.pop %v1139
  %v1141 = vadd.f32 %v1140, 1.0
  %v1142 = vmul.f32 %v1141, 0.5
  %v1143 = vmul.f32 %v1066, 0.5
  %v1144 = vtanh.pop %v1143
  %v1145 = vadd.f32 %v1144, 1.0
  %v1146 = vmul.f32 %v1145, 0.5
  %v1147 = vtanh.pop %v1135
  %v1148 = vmul.f32 %v1137, 0.5
  %v1149 = vtanh.pop %v1148
  %v1150 = vadd.f32 %v1149, 1.0
  %v1151 = vmul.f32 %v1150, 0.5
  %v1152 = vmul.f32 %v1146, %v622
  %v1153 = vmul.f32 %v1142, %v1147
  %v1154 = vadd.f32 %v1152, %v1153
  %v1155 = vtanh.pop %v1154
  %v1156 = vmul.f32 %v1151, %v1155
  %s1157 = scalar_lea.vmem [#allocation2], 8
  %1158 = vst [vmem:[%s1157] sm:$0xff] %v1156
  %s1159 = scalar_lea.vmem %s0, 16
  %v1160 = vld [vmem:[%s1159] sm:$0xff]
  %1162 = vset.pattern.permute.xlu0 0
  %1163 = vperm.xlu0 %1162, %v1160
  %v1164 = vpop.permute.xlu0 %1163
  %v1166 = vmul.f32 %v1164, %v34
  %v1167 = vmul.f32 %v1164, %v38
  %v1168 = vmul.f32 %v1164, %v42
  %v1169 = vmul.f32 %v1164, %v46
  %v1170 = vadd.f32 %v1166, %v56
  %v1171 = vadd.f32 %v1167, %v60
  %v1172 = vadd.f32 %v1168, %v64
  %v1173 = vadd.f32 %v1169, %v68
  %v1174 = vld [vmem:[%s3] sm:$0xff]
  %v1175 = vld [vmem:[%s3 + $0x8] sm:$0xff]
  %v1176 = vld [vmem:[%s3 + $0x10] sm:$0xff]
  %v1177 = vld [vmem:[%s3 + $0x18] sm:$0xff]
  %v1178 = vld [vmem:[%s3 + $0x20] sm:$0xff]
  %v1179 = vld [vmem:[%s3 + $0x28] sm:$0xff]
  %v1180 = vld [vmem:[%s3 + $0x30] sm:$0xff]
  %v1181 = vld [vmem:[%s3 + $0x38] sm:$0xff]
  %v1182 = vld [vmem:[%s3 + $0x40] sm:$0xff]
  %v1183 = vld [vmem:[%s3 + $0x48] sm:$0xff]
  %v1184 = vld [vmem:[%s3 + $0x50] sm:$0xff]
  %v1185 = vld [vmem:[%s3 + $0x58] sm:$0xff]
  %v1186 = vld [vmem:[%s3 + $0x60] sm:$0xff]
  %v1187 = vld [vmem:[%s3 + $0x68] sm:$0xff]
  %v1188 = vld [vmem:[%s3 + $0x70] sm:$0xff]
  %v1189 = vld [vmem:[%s3 + $0x78] sm:$0xff]
  %v1190 = vld [vmem:[%s3 + $0x80] sm:$0xff]
  %v1191 = vld [vmem:[%s3 + $0x88] sm:$0xff]
  %v1192 = vld [vmem:[%s3 + $0x90] sm:$0xff]
  %v1193 = vld [vmem:[%s3 + $0x98] sm:$0xff]
  %v1194 = vld [vmem:[%s3 + $0xa0] sm:$0xff]
  %v1195 = vld [vmem:[%s3 + $0xa8] sm:$0xff]
  %v1196 = vld [vmem:[%s3 + $0xb0] sm:$0xff]
  %v1197 = vld [vmem:[%s3 + $0xb8] sm:$0xff]
  %v1198 = vld [vmem:[%s3 + $0xc0] sm:$0xff]
  %v1199 = vld [vmem:[%s3 + $0xc8] sm:$0xff]
  %v1200 = vld [vmem:[%s3 + $0xd0] sm:$0xff]
  %v1201 = vld [vmem:[%s3 + $0xd8] sm:$0xff]
  %v1202 = vld [vmem:[%s3 + $0xe0] sm:$0xff]
  %v1203 = vld [vmem:[%s3 + $0xe8] sm:$0xff]
  %v1204 = vld [vmem:[%s3 + $0xf0] sm:$0xff]
  %v1205 = vld [vmem:[%s3 + $0xf8] sm:$0xff]
  %v1206 = vld [vmem:[%s3 + $0x100] sm:$0xff]
  %v1207 = vld [vmem:[%s3 + $0x108] sm:$0xff]
  %v1208 = vld [vmem:[%s3 + $0x110] sm:$0xff]
  %v1209 = vld [vmem:[%s3 + $0x118] sm:$0xff]
  %v1210 = vld [vmem:[%s3 + $0x120] sm:$0xff]
  %v1211 = vld [vmem:[%s3 + $0x128] sm:$0xff]
  %v1212 = vld [vmem:[%s3 + $0x130] sm:$0xff]
  %v1213 = vld [vmem:[%s3 + $0x138] sm:$0xff]
  %v1214 = vld [vmem:[%s3 + $0x140] sm:$0xff]
  %v1215 = vld [vmem:[%s3 + $0x148] sm:$0xff]
  %v1216 = vld [vmem:[%s3 + $0x150] sm:$0xff]
  %v1217 = vld [vmem:[%s3 + $0x158] sm:$0xff]
  %v1218 = vld [vmem:[%s3 + $0x160] sm:$0xff]
  %v1219 = vld [vmem:[%s3 + $0x168] sm:$0xff]
  %v1220 = vld [vmem:[%s3 + $0x170] sm:$0xff]
  %v1221 = vld [vmem:[%s3 + $0x178] sm:$0xff]
  %v1222 = vld [vmem:[%s3 + $0x180] sm:$0xff]
  %v1223 = vld [vmem:[%s3 + $0x188] sm:$0xff]
  %v1224 = vld [vmem:[%s3 + $0x190] sm:$0xff]
  %v1225 = vld [vmem:[%s3 + $0x198] sm:$0xff]
  %v1226 = vld [vmem:[%s3 + $0x1a0] sm:$0xff]
  %v1227 = vld [vmem:[%s3 + $0x1a8] sm:$0xff]
  %v1228 = vld [vmem:[%s3 + $0x1b0] sm:$0xff]
  %v1229 = vld [vmem:[%s3 + $0x1b8] sm:$0xff]
  %v1230 = vld [vmem:[%s3 + $0x1c0] sm:$0xff]
  %v1231 = vld [vmem:[%s3 + $0x1c8] sm:$0xff]
  %v1232 = vld [vmem:[%s3 + $0x1d0] sm:$0xff]
  %v1233 = vld [vmem:[%s3 + $0x1d8] sm:$0xff]
  %v1234 = vld [vmem:[%s3 + $0x1e0] sm:$0xff]
  %v1235 = vld [vmem:[%s3 + $0x1e8] sm:$0xff]
  %v1236 = vld [vmem:[%s3 + $0x1f0] sm:$0xff]
  %v1237 = vld [vmem:[%s3 + $0x1f8] sm:$0xff]
  %1238 = vmatprep.subr.mxu0 %v1175
  %1239 = vmatpush1.msra.mxu0 %v1174
  %1240 = vmatprep.subr.mxu0 %v1179
  %1241 = vmatpush1.msra.mxu0 %v1178
  %1242 = vmatprep.subr.mxu0 %v1183
  %1243 = vmatpush1.msra.mxu0 %v1182
  %1244 = vmatprep.subr.mxu0 %v1187
  %1245 = vmatpush1.msra.mxu0 %v1186
  %1246 = vmatprep.subr.mxu0 %v1191
  %1247 = vmatpush1.msra.mxu0 %v1190
  %1248 = vmatprep.subr.mxu0 %v1195
  %1249 = vmatpush1.msra.mxu0 %v1194
  %1250 = vmatprep.subr.mxu0 %v1199
  %1251 = vmatpush1.msra.mxu0 %v1198
  %1252 = vmatprep.subr.mxu0 %v1203
  %1253 = vmatpush1.msra.mxu0 %v1202
  %1254 = vmatprep.subr.mxu0 %v1207
  %1255 = vmatpush1.msra.mxu0 %v1206
  %1256 = vmatprep.subr.mxu0 %v1211
  %1257 = vmatpush1.msra.mxu0 %v1210
  %1258 = vmatprep.subr.mxu0 %v1215
  %1259 = vmatpush1.msra.mxu0 %v1214
  %1260 = vmatprep.subr.mxu0 %v1219
  %1261 = vmatpush1.msra.mxu0 %v1218
  %1262 = vmatprep.subr.mxu0 %v1223
  %1263 = vmatpush1.msra.mxu0 %v1222
  %1264 = vmatprep.subr.mxu0 %v1227
  %1265 = vmatpush1.msra.mxu0 %v1226
  %1266 = vmatprep.subr.mxu0 %v1231
  %1267 = vmatpush1.msra.mxu0 %v1230
  %1268 = vmatprep.subr.mxu0 %v1235
  %1269 = vmatpush1.msra.mxu0 %v1234
  %1270 = vmatprep.subr.mxu0 0.0
  %1271 = vmatpush1.msra.mxu0 0.0
  %1272 = vmatprep.subr.mxu0 0.0
  %1273 = vmatpush1.msra.mxu0 0.0
  %1274 = vmatprep.subr.mxu0 0.0
  %1275 = vmatpush1.msra.mxu0 0.0
  %1276 = vmatprep.subr.mxu0 0.0
  %1277 = vmatpush1.msra.mxu0 0.0
  %1278 = vmatprep.subr.mxu0 0.0
  %1279 = vmatpush1.msra.mxu0 0.0
  %1280 = vmatprep.subr.mxu0 0.0
  %1281 = vmatpush1.msra.mxu0 0.0
  %1282 = vmatprep.subr.mxu0 0.0
  %1283 = vmatpush1.msra.mxu0 0.0
  %1284 = vmatprep.subr.mxu0 0.0
  %1285 = vmatpush1.msra.mxu0 0.0
  %1286 = vmatprep.subr.mxu0 0.0
  %1287 = vmatpush1.msra.mxu0 0.0
  %1288 = vmatprep.subr.mxu0 0.0
  %1289 = vmatpush1.msra.mxu0 0.0
  %1290 = vmatprep.subr.mxu0 0.0
  %1291 = vmatpush1.msra.mxu0 0.0
  %1292 = vmatprep.subr.mxu0 0.0
  %1293 = vmatpush1.msra.mxu0 0.0
  %1294 = vmatprep.subr.mxu0 0.0
  %1295 = vmatpush1.msra.mxu0 0.0
  %1296 = vmatprep.subr.mxu0 0.0
  %1297 = vmatpush1.msra.mxu0 0.0
  %1298 = vmatprep.subr.mxu0 0.0
  %1299 = vmatpush1.msra.mxu0 0.0
  %1300 = vmatprep.subr.mxu0 0.0
  %1301 = vmatpush1.msra.mxu0 0.0
  %1302 = vmatprep.mubr.f32.mxu0 0.0
  %1303 = vmatmul.mubr.f32.gmra.mrb[0].mxu0 %v868
  %v1304 = vpop.f32.mrb[0].mxu0
  %v1305 = vadd.f32 0.0, %v1304
  %v1306 = vpop.f32.mrb[0].mxu0
  %v1307 = vadd.f32 0.0, %v1306
  %1308 = vdwg.mxu0
  %1309 = vmatprep.subr.mxu0 %v1177
  %1310 = vmatpush1.msra.mxu0 %v1176
  %1311 = vmatprep.subr.mxu0 %v1181
  %1312 = vmatpush1.msra.mxu0 %v1180
  %1313 = vmatprep.subr.mxu0 %v1185
  %1314 = vmatpush1.msra.mxu0 %v1184
  %1315 = vmatprep.subr.mxu0 %v1189
  %1316 = vmatpush1.msra.mxu0 %v1188
  %1317 = vmatprep.subr.mxu0 %v1193
  %1318 = vmatpush1.msra.mxu0 %v1192
  %1319 = vmatprep.subr.mxu0 %v1197
  %1320 = vmatpush1.msra.mxu0 %v1196
  %1321 = vmatprep.subr.mxu0 %v1201
  %1322 = vmatpush1.msra.mxu0 %v1200
  %1323 = vmatprep.subr.mxu0 %v1205
  %1324 = vmatpush1.msra.mxu0 %v1204
  %1325 = vmatprep.subr.mxu0 %v1209
  %1326 = vmatpush1.msra.mxu0 %v1208
  %1327 = vmatprep.subr.mxu0 %v1213
  %1328 = vmatpush1.msra.mxu0 %v1212
  %1329 = vmatprep.subr.mxu0 %v1217
  %1330 = vmatpush1.msra.mxu0 %v1216
  %1331 = vmatprep.subr.mxu0 %v1221
  %1332 = vmatpush1.msra.mxu0 %v1220
  %1333 = vmatprep.subr.mxu0 %v1225
  %1334 = vmatpush1.msra.mxu0 %v1224
  %1335 = vmatprep.subr.mxu0 %v1229
  %1336 = vmatpush1.msra.mxu0 %v1228
  %1337 = vmatprep.subr.mxu0 %v1233
  %1338 = vmatpush1.msra.mxu0 %v1232
  %1339 = vmatprep.subr.mxu0 %v1237
  %1340 = vmatpush1.msra.mxu0 %v1236
  %1341 = vmatprep.subr.mxu0 0.0
  %1342 = vmatpush1.msra.mxu0 0.0
  %1343 = vmatprep.subr.mxu0 0.0
  %1344 = vmatpush1.msra.mxu0 0.0
  %1345 = vmatprep.subr.mxu0 0.0
  %1346 = vmatpush1.msra.mxu0 0.0
  %1347 = vmatprep.subr.mxu0 0.0
  %1348 = vmatpush1.msra.mxu0 0.0
  %1349 = vmatprep.subr.mxu0 0.0
  %1350 = vmatpush1.msra.mxu0 0.0
  %1351 = vmatprep.subr.mxu0 0.0
  %1352 = vmatpush1.msra.mxu0 0.0
  %1353 = vmatprep.subr.mxu0 0.0
  %1354 = vmatpush1.msra.mxu0 0.0
  %1355 = vmatprep.subr.mxu0 0.0
  %1356 = vmatpush1.msra.mxu0 0.0
  %1357 = vmatprep.subr.mxu0 0.0
  %1358 = vmatpush1.msra.mxu0 0.0
  %1359 = vmatprep.subr.mxu0 0.0
  %1360 = vmatpush1.msra.mxu0 0.0
  %1361 = vmatprep.subr.mxu0 0.0
  %1362 = vmatpush1.msra.mxu0 0.0
  %1363 = vmatprep.subr.mxu0 0.0
  %1364 = vmatpush1.msra.mxu0 0.0
  %1365 = vmatprep.subr.mxu0 0.0
  %1366 = vmatpush1.msra.mxu0 0.0
  %1367 = vmatprep.subr.mxu0 0.0
  %1368 = vmatpush1.msra.mxu0 0.0
  %1369 = vmatprep.subr.mxu0 0.0
  %1370 = vmatpush1.msra.mxu0 0.0
  %1371 = vmatprep.subr.mxu0 0.0
  %1372 = vmatpush1.msra.mxu0 0.0
  %1373 = vmatprep.mubr.f32.mxu0 0.0
  %1374 = vmatmul.mubr.f32.gmra.mrb[0].mxu0 %v868
  %v1375 = vpop.f32.mrb[0].mxu0
  %v1376 = vadd.f32 0.0, %v1375
  %v1377 = vpop.f32.mrb[0].mxu0
  %v1378 = vadd.f32 0.0, %v1377
  %1379 = vdwg.mxu0
  %v1380 = vadd.f32 %v1170, %v1305
  %v1381 = vadd.f32 %v1171, %v1307
  %v1382 = vadd.f32 %v1172, %v1376
  %v1383 = vadd.f32 %v1173, %v1378
  %v1384 = vmul.f32 %v1380, 0.5
  %v1385 = vtanh.pop %v1384
  %v1386 = vadd.f32 %v1385, 1.0
  %v1387 = vmul.f32 %v1386, 0.5
  %v1388 = vmul.f32 %v1381, 0.5
  %v1389 = vtanh.pop %v1388
  %v1390 = vadd.f32 %v1389, 1.0
  %v1391 = vmul.f32 %v1390, 0.5
  %v1392 = vtanh.pop %v1382
  %v1393 = vmul.f32 %v1383, 0.5
  %v1394 = vtanh.pop %v1393
  %v1395 = vadd.f32 %v1394, 1.0
  %v1396 = vmul.f32 %v1395, 0.5
  %v1397 = vmul.f32 %v1391, %v866
  %v1398 = vmul.f32 %v1387, %v1392
  %v1399 = vadd.f32 %v1397, %v1398
  %v1400 = vtanh.pop %v1399
  %v1401 = vmul.f32 %v1396, %v1400
  %v1402 = vld [vmem:[%s4] sm:$0xff]
  %v1403 = vld [vmem:[%s4 + $0x8] sm:$0xff]
  %v1404 = vld [vmem:[%s4 + $0x10] sm:$0xff]
  %v1405 = vld [vmem:[%s4 + $0x18] sm:$0xff]
  %v1406 = vld [vmem:[%s4 + $0x20] sm:$0xff]
  %v1407 = vld [vmem:[%s4 + $0x28] sm:$0xff]
  %v1408 = vld [vmem:[%s4 + $0x30] sm:$0xff]
  %v1409 = vld [vmem:[%s4 + $0x38] sm:$0xff]
  %v1410 = vld [vmem:[%s4 + $0x40] sm:$0xff]
  %v1411 = vld [vmem:[%s4 + $0x48] sm:$0xff]
  %v1412 = vld [vmem:[%s4 + $0x50] sm:$0xff]
  %v1413 = vld [vmem:[%s4 + $0x58] sm:$0xff]
  %v1414 = vld [vmem:[%s4 + $0x60] sm:$0xff]
  %v1415 = vld [vmem:[%s4 + $0x68] sm:$0xff]
  %v1416 = vld [vmem:[%s4 + $0x70] sm:$0xff]
  %v1417 = vld [vmem:[%s4 + $0x78] sm:$0xff]
  %v1418 = vld [vmem:[%s4 + $0x80] sm:$0xff]
  %v1419 = vld [vmem:[%s4 + $0x88] sm:$0xff]
  %v1420 = vld [vmem:[%s4 + $0x90] sm:$0xff]
  %v1421 = vld [vmem:[%s4 + $0x98] sm:$0xff]
  %v1422 = vld [vmem:[%s4 + $0xa0] sm:$0xff]
  %v1423 = vld [vmem:[%s4 + $0xa8] sm:$0xff]
  %v1424 = vld [vmem:[%s4 + $0xb0] sm:$0xff]
  %v1425 = vld [vmem:[%s4 + $0xb8] sm:$0xff]
  %v1426 = vld [vmem:[%s4 + $0xc0] sm:$0xff]
  %v1427 = vld [vmem:[%s4 + $0xc8] sm:$0xff]
  %v1428 = vld [vmem:[%s4 + $0xd0] sm:$0xff]
  %v1429 = vld [vmem:[%s4 + $0xd8] sm:$0xff]
  %v1430 = vld [vmem:[%s4 + $0xe0] sm:$0xff]
  %v1431 = vld [vmem:[%s4 + $0xe8] sm:$0xff]
  %v1432 = vld [vmem:[%s4 + $0xf0] sm:$0xff]
  %v1433 = vld [vmem:[%s4 + $0xf8] sm:$0xff]
  %v1434 = vld [vmem:[%s4 + $0x100] sm:$0xff]
  %v1435 = vld [vmem:[%s4 + $0x108] sm:$0xff]
  %v1436 = vld [vmem:[%s4 + $0x110] sm:$0xff]
  %v1437 = vld [vmem:[%s4 + $0x118] sm:$0xff]
  %v1438 = vld [vmem:[%s4 + $0x120] sm:$0xff]
  %v1439 = vld [vmem:[%s4 + $0x128] sm:$0xff]
  %v1440 = vld [vmem:[%s4 + $0x130] sm:$0xff]
  %v1441 = vld [vmem:[%s4 + $0x138] sm:$0xff]
  %v1442 = vld [vmem:[%s4 + $0x140] sm:$0xff]
  %v1443 = vld [vmem:[%s4 + $0x148] sm:$0xff]
  %v1444 = vld [vmem:[%s4 + $0x150] sm:$0xff]
  %v1445 = vld [vmem:[%s4 + $0x158] sm:$0xff]
  %v1446 = vld [vmem:[%s4 + $0x160] sm:$0xff]
  %v1447 = vld [vmem:[%s4 + $0x168] sm:$0xff]
  %v1448 = vld [vmem:[%s4 + $0x170] sm:$0xff]
  %v1449 = vld [vmem:[%s4 + $0x178] sm:$0xff]
  %v1450 = vld [vmem:[%s4 + $0x180] sm:$0xff]
  %v1451 = vld [vmem:[%s4 + $0x188] sm:$0xff]
  %v1452 = vld [vmem:[%s4 + $0x190] sm:$0xff]
  %v1453 = vld [vmem:[%s4 + $0x198] sm:$0xff]
  %v1454 = vld [vmem:[%s4 + $0x1a0] sm:$0xff]
  %v1455 = vld [vmem:[%s4 + $0x1a8] sm:$0xff]
  %v1456 = vld [vmem:[%s4 + $0x1b0] sm:$0xff]
  %v1457 = vld [vmem:[%s4 + $0x1b8] sm:$0xff]
  %v1458 = vld [vmem:[%s4 + $0x1c0] sm:$0xff]
  %v1459 = vld [vmem:[%s4 + $0x1c8] sm:$0xff]
  %v1460 = vld [vmem:[%s4 + $0x1d0] sm:$0xff]
  %v1461 = vld [vmem:[%s4 + $0x1d8] sm:$0xff]
  %v1462 = vld [vmem:[%s4 + $0x1e0] sm:$0xff]
  %v1463 = vld [vmem:[%s4 + $0x1e8] sm:$0xff]
  %v1464 = vld [vmem:[%s4 + $0x1f0] sm:$0xff]
  %v1465 = vld [vmem:[%s4 + $0x1f8] sm:$0xff]
  %v1466 = vld [vmem:[%s4 + $0x200] sm:$0xff]
  %v1467 = vld [vmem:[%s4 + $0x208] sm:$0xff]
  %v1468 = vld [vmem:[%s4 + $0x210] sm:$0xff]
  %v1469 = vld [vmem:[%s4 + $0x218] sm:$0xff]
  %v1470 = vld [vmem:[%s4 + $0x220] sm:$0xff]
  %v1471 = vld [vmem:[%s4 + $0x228] sm:$0xff]
  %v1472 = vld [vmem:[%s4 + $0x230] sm:$0xff]
  %v1473 = vld [vmem:[%s4 + $0x238] sm:$0xff]
  %v1474 = vld [vmem:[%s4 + $0x240] sm:$0xff]
  %v1475 = vld [vmem:[%s4 + $0x248] sm:$0xff]
  %v1476 = vld [vmem:[%s4 + $0x250] sm:$0xff]
  %v1477 = vld [vmem:[%s4 + $0x258] sm:$0xff]
  %v1478 = vld [vmem:[%s4 + $0x260] sm:$0xff]
  %v1479 = vld [vmem:[%s4 + $0x268] sm:$0xff]
  %v1480 = vld [vmem:[%s4 + $0x270] sm:$0xff]
  %v1481 = vld [vmem:[%s4 + $0x278] sm:$0xff]
  %v1482 = vld [vmem:[%s4 + $0x280] sm:$0xff]
  %v1483 = vld [vmem:[%s4 + $0x288] sm:$0xff]
  %v1484 = vld [vmem:[%s4 + $0x290] sm:$0xff]
  %v1485 = vld [vmem:[%s4 + $0x298] sm:$0xff]
  %v1486 = vld [vmem:[%s4 + $0x2a0] sm:$0xff]
  %v1487 = vld [vmem:[%s4 + $0x2a8] sm:$0xff]
  %v1488 = vld [vmem:[%s4 + $0x2b0] sm:$0xff]
  %v1489 = vld [vmem:[%s4 + $0x2b8] sm:$0xff]
  %v1490 = vld [vmem:[%s4 + $0x2c0] sm:$0xff]
  %v1491 = vld [vmem:[%s4 + $0x2c8] sm:$0xff]
  %v1492 = vld [vmem:[%s4 + $0x2d0] sm:$0xff]
  %v1493 = vld [vmem:[%s4 + $0x2d8] sm:$0xff]
  %v1494 = vld [vmem:[%s4 + $0x2e0] sm:$0xff]
  %v1495 = vld [vmem:[%s4 + $0x2e8] sm:$0xff]
  %v1496 = vld [vmem:[%s4 + $0x2f0] sm:$0xff]
  %v1497 = vld [vmem:[%s4 + $0x2f8] sm:$0xff]
  %v1498 = vld [vmem:[%s4 + $0x300] sm:$0xff]
  %v1499 = vld [vmem:[%s4 + $0x308] sm:$0xff]
  %v1500 = vld [vmem:[%s4 + $0x310] sm:$0xff]
  %v1501 = vld [vmem:[%s4 + $0x318] sm:$0xff]
  %v1502 = vld [vmem:[%s4 + $0x320] sm:$0xff]
  %v1503 = vld [vmem:[%s4 + $0x328] sm:$0xff]
  %v1504 = vld [vmem:[%s4 + $0x330] sm:$0xff]
  %v1505 = vld [vmem:[%s4 + $0x338] sm:$0xff]
  %v1506 = vld [vmem:[%s4 + $0x340] sm:$0xff]
  %v1507 = vld [vmem:[%s4 + $0x348] sm:$0xff]
  %v1508 = vld [vmem:[%s4 + $0x350] sm:$0xff]
  %v1509 = vld [vmem:[%s4 + $0x358] sm:$0xff]
  %v1510 = vld [vmem:[%s4 + $0x360] sm:$0xff]
  %v1511 = vld [vmem:[%s4 + $0x368] sm:$0xff]
  %v1512 = vld [vmem:[%s4 + $0x370] sm:$0xff]
  %v1513 = vld [vmem:[%s4 + $0x378] sm:$0xff]
  %v1514 = vld [vmem:[%s4 + $0x380] sm:$0xff]
  %v1515 = vld [vmem:[%s4 + $0x388] sm:$0xff]
  %v1516 = vld [vmem:[%s4 + $0x390] sm:$0xff]
  %v1517 = vld [vmem:[%s4 + $0x398] sm:$0xff]
  %v1518 = vld [vmem:[%s4 + $0x3a0] sm:$0xff]
  %v1519 = vld [vmem:[%s4 + $0x3a8] sm:$0xff]
  %v1520 = vld [vmem:[%s4 + $0x3b0] sm:$0xff]
  %v1521 = vld [vmem:[%s4 + $0x3b8] sm:$0xff]
  %v1522 = vld [vmem:[%s4 + $0x3c0] sm:$0xff]
  %v1523 = vld [vmem:[%s4 + $0x3c8] sm:$0xff]
  %v1524 = vld [vmem:[%s4 + $0x3d0] sm:$0xff]
  %v1525 = vld [vmem:[%s4 + $0x3d8] sm:$0xff]
  %v1526 = vld [vmem:[%s4 + $0x3e0] sm:$0xff]
  %v1527 = vld [vmem:[%s4 + $0x3e8] sm:$0xff]
  %v1528 = vld [vmem:[%s4 + $0x3f0] sm:$0xff]
  %v1529 = vld [vmem:[%s4 + $0x3f8] sm:$0xff]
  %1530 = vmatprep.subr.mxu0 %v1403
  %1531 = vmatpush1.msra.mxu0 %v1402
  %1532 = vmatprep.subr.mxu0 %v1407
  %1533 = vmatpush1.msra.mxu0 %v1406
  %1534 = vmatprep.subr.mxu0 %v1411
  %1535 = vmatpush1.msra.mxu0 %v1410
  %1536 = vmatprep.subr.mxu0 %v1415
  %1537 = vmatpush1.msra.mxu0 %v1414
  %1538 = vmatprep.subr.mxu0 %v1419
  %1539 = vmatpush1.msra.mxu0 %v1418
  %1540 = vmatprep.subr.mxu0 %v1423
  %1541 = vmatpush1.msra.mxu0 %v1422
  %1542 = vmatprep.subr.mxu0 %v1427
  %1543 = vmatpush1.msra.mxu0 %v1426
  %1544 = vmatprep.subr.mxu0 %v1431
  %1545 = vmatpush1.msra.mxu0 %v1430
  %1546 = vmatprep.subr.mxu0 %v1435
  %1547 = vmatpush1.msra.mxu0 %v1434
  %1548 = vmatprep.subr.mxu0 %v1439
  %1549 = vmatpush1.msra.mxu0 %v1438
  %1550 = vmatprep.subr.mxu0 %v1443
  %1551 = vmatpush1.msra.mxu0 %v1442
  %1552 = vmatprep.subr.mxu0 %v1447
  %1553 = vmatpush1.msra.mxu0 %v1446
  %1554 = vmatprep.subr.mxu0 %v1451
  %1555 = vmatpush1.msra.mxu0 %v1450
  %1556 = vmatprep.subr.mxu0 %v1455
  %1557 = vmatpush1.msra.mxu0 %v1454
  %1558 = vmatprep.subr.mxu0 %v1459
  %1559 = vmatpush1.msra.mxu0 %v1458
  %1560 = vmatprep.subr.mxu0 %v1463
  %1561 = vmatpush1.msra.mxu0 %v1462
  %1562 = vmatprep.subr.mxu0 %v1467
  %1563 = vmatpush1.msra.mxu0 %v1466
  %1564 = vmatprep.subr.mxu0 %v1471
  %1565 = vmatpush1.msra.mxu0 %v1470
  %1566 = vmatprep.subr.mxu0 %v1475
  %1567 = vmatpush1.msra.mxu0 %v1474
  %1568 = vmatprep.subr.mxu0 %v1479
  %1569 = vmatpush1.msra.mxu0 %v1478
  %1570 = vmatprep.subr.mxu0 %v1483
  %1571 = vmatpush1.msra.mxu0 %v1482
  %1572 = vmatprep.subr.mxu0 %v1487
  %1573 = vmatpush1.msra.mxu0 %v1486
  %1574 = vmatprep.subr.mxu0 %v1491
  %1575 = vmatpush1.msra.mxu0 %v1490
  %1576 = vmatprep.subr.mxu0 %v1495
  %1577 = vmatpush1.msra.mxu0 %v1494
  %1578 = vmatprep.subr.mxu0 %v1499
  %1579 = vmatpush1.msra.mxu0 %v1498
  %1580 = vmatprep.subr.mxu0 %v1503
  %1581 = vmatpush1.msra.mxu0 %v1502
  %1582 = vmatprep.subr.mxu0 %v1507
  %1583 = vmatpush1.msra.mxu0 %v1506
  %1584 = vmatprep.subr.mxu0 %v1511
  %1585 = vmatpush1.msra.mxu0 %v1510
  %1586 = vmatprep.subr.mxu0 %v1515
  %1587 = vmatpush1.msra.mxu0 %v1514
  %1588 = vmatprep.subr.mxu0 %v1519
  %1589 = vmatpush1.msra.mxu0 %v1518
  %1590 = vmatprep.subr.mxu0 %v1523
  %1591 = vmatpush1.msra.mxu0 %v1522
  %1592 = vmatprep.subr.mxu0 %v1527
  %1593 = vmatpush1.msra.mxu0 %v1526
  %1594 = vmatprep.mubr.f32.mxu0 %v1156
  %1595 = vmatmul.mubr.f32.gmra.mrb[0].mxu0 %v1401
  %v1596 = vpop.f32.mrb[0].mxu0
  %v1597 = vadd.f32 %v78, %v1596
  %v1598 = vpop.f32.mrb[0].mxu0
  %v1599 = vadd.f32 %v82, %v1598
  %1600 = vdwg.mxu0
  %1601 = vmatprep.subr.mxu0 %v1405
  %1602 = vmatpush1.msra.mxu0 %v1404
  %1603 = vmatprep.subr.mxu0 %v1409
  %1604 = vmatpush1.msra.mxu0 %v1408
  %1605 = vmatprep.subr.mxu0 %v1413
  %1606 = vmatpush1.msra.mxu0 %v1412
  %1607 = vmatprep.subr.mxu0 %v1417
  %1608 = vmatpush1.msra.mxu0 %v1416
  %1609 = vmatprep.subr.mxu0 %v1421
  %1610 = vmatpush1.msra.mxu0 %v1420
  %1611 = vmatprep.subr.mxu0 %v1425
  %1612 = vmatpush1.msra.mxu0 %v1424
  %1613 = vmatprep.subr.mxu0 %v1429
  %1614 = vmatpush1.msra.mxu0 %v1428
  %1615 = vmatprep.subr.mxu0 %v1433
  %1616 = vmatpush1.msra.mxu0 %v1432
  %1617 = vmatprep.subr.mxu0 %v1437
  %1618 = vmatpush1.msra.mxu0 %v1436
  %1619 = vmatprep.subr.mxu0 %v1441
  %1620 = vmatpush1.msra.mxu0 %v1440
  %1621 = vmatprep.subr.mxu0 %v1445
  %1622 = vmatpush1.msra.mxu0 %v1444
  %1623 = vmatprep.subr.mxu0 %v1449
  %1624 = vmatpush1.msra.mxu0 %v1448
  %1625 = vmatprep.subr.mxu0 %v1453
  %1626 = vmatpush1.msra.mxu0 %v1452
  %1627 = vmatprep.subr.mxu0 %v1457
  %1628 = vmatpush1.msra.mxu0 %v1456
  %1629 = vmatprep.subr.mxu0 %v1461
  %1630 = vmatpush1.msra.mxu0 %v1460
  %1631 = vmatprep.subr.mxu0 %v1465
  %1632 = vmatpush1.msra.mxu0 %v1464
  %1633 = vmatprep.subr.mxu0 %v1469
  %1634 = vmatpush1.msra.mxu0 %v1468
  %1635 = vmatprep.subr.mxu0 %v1473
  %1636 = vmatpush1.msra.mxu0 %v1472
  %1637 = vmatprep.subr.mxu0 %v1477
  %1638 = vmatpush1.msra.mxu0 %v1476
  %1639 = vmatprep.subr.mxu0 %v1481
  %1640 = vmatpush1.msra.mxu0 %v1480
  %1641 = vmatprep.subr.mxu0 %v1485
  %1642 = vmatpush1.msra.mxu0 %v1484
  %1643 = vmatprep.subr.mxu0 %v1489
  %1644 = vmatpush1.msra.mxu0 %v1488
  %1645 = vmatprep.subr.mxu0 %v1493
  %1646 = vmatpush1.msra.mxu0 %v1492
  %1647 = vmatprep.subr.mxu0 %v1497
  %1648 = vmatpush1.msra.mxu0 %v1496
  %1649 = vmatprep.subr.mxu0 %v1501
  %1650 = vmatpush1.msra.mxu0 %v1500
  %1651 = vmatprep.subr.mxu0 %v1505
  %1652 = vmatpush1.msra.mxu0 %v1504
  %1653 = vmatprep.subr.mxu0 %v1509
  %1654 = vmatpush1.msra.mxu0 %v1508
  %1655 = vmatprep.subr.mxu0 %v1513
  %1656 = vmatpush1.msra.mxu0 %v1512
  %1657 = vmatprep.subr.mxu0 %v1517
  %1658 = vmatpush1.msra.mxu0 %v1516
  %1659 = vmatprep.subr.mxu0 %v1521
  %1660 = vmatpush1.msra.mxu0 %v1520
  %1661 = vmatprep.subr.mxu0 %v1525
  %1662 = vmatpush1.msra.mxu0 %v1524
  %1663 = vmatprep.subr.mxu0 %v1529
  %1664 = vmatpush1.msra.mxu0 %v1528
  %1665 = vmatprep.mubr.f32.mxu0 %v1156
  %1666 = vmatmul.mubr.f32.gmra.mrb[0].mxu0 %v1401
  %v1667 = vpop.f32.mrb[0].mxu0
  %v1668 = vadd.f32 %v86, %v1667
  %v1669 = vpop.f32.mrb[0].mxu0
  %v1670 = vadd.f32 %v90, %v1669
  %1671 = vdwg.mxu0
  %v1672 = vmul.f32 %v1597, 0.5
  %v1673 = vtanh.pop %v1672
  %v1674 = vadd.f32 %v1673, 1.0
  %v1675 = vmul.f32 %v1674, 0.5
  %v1676 = vmul.f32 %v1599, 0.5
  %v1677 = vtanh.pop %v1676
  %v1678 = vadd.f32 %v1677, 1.0
  %v1679 = vmul.f32 %v1678, 0.5
  %v1680 = vtanh.pop %v1668
  %v1681 = vmul.f32 %v1670, 0.5
  %v1682 = vtanh.pop %v1681
  %v1683 = vadd.f32 %v1682, 1.0
  %v1684 = vmul.f32 %v1683, 0.5
  %v1685 = vmul.f32 %v1679, %v1154
  %v1686 = vmul.f32 %v1675, %v1680
  %v1687 = vadd.f32 %v1685, %v1686
  %v1688 = vtanh.pop %v1687
  %v1689 = vmul.f32 %v1684, %v1688
  %s1690 = scalar_lea.vmem [#allocation2], 16
  %1691 = vst [vmem:[%s1690] sm:$0xff] %v1689
  %s1692 = scalar_lea.vmem %s0, 24
  %v1693 = vld [vmem:[%s1692] sm:$0xff]
  %1695 = vset.pattern.permute.xlu0 0
  %1696 = vperm.xlu0 %1695, %v1693
  %v1697 = vpop.permute.xlu0 %1696
  %v1699 = vmul.f32 %v1697, %v34
  %v1700 = vmul.f32 %v1697, %v38
  %v1701 = vmul.f32 %v1697, %v42
  %v1702 = vmul.f32 %v1697, %v46
  %v1703 = vadd.f32 %v1699, %v56
  %v1704 = vadd.f32 %v1700, %v60
  %v1705 = vadd.f32 %v1701, %v64
  %v1706 = vadd.f32 %v1702, %v68
  %v1707 = vld [vmem:[%s3] sm:$0xff]
  %v1708 = vld [vmem:[%s3 + $0x8] sm:$0xff]
  %v1709 = vld [vmem:[%s3 + $0x10] sm:$0xff]
  %v1710 = vld [vmem:[%s3 + $0x18] sm:$0xff]
  %v1711 = vld [vmem:[%s3 + $0x20] sm:$0xff]
  %v1712 = vld [vmem:[%s3 + $0x28] sm:$0xff]
  %v1713 = vld [vmem:[%s3 + $0x30] sm:$0xff]
  %v1714 = vld [vmem:[%s3 + $0x38] sm:$0xff]
  %v1715 = vld [vmem:[%s3 + $0x40] sm:$0xff]
  %v1716 = vld [vmem:[%s3 + $0x48] sm:$0xff]
  %v1717 = vld [vmem:[%s3 + $0x50] sm:$0xff]
  %v1718 = vld [vmem:[%s3 + $0x58] sm:$0xff]
  %v1719 = vld [vmem:[%s3 + $0x60] sm:$0xff]
  %v1720 = vld [vmem:[%s3 + $0x68] sm:$0xff]
  %v1721 = vld [vmem:[%s3 + $0x70] sm:$0xff]
  %v1722 = vld [vmem:[%s3 + $0x78] sm:$0xff]
  %v1723 = vld [vmem:[%s3 + $0x80] sm:$0xff]
  %v1724 = vld [vmem:[%s3 + $0x88] sm:$0xff]
  %v1725 = vld [vmem:[%s3 + $0x90] sm:$0xff]
  %v1726 = vld [vmem:[%s3 + $0x98] sm:$0xff]
  %v1727 = vld [vmem:[%s3 + $0xa0] sm:$0xff]
  %v1728 = vld [vmem:[%s3 + $0xa8] sm:$0xff]
  %v1729 = vld [vmem:[%s3 + $0xb0] sm:$0xff]
  %v1730 = vld [vmem:[%s3 + $0xb8] sm:$0xff]
  %v1731 = vld [vmem:[%s3 + $0xc0] sm:$0xff]
  %v1732 = vld [vmem:[%s3 + $0xc8] sm:$0xff]
  %v1733 = vld [vmem:[%s3 + $0xd0] sm:$0xff]
  %v1734 = vld [vmem:[%s3 + $0xd8] sm:$0xff]
  %v1735 = vld [vmem:[%s3 + $0xe0] sm:$0xff]
  %v1736 = vld [vmem:[%s3 + $0xe8] sm:$0xff]
  %v1737 = vld [vmem:[%s3 + $0xf0] sm:$0xff]
  %v1738 = vld [vmem:[%s3 + $0xf8] sm:$0xff]
  %v1739 = vld [vmem:[%s3 + $0x100] sm:$0xff]
  %v1740 = vld [vmem:[%s3 + $0x108] sm:$0xff]
  %v1741 = vld [vmem:[%s3 + $0x110] sm:$0xff]
  %v1742 = vld [vmem:[%s3 + $0x118] sm:$0xff]
  %v1743 = vld [vmem:[%s3 + $0x120] sm:$0xff]
  %v1744 = vld [vmem:[%s3 + $0x128] sm:$0xff]
  %v1745 = vld [vmem:[%s3 + $0x130] sm:$0xff]
  %v1746 = vld [vmem:[%s3 + $0x138] sm:$0xff]
  %v1747 = vld [vmem:[%s3 + $0x140] sm:$0xff]
  %v1748 = vld [vmem:[%s3 + $0x148] sm:$0xff]
  %v1749 = vld [vmem:[%s3 + $0x150] sm:$0xff]
  %v1750 = vld [vmem:[%s3 + $0x158] sm:$0xff]
  %v1751 = vld [vmem:[%s3 + $0x160] sm:$0xff]
  %v1752 = vld [vmem:[%s3 + $0x168] sm:$0xff]
  %v1753 = vld [vmem:[%s3 + $0x170] sm:$0xff]
  %v1754 = vld [vmem:[%s3 + $0x178] sm:$0xff]
  %v1755 = vld [vmem:[%s3 + $0x180] sm:$0xff]
  %v1756 = vld [vmem:[%s3 + $0x188] sm:$0xff]
  %v1757 = vld [vmem:[%s3 + $0x190] sm:$0xff]
  %v1758 = vld [vmem:[%s3 + $0x198] sm:$0xff]
  %v1759 = vld [vmem:[%s3 + $0x1a0] sm:$0xff]
  %v1760 = vld [vmem:[%s3 + $0x1a8] sm:$0xff]
  %v1761 = vld [vmem:[%s3 + $0x1b0] sm:$0xff]
  %v1762 = vld [vmem:[%s3 + $0x1b8] sm:$0xff]
  %v1763 = vld [vmem:[%s3 + $0x1c0] sm:$0xff]
  %v1764 = vld [vmem:[%s3 + $0x1c8] sm:$0xff]
  %v1765 = vld [vmem:[%s3 + $0x1d0] sm:$0xff]
  %v1766 = vld [vmem:[%s3 + $0x1d8] sm:$0xff]
  %v1767 = vld [vmem:[%s3 + $0x1e0] sm:$0xff]
  %v1768 = vld [vmem:[%s3 + $0x1e8] sm:$0xff]
  %v1769 = vld [vmem:[%s3 + $0x1f0] sm:$0xff]
  %v1770 = vld [vmem:[%s3 + $0x1f8] sm:$0xff]
  %1771 = vmatprep.subr.mxu0 %v1708
  %1772 = vmatpush1.msra.mxu0 %v1707
  %1773 = vmatprep.subr.mxu0 %v1712
  %1774 = vmatpush1.msra.mxu0 %v1711
  %1775 = vmatprep.subr.mxu0 %v1716
  %1776 = vmatpush1.msra.mxu0 %v1715
  %1777 = vmatprep.subr.mxu0 %v1720
  %1778 = vmatpush1.msra.mxu0 %v1719
  %1779 = vmatprep.subr.mxu0 %v1724
  %1780 = vmatpush1.msra.mxu0 %v1723
  %1781 = vmatprep.subr.mxu0 %v1728
  %1782 = vmatpush1.msra.mxu0 %v1727
  %1783 = vmatprep.subr.mxu0 %v1732
  %1784 = vmatpush1.msra.mxu0 %v1731
  %1785 = vmatprep.subr.mxu0 %v1736
  %1786 = vmatpush1.msra.mxu0 %v1735
  %1787 = vmatprep.subr.mxu0 %v1740
  %1788 = vmatpush1.msra.mxu0 %v1739
  %1789 = vmatprep.subr.mxu0 %v1744
  %1790 = vmatpush1.msra.mxu0 %v1743
  %1791 = vmatprep.subr.mxu0 %v1748
  %1792 = vmatpush1.msra.mxu0 %v1747
  %1793 = vmatprep.subr.mxu0 %v1752
  %1794 = vmatpush1.msra.mxu0 %v1751
  %1795 = vmatprep.subr.mxu0 %v1756
  %1796 = vmatpush1.msra.mxu0 %v1755
  %1797 = vmatprep.subr.mxu0 %v1760
  %1798 = vmatpush1.msra.mxu0 %v1759
  %1799 = vmatprep.subr.mxu0 %v1764
  %1800 = vmatpush1.msra.mxu0 %v1763
  %1801 = vmatprep.subr.mxu0 %v1768
  %1802 = vmatpush1.msra.mxu0 %v1767
  %1803 = vmatprep.subr.mxu0 0.0
  %1804 = vmatpush1.msra.mxu0 0.0
  %1805 = vmatprep.subr.mxu0 0.0
  %1806 = vmatpush1.msra.mxu0 0.0
  %1807 = vmatprep.subr.mxu0 0.0
  %1808 = vmatpush1.msra.mxu0 0.0
  %1809 = vmatprep.subr.mxu0 0.0
  %1810 = vmatpush1.msra.mxu0 0.0
  %1811 = vmatprep.subr.mxu0 0.0
  %1812 = vmatpush1.msra.mxu0 0.0
  %1813 = vmatprep.subr.mxu0 0.0
  %1814 = vmatpush1.msra.mxu0 0.0
  %1815 = vmatprep.subr.mxu0 0.0
  %1816 = vmatpush1.msra.mxu0 0.0
  %1817 = vmatprep.subr.mxu0 0.0
  %1818 = vmatpush1.msra.mxu0 0.0
  %1819 = vmatprep.subr.mxu0 0.0
  %1820 = vmatpush1.msra.mxu0 0.0
  %1821 = vmatprep.subr.mxu0 0.0
  %1822 = vmatpush1.msra.mxu0 0.0
  %1823 = vmatprep.subr.mxu0 0.0
  %1824 = vmatpush1.msra.mxu0 0.0
  %1825 = vmatprep.subr.mxu0 0.0
  %1826 = vmatpush1.msra.mxu0 0.0
  %1827 = vmatprep.subr.mxu0 0.0
  %1828 = vmatpush1.msra.mxu0 0.0
  %1829 = vmatprep.subr.mxu0 0.0
  %1830 = vmatpush1.msra.mxu0 0.0
  %1831 = vmatprep.subr.mxu0 0.0
  %1832 = vmatpush1.msra.mxu0 0.0
  %1833 = vmatprep.subr.mxu0 0.0
  %1834 = vmatpush1.msra.mxu0 0.0
  %1835 = vmatprep.mubr.f32.mxu0 0.0
  %1836 = vmatmul.mubr.f32.gmra.mrb[0].mxu0 %v1401
  %v1837 = vpop.f32.mrb[0].mxu0
  %v1838 = vadd.f32 0.0, %v1837
  %v1839 = vpop.f32.mrb[0].mxu0
  %v1840 = vadd.f32 0.0, %v1839
  %1841 = vdwg.mxu0
  %1842 = vmatprep.subr.mxu0 %v1710
  %1843 = vmatpush1.msra.mxu0 %v1709
  %1844 = vmatprep.subr.mxu0 %v1714
  %1845 = vmatpush1.msra.mxu0 %v1713
  %1846 = vmatprep.subr.mxu0 %v1718
  %1847 = vmatpush1.msra.mxu0 %v1717
  %1848 = vmatprep.subr.mxu0 %v1722
  %1849 = vmatpush1.msra.mxu0 %v1721
  %1850 = vmatprep.subr.mxu0 %v1726
  %1851 = vmatpush1.msra.mxu0 %v1725
  %1852 = vmatprep.subr.mxu0 %v1730
  %1853 = vmatpush1.msra.mxu0 %v1729
  %1854 = vmatprep.subr.mxu0 %v1734
  %1855 = vmatpush1.msra.mxu0 %v1733
  %1856 = vmatprep.subr.mxu0 %v1738
  %1857 = vmatpush1.msra.mxu0 %v1737
  %1858 = vmatprep.subr.mxu0 %v1742
  %1859 = vmatpush1.msra.mxu0 %v1741
  %1860 = vmatprep.subr.mxu0 %v1746
  %1861 = vmatpush1.msra.mxu0 %v1745
  %1862 = vmatprep.subr.mxu0 %v1750
  %1863 = vmatpush1.msra.mxu0 %v1749
  %1864 = vmatprep.subr.mxu0 %v1754
  %1865 = vmatpush1.msra.mxu0 %v1753
  %1866 = vmatprep.subr.mxu0 %v1758
  %1867 = vmatpush1.msra.mxu0 %v1757
  %1868 = vmatprep.subr.mxu0 %v1762
  %1869 = vmatpush1.msra.mxu0 %v1761
  %1870 = vmatprep.subr.mxu0 %v1766
  %1871 = vmatpush1.msra.mxu0 %v1765
  %1872 = vmatprep.subr.mxu0 %v1770
  %1873 = vmatpush1.msra.mxu0 %v1769
  %1874 = vmatprep.subr.mxu0 0.0
  %1875 = vmatpush1.msra.mxu0 0.0
  %1876 = vmatprep.subr.mxu0 0.0
  %1877 = vmatpush1.msra.mxu0 0.0
  %1878 = vmatprep.subr.mxu0 0.0
  %1879 = vmatpush1.msra.mxu0 0.0
  %1880 = vmatprep.subr.mxu0 0.0
  %1881 = vmatpush1.msra.mxu0 0.0
  %1882 = vmatprep.subr.mxu0 0.0
  %1883 = vmatpush1.msra.mxu0 0.0
  %1884 = vmatprep.subr.mxu0 0.0
  %1885 = vmatpush1.msra.mxu0 0.0
  %1886 = vmatprep.subr.mxu0 0.0
  %1887 = vmatpush1.msra.mxu0 0.0
  %1888 = vmatprep.subr.mxu0 0.0
  %1889 = vmatpush1.msra.mxu0 0.0
  %1890 = vmatprep.subr.mxu0 0.0
  %1891 = vmatpush1.msra.mxu0 0.0
  %1892 = vmatprep.subr.mxu0 0.0
  %1893 = vmatpush1.msra.mxu0 0.0
  %1894 = vmatprep.subr.mxu0 0.0
  %1895 = vmatpush1.msra.mxu0 0.0
  %1896 = vmatprep.subr.mxu0 0.0
  %1897 = vmatpush1.msra.mxu0 0.0
  %1898 = vmatprep.subr.mxu0 0.0
  %1899 = vmatpush1.msra.mxu0 0.0
  %1900 = vmatprep.subr.mxu0 0.0
  %1901 = vmatpush1.msra.mxu0 0.0
  %1902 = vmatprep.subr.mxu0 0.0
  %1903 = vmatpush1.msra.mxu0 0.0
  %1904 = vmatprep.subr.mxu0 0.0
  %1905 = vmatpush1.msra.mxu0 0.0
  %1906 = vmatprep.mubr.f32.mxu0 0.0
  %1907 = vmatmul.mubr.f32.gmra.mrb[0].mxu0 %v1401
  %v1908 = vpop.f32.mrb[0].mxu0
  %v1909 = vadd.f32 0.0, %v1908
  %v1910 = vpop.f32.mrb[0].mxu0
  %v1911 = vadd.f32 0.0, %v1910
  %1912 = vdwg.mxu0
  %v1913 = vadd.f32 %v1703, %v1838
  %v1914 = vadd.f32 %v1704, %v1840
  %v1915 = vadd.f32 %v1705, %v1909
  %v1916 = vadd.f32 %v1706, %v1911
  %v1917 = vmul.f32 %v1913, 0.5
  %v1918 = vtanh.pop %v1917
  %v1919 = vadd.f32 %v1918, 1.0
  %v1920 = vmul.f32 %v1919, 0.5
  %v1921 = vmul.f32 %v1914, 0.5
  %v1922 = vtanh.pop %v1921
  %v1923 = vadd.f32 %v1922, 1.0
  %v1924 = vmul.f32 %v1923, 0.5
  %v1925 = vtanh.pop %v1915
  %v1926 = vmul.f32 %v1916, 0.5
  %v1927 = vtanh.pop %v1926
  %v1928 = vadd.f32 %v1927, 1.0
  %v1929 = vmul.f32 %v1928, 0.5
  %v1930 = vmul.f32 %v1924, %v1399
  %v1931 = vmul.f32 %v1920, %v1925
  %v1932 = vadd.f32 %v1930, %v1931
  %v1933 = vtanh.pop %v1932
  %v1934 = vmul.f32 %v1929, %v1933
  %v1935 = vld [vmem:[%s4] sm:$0xff]
  %v1936 = vld [vmem:[%s4 + $0x8] sm:$0xff]
  %v1937 = vld [vmem:[%s4 + $0x10] sm:$0xff]
  %v1938 = vld [vmem:[%s4 + $0x18] sm:$0xff]
  %v1939 = vld [vmem:[%s4 + $0x20] sm:$0xff]
  %v1940 = vld [vmem:[%s4 + $0x28] sm:$0xff]
  %v1941 = vld [vmem:[%s4 + $0x30] sm:$0xff]
  %v1942 = vld [vmem:[%s4 + $0x38] sm:$0xff]
  %v1943 = vld [vmem:[%s4 + $0x40] sm:$0xff]
  %v1944 = vld [vmem:[%s4 + $0x48] sm:$0xff]
  %v1945 = vld [vmem:[%s4 + $0x50] sm:$0xff]
  %v1946 = vld [vmem:[%s4 + $0x58] sm:$0xff]
  %v1947 = vld [vmem:[%s4 + $0x60] sm:$0xff]
  %v1948 = vld [vmem:[%s4 + $0x68] sm:$0xff]
  %v1949 = vld [vmem:[%s4 + $0x70] sm:$0xff]
  %v1950 = vld [vmem:[%s4 + $0x78] sm:$0xff]
  %v1951 = vld [vmem:[%s4 + $0x80] sm:$0xff]
  %v1952 = vld [vmem:[%s4 + $0x88] sm:$0xff]
  %v1953 = vld [vmem:[%s4 + $0x90] sm:$0xff]
  %v1954 = vld [vmem:[%s4 + $0x98] sm:$0xff]
  %v1955 = vld [vmem:[%s4 + $0xa0] sm:$0xff]
  %v1956 = vld [vmem:[%s4 + $0xa8] sm:$0xff]
  %v1957 = vld [vmem:[%s4 + $0xb0] sm:$0xff]
  %v1958 = vld [vmem:[%s4 + $0xb8] sm:$0xff]
  %v1959 = vld [vmem:[%s4 + $0xc0] sm:$0xff]
  %v1960 = vld [vmem:[%s4 + $0xc8] sm:$0xff]
  %v1961 = vld [vmem:[%s4 + $0xd0] sm:$0xff]
  %v1962 = vld [vmem:[%s4 + $0xd8] sm:$0xff]
  %v1963 = vld [vmem:[%s4 + $0xe0] sm:$0xff]
  %v1964 = vld [vmem:[%s4 + $0xe8] sm:$0xff]
  %v1965 = vld [vmem:[%s4 + $0xf0] sm:$0xff]
  %v1966 = vld [vmem:[%s4 + $0xf8] sm:$0xff]
  %v1967 = vld [vmem:[%s4 + $0x100] sm:$0xff]
  %v1968 = vld [vmem:[%s4 + $0x108] sm:$0xff]
  %v1969 = vld [vmem:[%s4 + $0x110] sm:$0xff]
  %v1970 = vld [vmem:[%s4 + $0x118] sm:$0xff]
  %v1971 = vld [vmem:[%s4 + $0x120] sm:$0xff]
  %v1972 = vld [vmem:[%s4 + $0x128] sm:$0xff]
  %v1973 = vld [vmem:[%s4 + $0x130] sm:$0xff]
  %v1974 = vld [vmem:[%s4 + $0x138] sm:$0xff]
  %v1975 = vld [vmem:[%s4 + $0x140] sm:$0xff]
  %v1976 = vld [vmem:[%s4 + $0x148] sm:$0xff]
  %v1977 = vld [vmem:[%s4 + $0x150] sm:$0xff]
  %v1978 = vld [vmem:[%s4 + $0x158] sm:$0xff]
  %v1979 = vld [vmem:[%s4 + $0x160] sm:$0xff]
  %v1980 = vld [vmem:[%s4 + $0x168] sm:$0xff]
  %v1981 = vld [vmem:[%s4 + $0x170] sm:$0xff]
  %v1982 = vld [vmem:[%s4 + $0x178] sm:$0xff]
  %v1983 = vld [vmem:[%s4 + $0x180] sm:$0xff]
  %v1984 = vld [vmem:[%s4 + $0x188] sm:$0xff]
  %v1985 = vld [vmem:[%s4 + $0x190] sm:$0xff]
  %v1986 = vld [vmem:[%s4 + $0x198] sm:$0xff]
  %v1987 = vld [vmem:[%s4 + $0x1a0] sm:$0xff]
  %v1988 = vld [vmem:[%s4 + $0x1a8] sm:$0xff]
  %v1989 = vld [vmem:[%s4 + $0x1b0] sm:$0xff]
  %v1990 = vld [vmem:[%s4 + $0x1b8] sm:$0xff]
  %v1991 = vld [vmem:[%s4 + $0x1c0] sm:$0xff]
  %v1992 = vld [vmem:[%s4 + $0x1c8] sm:$0xff]
  %v1993 = vld [vmem:[%s4 + $0x1d0] sm:$0xff]
  %v1994 = vld [vmem:[%s4 + $0x1d8] sm:$0xff]
  %v1995 = vld [vmem:[%s4 + $0x1e0] sm:$0xff]
  %v1996 = vld [vmem:[%s4 + $0x1e8] sm:$0xff]
  %v1997 = vld [vmem:[%s4 + $0x1f0] sm:$0xff]
  %v1998 = vld [vmem:[%s4 + $0x1f8] sm:$0xff]
  %v1999 = vld [vmem:[%s4 + $0x200] sm:$0xff]
  %v2000 = vld [vmem:[%s4 + $0x208] sm:$0xff]
  %v2001 = vld [vmem:[%s4 + $0x210] sm:$0xff]
  %v2002 = vld [vmem:[%s4 + $0x218] sm:$0xff]
  %v2003 = vld [vmem:[%s4 + $0x220] sm:$0xff]
  %v2004 = vld [vmem:[%s4 + $0x228] sm:$0xff]
  %v2005 = vld [vmem:[%s4 + $0x230] sm:$0xff]
  %v2006 = vld [vmem:[%s4 + $0x238] sm:$0xff]
  %v2007 = vld [vmem:[%s4 + $0x240] sm:$0xff]
  %v2008 = vld [vmem:[%s4 + $0x248] sm:$0xff]
  %v2009 = vld [vmem:[%s4 + $0x250] sm:$0xff]
  %v2010 = vld [vmem:[%s4 + $0x258] sm:$0xff]
  %v2011 = vld [vmem:[%s4 + $0x260] sm:$0xff]
  %v2012 = vld [vmem:[%s4 + $0x268] sm:$0xff]
  %v2013 = vld [vmem:[%s4 + $0x270] sm:$0xff]
  %v2014 = vld [vmem:[%s4 + $0x278] sm:$0xff]
  %v2015 = vld [vmem:[%s4 + $0x280] sm:$0xff]
  %v2016 = vld [vmem:[%s4 + $0x288] sm:$0xff]
  %v2017 = vld [vmem:[%s4 + $0x290] sm:$0xff]
  %v2018 = vld [vmem:[%s4 + $0x298] sm:$0xff]
  %v2019 = vld [vmem:[%s4 + $0x2a0] sm:$0xff]
  %v2020 = vld [vmem:[%s4 + $0x2a8] sm:$0xff]
  %v2021 = vld [vmem:[%s4 + $0x2b0] sm:$0xff]
  %v2022 = vld [vmem:[%s4 + $0x2b8] sm:$0xff]
  %v2023 = vld [vmem:[%s4 + $0x2c0] sm:$0xff]
  %v2024 = vld [vmem:[%s4 + $0x2c8] sm:$0xff]
  %v2025 = vld [vmem:[%s4 + $0x2d0] sm:$0xff]
  %v2026 = vld [vmem:[%s4 + $0x2d8] sm:$0xff]
  %v2027 = vld [vmem:[%s4 + $0x2e0] sm:$0xff]
  %v2028 = vld [vmem:[%s4 + $0x2e8] sm:$0xff]
  %v2029 = vld [vmem:[%s4 + $0x2f0] sm:$0xff]
  %v2030 = vld [vmem:[%s4 + $0x2f8] sm:$0xff]
  %v2031 = vld [vmem:[%s4 + $0x300] sm:$0xff]
  %v2032 = vld [vmem:[%s4 + $0x308] sm:$0xff]
  %v2033 = vld [vmem:[%s4 + $0x310] sm:$0xff]
  %v2034 = vld [vmem:[%s4 + $0x318] sm:$0xff]
  %v2035 = vld [vmem:[%s4 + $0x320] sm:$0xff]
  %v2036 = vld [vmem:[%s4 + $0x328] sm:$0xff]
  %v2037 = vld [vmem:[%s4 + $0x330] sm:$0xff]
  %v2038 = vld [vmem:[%s4 + $0x338] sm:$0xff]
  %v2039 = vld [vmem:[%s4 + $0x340] sm:$0xff]
  %v2040 = vld [vmem:[%s4 + $0x348] sm:$0xff]
  %v2041 = vld [vmem:[%s4 + $0x350] sm:$0xff]
  %v2042 = vld [vmem:[%s4 + $0x358] sm:$0xff]
  %v2043 = vld [vmem:[%s4 + $0x360] sm:$0xff]
  %v2044 = vld [vmem:[%s4 + $0x368] sm:$0xff]
  %v2045 = vld [vmem:[%s4 + $0x370] sm:$0xff]
  %v2046 = vld [vmem:[%s4 + $0x378] sm:$0xff]
  %v2047 = vld [vmem:[%s4 + $0x380] sm:$0xff]
  %v2048 = vld [vmem:[%s4 + $0x388] sm:$0xff]
  %v2049 = vld [vmem:[%s4 + $0x390] sm:$0xff]
  %v2050 = vld [vmem:[%s4 + $0x398] sm:$0xff]
  %v2051 = vld [vmem:[%s4 + $0x3a0] sm:$0xff]
  %v2052 = vld [vmem:[%s4 + $0x3a8] sm:$0xff]
  %v2053 = vld [vmem:[%s4 + $0x3b0] sm:$0xff]
  %v2054 = vld [vmem:[%s4 + $0x3b8] sm:$0xff]
  %v2055 = vld [vmem:[%s4 + $0x3c0] sm:$0xff]
  %v2056 = vld [vmem:[%s4 + $0x3c8] sm:$0xff]
  %v2057 = vld [vmem:[%s4 + $0x3d0] sm:$0xff]
  %v2058 = vld [vmem:[%s4 + $0x3d8] sm:$0xff]
  %v2059 = vld [vmem:[%s4 + $0x3e0] sm:$0xff]
  %v2060 = vld [vmem:[%s4 + $0x3e8] sm:$0xff]
  %v2061 = vld [vmem:[%s4 + $0x3f0] sm:$0xff]
  %v2062 = vld [vmem:[%s4 + $0x3f8] sm:$0xff]
  %2063 = vmatprep.subr.mxu0 %v1936
  %2064 = vmatpush1.msra.mxu0 %v1935
  %2065 = vmatprep.subr.mxu0 %v1940
  %2066 = vmatpush1.msra.mxu0 %v1939
  %2067 = vmatprep.subr.mxu0 %v1944
  %2068 = vmatpush1.msra.mxu0 %v1943
  %2069 = vmatprep.subr.mxu0 %v1948
  %2070 = vmatpush1.msra.mxu0 %v1947
  %2071 = vmatprep.subr.mxu0 %v1952
  %2072 = vmatpush1.msra.mxu0 %v1951
  %2073 = vmatprep.subr.mxu0 %v1956
  %2074 = vmatpush1.msra.mxu0 %v1955
  %2075 = vmatprep.subr.mxu0 %v1960
  %2076 = vmatpush1.msra.mxu0 %v1959
  %2077 = vmatprep.subr.mxu0 %v1964
  %2078 = vmatpush1.msra.mxu0 %v1963
  %2079 = vmatprep.subr.mxu0 %v1968
  %2080 = vmatpush1.msra.mxu0 %v1967
  %2081 = vmatprep.subr.mxu0 %v1972
  %2082 = vmatpush1.msra.mxu0 %v1971
  %2083 = vmatprep.subr.mxu0 %v1976
  %2084 = vmatpush1.msra.mxu0 %v1975
  %2085 = vmatprep.subr.mxu0 %v1980
  %2086 = vmatpush1.msra.mxu0 %v1979
  %2087 = vmatprep.subr.mxu0 %v1984
  %2088 = vmatpush1.msra.mxu0 %v1983
  %2089 = vmatprep.subr.mxu0 %v1988
  %2090 = vmatpush1.msra.mxu0 %v1987
  %2091 = vmatprep.subr.mxu0 %v1992
  %2092 = vmatpush1.msra.mxu0 %v1991
  %2093 = vmatprep.subr.mxu0 %v1996
  %2094 = vmatpush1.msra.mxu0 %v1995
  %2095 = vmatprep.subr.mxu0 %v2000
  %2096 = vmatpush1.msra.mxu0 %v1999
  %2097 = vmatprep.subr.mxu0 %v2004
  %2098 = vmatpush1.msra.mxu0 %v2003
  %2099 = vmatprep.subr.mxu0 %v2008
  %2100 = vmatpush1.msra.mxu0 %v2007
  %2101 = vmatprep.subr.mxu0 %v2012
  %2102 = vmatpush1.msra.mxu0 %v2011
  %2103 = vmatprep.subr.mxu0 %v2016
  %2104 = vmatpush1.msra.mxu0 %v2015
  %2105 = vmatprep.subr.mxu0 %v2020
  %2106 = vmatpush1.msra.mxu0 %v2019
  %2107 = vmatprep.subr.mxu0 %v2024
  %2108 = vmatpush1.msra.mxu0 %v2023
  %2109 = vmatprep.subr.mxu0 %v2028
  %2110 = vmatpush1.msra.mxu0 %v2027
  %2111 = vmatprep.subr.mxu0 %v2032
  %2112 = vmatpush1.msra.mxu0 %v2031
  %2113 = vmatprep.subr.mxu0 %v2036
  %2114 = vmatpush1.msra.mxu0 %v2035
  %2115 = vmatprep.subr.mxu0 %v2040
  %2116 = vmatpush1.msra.mxu0 %v2039
  %2117 = vmatprep.subr.mxu0 %v2044
  %2118 = vmatpush1.msra.mxu0 %v2043
  %2119 = vmatprep.subr.mxu0 %v2048
  %2120 = vmatpush1.msra.mxu0 %v2047
  %2121 = vmatprep.subr.mxu0 %v2052
  %2122 = vmatpush1.msra.mxu0 %v2051
  %2123 = vmatprep.subr.mxu0 %v2056
  %2124 = vmatpush1.msra.mxu0 %v2055
  %2125 = vmatprep.subr.mxu0 %v2060
  %2126 = vmatpush1.msra.mxu0 %v2059
  %2127 = vmatprep.mubr.f32.mxu0 %v1689
  %2128 = vmatmul.mubr.f32.gmra.mrb[0].mxu0 %v1934
  %v2129 = vpop.f32.mrb[0].mxu0
  %v2130 = vadd.f32 %v78, %v2129
  %v2131 = vpop.f32.mrb[0].mxu0
  %v2132 = vadd.f32 %v82, %v2131
  %2133 = vdwg.mxu0
  %2134 = vmatprep.subr.mxu0 %v1938
  %2135 = vmatpush1.msra.mxu0 %v1937
  %2136 = vmatprep.subr.mxu0 %v1942
  %2137 = vmatpush1.msra.mxu0 %v1941
  %2138 = vmatprep.subr.mxu0 %v1946
  %2139 = vmatpush1.msra.mxu0 %v1945
  %2140 = vmatprep.subr.mxu0 %v1950
  %2141 = vmatpush1.msra.mxu0 %v1949
  %2142 = vmatprep.subr.mxu0 %v1954
  %2143 = vmatpush1.msra.mxu0 %v1953
  %2144 = vmatprep.subr.mxu0 %v1958
  %2145 = vmatpush1.msra.mxu0 %v1957
  %2146 = vmatprep.subr.mxu0 %v1962
  %2147 = vmatpush1.msra.mxu0 %v1961
  %2148 = vmatprep.subr.mxu0 %v1966
  %2149 = vmatpush1.msra.mxu0 %v1965
  %2150 = vmatprep.subr.mxu0 %v1970
  %2151 = vmatpush1.msra.mxu0 %v1969
  %2152 = vmatprep.subr.mxu0 %v1974
  %2153 = vmatpush1.msra.mxu0 %v1973
  %2154 = vmatprep.subr.mxu0 %v1978
  %2155 = vmatpush1.msra.mxu0 %v1977
  %2156 = vmatprep.subr.mxu0 %v1982
  %2157 = vmatpush1.msra.mxu0 %v1981
  %2158 = vmatprep.subr.mxu0 %v1986
  %2159 = vmatpush1.msra.mxu0 %v1985
  %2160 = vmatprep.subr.mxu0 %v1990
  %2161 = vmatpush1.msra.mxu0 %v1989
  %2162 = vmatprep.subr.mxu0 %v1994
  %2163 = vmatpush1.msra.mxu0 %v1993
  %2164 = vmatprep.subr.mxu0 %v1998
  %2165 = vmatpush1.msra.mxu0 %v1997
  %2166 = vmatprep.subr.mxu0 %v2002
  %2167 = vmatpush1.msra.mxu0 %v2001
  %2168 = vmatprep.subr.mxu0 %v2006
  %2169 = vmatpush1.msra.mxu0 %v2005
  %2170 = vmatprep.subr.mxu0 %v2010
  %2171 = vmatpush1.msra.mxu0 %v2009
  %2172 = vmatprep.subr.mxu0 %v2014
  %2173 = vmatpush1.msra.mxu0 %v2013
  %2174 = vmatprep.subr.mxu0 %v2018
  %2175 = vmatpush1.msra.mxu0 %v2017
  %2176 = vmatprep.subr.mxu0 %v2022
  %2177 = vmatpush1.msra.mxu0 %v2021
  %2178 = vmatprep.subr.mxu0 %v2026
  %2179 = vmatpush1.msra.mxu0 %v2025
  %2180 = vmatprep.subr.mxu0 %v2030
  %2181 = vmatpush1.msra.mxu0 %v2029
  %2182 = vmatprep.subr.mxu0 %v2034
  %2183 = vmatpush1.msra.mxu0 %v2033
  %2184 = vmatprep.subr.mxu0 %v2038
  %2185 = vmatpush1.msra.mxu0 %v2037
  %2186 = vmatprep.subr.mxu0 %v2042
  %2187 = vmatpush1.msra.mxu0 %v2041
  %2188 = vmatprep.subr.mxu0 %v2046
  %2189 = vmatpush1.msra.mxu0 %v2045
  %2190 = vmatprep.subr.mxu0 %v2050
  %2191 = vmatpush1.msra.mxu0 %v2049
  %2192 = vmatprep.subr.mxu0 %v2054
  %2193 = vmatpush1.msra.mxu0 %v2053
  %2194 = vmatprep.subr.mxu0 %v2058
  %2195 = vmatpush1.msra.mxu0 %v2057
  %2196 = vmatprep.subr.mxu0 %v2062
  %2197 = vmatpush1.msra.mxu0 %v2061
  %2198 = vmatprep.mubr.f32.mxu0 %v1689
  %2199 = vmatmul.mubr.f32.gmra.mrb[0].mxu0 %v1934
  %v2200 = vpop.f32.mrb[0].mxu0
  %v2201 = vadd.f32 %v86, %v2200
  %v2202 = vpop.f32.mrb[0].mxu0
  %v2203 = vadd.f32 %v90, %v2202
  %2204 = vdwg.mxu0
  %v2205 = vmul.f32 %v2130, 0.5
  %v2206 = vtanh.pop %v2205
  %v2207 = vadd.f32 %v2206, 1.0
  %v2208 = vmul.f32 %v2207, 0.5
  %v2209 = vmul.f32 %v2132, 0.5
  %v2210 = vtanh.pop %v2209
  %v2211 = vadd.f32 %v2210, 1.0
  %v2212 = vmul.f32 %v2211, 0.5
  %v2213 = vtanh.pop %v2201
  %v2214 = vmul.f32 %v2203, 0.5
  %v2215 = vtanh.pop %v2214
  %v2216 = vadd.f32 %v2215, 1.0
  %v2217 = vmul.f32 %v2216, 0.5
  %v2218 = vmul.f32 %v2212, %v1687
  %v2219 = vmul.f32 %v2208, %v2213
  %v2220 = vadd.f32 %v2218, %v2219
  %v2221 = vtanh.pop %v2220
  %v2222 = vmul.f32 %v2217, %v2221
  %s2223 = scalar_lea.vmem [#allocation2], 24
  %2224 = vst [vmem:[%s2223] sm:$0xff] %v2222
  %s2225 = scalar_lea.vmem %s0, 32
  %v2226 = vld [vmem:[%s2225] sm:$0xff]
  %2228 = vset.pattern.permute.xlu0 0
  %2229 = vperm.xlu0 %2228, %v2226
  %v2230 = vpop.permute.xlu0 %2229
  %v2232 = vmul.f32 %v2230, %v34
  %v2233 = vmul.f32 %v2230, %v38
  %v2234 = vmul.f32 %v2230, %v42
  %v2235 = vmul.f32 %v2230, %v46
  %v2236 = vadd.f32 %v2232, %v56
  %v2237 = vadd.f32 %v2233, %v60
  %v2238 = vadd.f32 %v2234, %v64
  %v2239 = vadd.f32 %v2235, %v68
  %v2240 = vld [vmem:[%s3] sm:$0xff]
  %v2241 = vld [vmem:[%s3 + $0x8] sm:$0xff]
  %v2242 = vld [vmem:[%s3 + $0x10] sm:$0xff]
  %v2243 = vld [vmem:[%s3 + $0x18] sm:$0xff]
  %v2244 = vld [vmem:[%s3 + $0x20] sm:$0xff]
  %v2245 = vld [vmem:[%s3 + $0x28] sm:$0xff]
  %v2246 = vld [vmem:[%s3 + $0x30] sm:$0xff]
  %v2247 = vld [vmem:[%s3 + $0x38] sm:$0xff]
  %v2248 = vld [vmem:[%s3 + $0x40] sm:$0xff]
  %v2249 = vld [vmem:[%s3 + $0x48] sm:$0xff]
  %v2250 = vld [vmem:[%s3 + $0x50] sm:$0xff]
  %v2251 = vld [vmem:[%s3 + $0x58] sm:$0xff]
  %v2252 = vld [vmem:[%s3 + $0x60] sm:$0xff]
  %v2253 = vld [vmem:[%s3 + $0x68] sm:$0xff]
  %v2254 = vld [vmem:[%s3 + $0x70] sm:$0xff]
  %v2255 = vld [vmem:[%s3 + $0x78] sm:$0xff]
  %v2256 = vld [vmem:[%s3 + $0x80] sm:$0xff]
  %v2257 = vld [vmem:[%s3 + $0x88] sm:$0xff]
  %v2258 = vld [vmem:[%s3 + $0x90] sm:$0xff]
  %v2259 = vld [vmem:[%s3 + $0x98] sm:$0xff]
  %v2260 = vld [vmem:[%s3 + $0xa0] sm:$0xff]
  %v2261 = vld [vmem:[%s3 + $0xa8] sm:$0xff]
  %v2262 = vld [vmem:[%s3 + $0xb0] sm:$0xff]
  %v2263 = vld [vmem:[%s3 + $0xb8] sm:$0xff]
  %v2264 = vld [vmem:[%s3 + $0xc0] sm:$0xff]
  %v2265 = vld [vmem:[%s3 + $0xc8] sm:$0xff]
  %v2266 = vld [vmem:[%s3 + $0xd0] sm:$0xff]
  %v2267 = vld [vmem:[%s3 + $0xd8] sm:$0xff]
  %v2268 = vld [vmem:[%s3 + $0xe0] sm:$0xff]
  %v2269 = vld [vmem:[%s3 + $0xe8] sm:$0xff]
  %v2270 = vld [vmem:[%s3 + $0xf0] sm:$0xff]
  %v2271 = vld [vmem:[%s3 + $0xf8] sm:$0xff]
  %v2272 = vld [vmem:[%s3 + $0x100] sm:$0xff]
  %v2273 = vld [vmem:[%s3 + $0x108] sm:$0xff]
  %v2274 = vld [vmem:[%s3 + $0x110] sm:$0xff]
  %v2275 = vld [vmem:[%s3 + $0x118] sm:$0xff]
  %v2276 = vld [vmem:[%s3 + $0x120] sm:$0xff]
  %v2277 = vld [vmem:[%s3 + $0x128] sm:$0xff]
  %v2278 = vld [vmem:[%s3 + $0x130] sm:$0xff]
  %v2279 = vld [vmem:[%s3 + $0x138] sm:$0xff]
  %v2280 = vld [vmem:[%s3 + $0x140] sm:$0xff]
  %v2281 = vld [vmem:[%s3 + $0x148] sm:$0xff]
  %v2282 = vld [vmem:[%s3 + $0x150] sm:$0xff]
  %v2283 = vld [vmem:[%s3 + $0x158] sm:$0xff]
  %v2284 = vld [vmem:[%s3 + $0x160] sm:$0xff]
  %v2285 = vld [vmem:[%s3 + $0x168] sm:$0xff]
  %v2286 = vld [vmem:[%s3 + $0x170] sm:$0xff]
  %v2287 = vld [vmem:[%s3 + $0x178] sm:$0xff]
  %v2288 = vld [vmem:[%s3 + $0x180] sm:$0xff]
  %v2289 = vld [vmem:[%s3 + $0x188] sm:$0xff]
  %v2290 = vld [vmem:[%s3 + $0x190] sm:$0xff]
  %v2291 = vld [vmem:[%s3 + $0x198] sm:$0xff]
  %v2292 = vld [vmem:[%s3 + $0x1a0] sm:$0xff]
  %v2293 = vld [vmem:[%s3 + $0x1a8] sm:$0xff]
  %v2294 = vld [vmem:[%s3 + $0x1b0] sm:$0xff]
  %v2295 = vld [vmem:[%s3 + $0x1b8] sm:$0xff]
  %v2296 = vld [vmem:[%s3 + $0x1c0] sm:$0xff]
  %v2297 = vld [vmem:[%s3 + $0x1c8] sm:$0xff]
  %v2298 = vld [vmem:[%s3 + $0x1d0] sm:$0xff]
  %v2299 = vld [vmem:[%s3 + $0x1d8] sm:$0xff]
  %v2300 = vld [vmem:[%s3 + $0x1e0] sm:$0xff]
  %v2301 = vld [vmem:[%s3 + $0x1e8] sm:$0xff]
  %v2302 = vld [vmem:[%s3 + $0x1f0] sm:$0xff]
  %v2303 = vld [vmem:[%s3 + $0x1f8] sm:$0xff]
  %2304 = vmatprep.subr.mxu0 %v2241
  %2305 = vmatpush1.msra.mxu0 %v2240
  %2306 = vmatprep.subr.mxu0 %v2245
  %2307 = vmatpush1.msra.mxu0 %v2244
  %2308 = vmatprep.subr.mxu0 %v2249
  %2309 = vmatpush1.msra.mxu0 %v2248
  %2310 = vmatprep.subr.mxu0 %v2253
  %2311 = vmatpush1.msra.mxu0 %v2252
  %2312 = vmatprep.subr.mxu0 %v2257
  %2313 = vmatpush1.msra.mxu0 %v2256
  %2314 = vmatprep.subr.mxu0 %v2261
  %2315 = vmatpush1.msra.mxu0 %v2260
  %2316 = vmatprep.subr.mxu0 %v2265
  %2317 = vmatpush1.msra.mxu0 %v2264
  %2318 = vmatprep.subr.mxu0 %v2269
  %2319 = vmatpush1.msra.mxu0 %v2268
  %2320 = vmatprep.subr.mxu0 %v2273
  %2321 = vmatpush1.msra.mxu0 %v2272
  %2322 = vmatprep.subr.mxu0 %v2277
  %2323 = vmatpush1.msra.mxu0 %v2276
  %2324 = vmatprep.subr.mxu0 %v2281
  %2325 = vmatpush1.msra.mxu0 %v2280
  %2326 = vmatprep.subr.mxu0 %v2285
  %2327 = vmatpush1.msra.mxu0 %v2284
  %2328 = vmatprep.subr.mxu0 %v2289
  %2329 = vmatpush1.msra.mxu0 %v2288
  %2330 = vmatprep.subr.mxu0 %v2293
  %2331 = vmatpush1.msra.mxu0 %v2292
  %2332 = vmatprep.subr.mxu0 %v2297
  %2333 = vmatpush1.msra.mxu0 %v2296
  %2334 = vmatprep.subr.mxu0 %v2301
  %2335 = vmatpush1.msra.mxu0 %v2300
  %2336 = vmatprep.subr.mxu0 0.0
  %2337 = vmatpush1.msra.mxu0 0.0
  %2338 = vmatprep.subr.mxu0 0.0
  %2339 = vmatpush1.msra.mxu0 0.0
  %2340 = vmatprep.subr.mxu0 0.0
  %2341 = vmatpush1.msra.mxu0 0.0
  %2342 = vmatprep.subr.mxu0 0.0
  %2343 = vmatpush1.msra.mxu0 0.0
  %2344 = vmatprep.subr.mxu0 0.0
  %2345 = vmatpush1.msra.mxu0 0.0
  %2346 = vmatprep.subr.mxu0 0.0
  %2347 = vmatpush1.msra.mxu0 0.0
  %2348 = vmatprep.subr.mxu0 0.0
  %2349 = vmatpush1.msra.mxu0 0.0
  %2350 = vmatprep.subr.mxu0 0.0
  %2351 = vmatpush1.msra.mxu0 0.0
  %2352 = vmatprep.subr.mxu0 0.0
  %2353 = vmatpush1.msra.mxu0 0.0
  %2354 = vmatprep.subr.mxu0 0.0
  %2355 = vmatpush1.msra.mxu0 0.0
  %2356 = vmatprep.subr.mxu0 0.0
  %2357 = vmatpush1.msra.mxu0 0.0
  %2358 = vmatprep.subr.mxu0 0.0
  %2359 = vmatpush1.msra.mxu0 0.0
  %2360 = vmatprep.subr.mxu0 0.0
  %2361 = vmatpush1.msra.mxu0 0.0
  %2362 = vmatprep.subr.mxu0 0.0
  %2363 = vmatpush1.msra.mxu0 0.0
  %2364 = vmatprep.subr.mxu0 0.0
  %2365 = vmatpush1.msra.mxu0 0.0
  %2366 = vmatprep.subr.mxu0 0.0
  %2367 = vmatpush1.msra.mxu0 0.0
  %2368 = vmatprep.mubr.f32.mxu0 0.0
  %2369 = vmatmul.mubr.f32.gmra.mrb[0].mxu0 %v1934
  %v2370 = vpop.f32.mrb[0].mxu0
  %v2371 = vadd.f32 0.0, %v2370
  %v2372 = vpop.f32.mrb[0].mxu0
  %v2373 = vadd.f32 0.0, %v2372
  %2374 = vdwg.mxu0
  %2375 = vmatprep.subr.mxu0 %v2243
  %2376 = vmatpush1.msra.mxu0 %v2242
  %2377 = vmatprep.subr.mxu0 %v2247
  %2378 = vmatpush1.msra.mxu0 %v2246
  %2379 = vmatprep.subr.mxu0 %v2251
  %2380 = vmatpush1.msra.mxu0 %v2250
  %2381 = vmatprep.subr.mxu0 %v2255
  %2382 = vmatpush1.msra.mxu0 %v2254
  %2383 = vmatprep.subr.mxu0 %v2259
  %2384 = vmatpush1.msra.mxu0 %v2258
  %2385 = vmatprep.subr.mxu0 %v2263
  %2386 = vmatpush1.msra.mxu0 %v2262
  %2387 = vmatprep.subr.mxu0 %v2267
  %2388 = vmatpush1.msra.mxu0 %v2266
  %2389 = vmatprep.subr.mxu0 %v2271
  %2390 = vmatpush1.msra.mxu0 %v2270
  %2391 = vmatprep.subr.mxu0 %v2275
  %2392 = vmatpush1.msra.mxu0 %v2274
  %2393 = vmatprep.subr.mxu0 %v2279
  %2394 = vmatpush1.msra.mxu0 %v2278
  %2395 = vmatprep.subr.mxu0 %v2283
  %2396 = vmatpush1.msra.mxu0 %v2282
  %2397 = vmatprep.subr.mxu0 %v2287
  %2398 = vmatpush1.msra.mxu0 %v2286
  %2399 = vmatprep.subr.mxu0 %v2291
  %2400 = vmatpush1.msra.mxu0 %v2290
  %2401 = vmatprep.subr.mxu0 %v2295
  %2402 = vmatpush1.msra.mxu0 %v2294
  %2403 = vmatprep.subr.mxu0 %v2299
  %2404 = vmatpush1.msra.mxu0 %v2298
  %2405 = vmatprep.subr.mxu0 %v2303
  %2406 = vmatpush1.msra.mxu0 %v2302
  %2407 = vmatprep.subr.mxu0 0.0
  %2408 = vmatpush1.msra.mxu0 0.0
  %2409 = vmatprep.subr.mxu0 0.0
  %2410 = vmatpush1.msra.mxu0 0.0
  %2411 = vmatprep.subr.mxu0 0.0
  %2412 = vmatpush1.msra.mxu0 0.0
  %2413 = vmatprep.subr.mxu0 0.0
  %2414 = vmatpush1.msra.mxu0 0.0
  %2415 = vmatprep.subr.mxu0 0.0
  %2416 = vmatpush1.msra.mxu0 0.0
  %2417 = vmatprep.subr.mxu0 0.0
  %2418 = vmatpush1.msra.mxu0 0.0
  %2419 = vmatprep.subr.mxu0 0.0
  %2420 = vmatpush1.msra.mxu0 0.0
  %2421 = vmatprep.subr.mxu0 0.0
  %2422 = vmatpush1.msra.mxu0 0.0
  %2423 = vmatprep.subr.mxu0 0.0
  %2424 = vmatpush1.msra.mxu0 0.0
  %2425 = vmatprep.subr.mxu0 0.0
  %2426 = vmatpush1.msra.mxu0 0.0
  %2427 = vmatprep.subr.mxu0 0.0
  %2428 = vmatpush1.msra.mxu0 0.0
  %2429 = vmatprep.subr.mxu0 0.0
  %2430 = vmatpush1.msra.mxu0 0.0
  %2431 = vmatprep.subr.mxu0 0.0
  %2432 = vmatpush1.msra.mxu0 0.0
  %2433 = vmatprep.subr.mxu0 0.0
  %2434 = vmatpush1.msra.mxu0 0.0
  %2435 = vmatprep.subr.mxu0 0.0
  %2436 = vmatpush1.msra.mxu0 0.0
  %2437 = vmatprep.subr.mxu0 0.0
  %2438 = vmatpush1.msra.mxu0 0.0
  %2439 = vmatprep.mubr.f32.mxu0 0.0
  %2440 = vmatmul.mubr.f32.gmra.mrb[0].mxu0 %v1934
  %v2441 = vpop.f32.mrb[0].mxu0
  %v2442 = vadd.f32 0.0, %v2441
  %v2443 = vpop.f32.mrb[0].mxu0
  %v2444 = vadd.f32 0.0, %v2443
  %2445 = vdwg.mxu0
  %v2446 = vadd.f32 %v2236, %v2371
  %v2447 = vadd.f32 %v2237, %v2373
  %v2448 = vadd.f32 %v2238, %v2442
  %v2449 = vadd.f32 %v2239, %v2444
  %v2450 = vmul.f32 %v2446, 0.5
  %v2451 = vtanh.pop %v2450
  %v2452 = vadd.f32 %v2451, 1.0
  %v2453 = vmul.f32 %v2452, 0.5
  %v2454 = vmul.f32 %v2447, 0.5
  %v2455 = vtanh.pop %v2454
  %v2456 = vadd.f32 %v2455, 1.0
  %v2457 = vmul.f32 %v2456, 0.5
  %v2458 = vtanh.pop %v2448
  %v2459 = vmul.f32 %v2449, 0.5
  %v2460 = vtanh.pop %v2459
  %v2461 = vadd.f32 %v2460, 1.0
  %v2462 = vmul.f32 %v2461, 0.5
  %v2463 = vmul.f32 %v2457, %v1932
  %v2464 = vmul.f32 %v2453, %v2458
  %v2465 = vadd.f32 %v2463, %v2464
  %v2466 = vtanh.pop %v2465
  %v2467 = vmul.f32 %v2462, %v2466
  %v2468 = vld [vmem:[%s4] sm:$0xff]
  %v2469 = vld [vmem:[%s4 + $0x8] sm:$0xff]
  %v2470 = vld [vmem:[%s4 + $0x10] sm:$0xff]
  %v2471 = vld [vmem:[%s4 + $0x18] sm:$0xff]
  %v2472 = vld [vmem:[%s4 + $0x20] sm:$0xff]
  %v2473 = vld [vmem:[%s4 + $0x28] sm:$0xff]
  %v2474 = vld [vmem:[%s4 + $0x30] sm:$0xff]
  %v2475 = vld [vmem:[%s4 + $0x38] sm:$0xff]
  %v2476 = vld [vmem:[%s4 + $0x40] sm:$0xff]
  %v2477 = vld [vmem:[%s4 + $0x48] sm:$0xff]
  %v2478 = vld [vmem:[%s4 + $0x50] sm:$0xff]
  %v2479 = vld [vmem:[%s4 + $0x58] sm:$0xff]
  %v2480 = vld [vmem:[%s4 + $0x60] sm:$0xff]
  %v2481 = vld [vmem:[%s4 + $0x68] sm:$0xff]
  %v2482 = vld [vmem:[%s4 + $0x70] sm:$0xff]
  %v2483 = vld [vmem:[%s4 + $0x78] sm:$0xff]
  %v2484 = vld [vmem:[%s4 + $0x80] sm:$0xff]
  %v2485 = vld [vmem:[%s4 + $0x88] sm:$0xff]
  %v2486 = vld [vmem:[%s4 + $0x90] sm:$0xff]
  %v2487 = vld [vmem:[%s4 + $0x98] sm:$0xff]
  %v2488 = vld [vmem:[%s4 + $0xa0] sm:$0xff]
  %v2489 = vld [vmem:[%s4 + $0xa8] sm:$0xff]
  %v2490 = vld [vmem:[%s4 + $0xb0] sm:$0xff]
  %v2491 = vld [vmem:[%s4 + $0xb8] sm:$0xff]
  %v2492 = vld [vmem:[%s4 + $0xc0] sm:$0xff]
  %v2493 = vld [vmem:[%s4 + $0xc8] sm:$0xff]
  %v2494 = vld [vmem:[%s4 + $0xd0] sm:$0xff]
  %v2495 = vld [vmem:[%s4 + $0xd8] sm:$0xff]
  %v2496 = vld [vmem:[%s4 + $0xe0] sm:$0xff]
  %v2497 = vld [vmem:[%s4 + $0xe8] sm:$0xff]
  %v2498 = vld [vmem:[%s4 + $0xf0] sm:$0xff]
  %v2499 = vld [vmem:[%s4 + $0xf8] sm:$0xff]
  %v2500 = vld [vmem:[%s4 + $0x100] sm:$0xff]
  %v2501 = vld [vmem:[%s4 + $0x108] sm:$0xff]
  %v2502 = vld [vmem:[%s4 + $0x110] sm:$0xff]
  %v2503 = vld [vmem:[%s4 + $0x118] sm:$0xff]
  %v2504 = vld [vmem:[%s4 + $0x120] sm:$0xff]
  %v2505 = vld [vmem:[%s4 + $0x128] sm:$0xff]
  %v2506 = vld [vmem:[%s4 + $0x130] sm:$0xff]
  %v2507 = vld [vmem:[%s4 + $0x138] sm:$0xff]
  %v2508 = vld [vmem:[%s4 + $0x140] sm:$0xff]
  %v2509 = vld [vmem:[%s4 + $0x148] sm:$0xff]
  %v2510 = vld [vmem:[%s4 + $0x150] sm:$0xff]
  %v2511 = vld [vmem:[%s4 + $0x158] sm:$0xff]
  %v2512 = vld [vmem:[%s4 + $0x160] sm:$0xff]
  %v2513 = vld [vmem:[%s4 + $0x168] sm:$0xff]
  %v2514 = vld [vmem:[%s4 + $0x170] sm:$0xff]
  %v2515 = vld [vmem:[%s4 + $0x178] sm:$0xff]
  %v2516 = vld [vmem:[%s4 + $0x180] sm:$0xff]
  %v2517 = vld [vmem:[%s4 + $0x188] sm:$0xff]
  %v2518 = vld [vmem:[%s4 + $0x190] sm:$0xff]
  %v2519 = vld [vmem:[%s4 + $0x198] sm:$0xff]
  %v2520 = vld [vmem:[%s4 + $0x1a0] sm:$0xff]
  %v2521 = vld [vmem:[%s4 + $0x1a8] sm:$0xff]
  %v2522 = vld [vmem:[%s4 + $0x1b0] sm:$0xff]
  %v2523 = vld [vmem:[%s4 + $0x1b8] sm:$0xff]
  %v2524 = vld [vmem:[%s4 + $0x1c0] sm:$0xff]
  %v2525 = vld [vmem:[%s4 + $0x1c8] sm:$0xff]
  %v2526 = vld [vmem:[%s4 + $0x1d0] sm:$0xff]
  %v2527 = vld [vmem:[%s4 + $0x1d8] sm:$0xff]
  %v2528 = vld [vmem:[%s4 + $0x1e0] sm:$0xff]
  %v2529 = vld [vmem:[%s4 + $0x1e8] sm:$0xff]
  %v2530 = vld [vmem:[%s4 + $0x1f0] sm:$0xff]
  %v2531 = vld [vmem:[%s4 + $0x1f8] sm:$0xff]
  %v2532 = vld [vmem:[%s4 + $0x200] sm:$0xff]
  %v2533 = vld [vmem:[%s4 + $0x208] sm:$0xff]
  %v2534 = vld [vmem:[%s4 + $0x210] sm:$0xff]
  %v2535 = vld [vmem:[%s4 + $0x218] sm:$0xff]
  %v2536 = vld [vmem:[%s4 + $0x220] sm:$0xff]
  %v2537 = vld [vmem:[%s4 + $0x228] sm:$0xff]
  %v2538 = vld [vmem:[%s4 + $0x230] sm:$0xff]
  %v2539 = vld [vmem:[%s4 + $0x238] sm:$0xff]
  %v2540 = vld [vmem:[%s4 + $0x240] sm:$0xff]
  %v2541 = vld [vmem:[%s4 + $0x248] sm:$0xff]
  %v2542 = vld [vmem:[%s4 + $0x250] sm:$0xff]
  %v2543 = vld [vmem:[%s4 + $0x258] sm:$0xff]
  %v2544 = vld [vmem:[%s4 + $0x260] sm:$0xff]
  %v2545 = vld [vmem:[%s4 + $0x268] sm:$0xff]
  %v2546 = vld [vmem:[%s4 + $0x270] sm:$0xff]
  %v2547 = vld [vmem:[%s4 + $0x278] sm:$0xff]
  %v2548 = vld [vmem:[%s4 + $0x280] sm:$0xff]
  %v2549 = vld [vmem:[%s4 + $0x288] sm:$0xff]
  %v2550 = vld [vmem:[%s4 + $0x290] sm:$0xff]
  %v2551 = vld [vmem:[%s4 + $0x298] sm:$0xff]
  %v2552 = vld [vmem:[%s4 + $0x2a0] sm:$0xff]
  %v2553 = vld [vmem:[%s4 + $0x2a8] sm:$0xff]
  %v2554 = vld [vmem:[%s4 + $0x2b0] sm:$0xff]
  %v2555 = vld [vmem:[%s4 + $0x2b8] sm:$0xff]
  %v2556 = vld [vmem:[%s4 + $0x2c0] sm:$0xff]
  %v2557 = vld [vmem:[%s4 + $0x2c8] sm:$0xff]
  %v2558 = vld [vmem:[%s4 + $0x2d0] sm:$0xff]
  %v2559 = vld [vmem:[%s4 + $0x2d8] sm:$0xff]
  %v2560 = vld [vmem:[%s4 + $0x2e0] sm:$0xff]
  %v2561 = vld [vmem:[%s4 + $0x2e8] sm:$0xff]
  %v2562 = vld [vmem:[%s4 + $0x2f0] sm:$0xff]
  %v2563 = vld [vmem:[%s4 + $0x2f8] sm:$0xff]
  %v2564 = vld [vmem:[%s4 + $0x300] sm:$0xff]
  %v2565 = vld [vmem:[%s4 + $0x308] sm:$0xff]
  %v2566 = vld [vmem:[%s4 + $0x310] sm:$0xff]
  %v2567 = vld [vmem:[%s4 + $0x318] sm:$0xff]
  %v2568 = vld [vmem:[%s4 + $0x320] sm:$0xff]
  %v2569 = vld [vmem:[%s4 + $0x328] sm:$0xff]
  %v2570 = vld [vmem:[%s4 + $0x330] sm:$0xff]
  %v2571 = vld [vmem:[%s4 + $0x338] sm:$0xff]
  %v2572 = vld [vmem:[%s4 + $0x340] sm:$0xff]
  %v2573 = vld [vmem:[%s4 + $0x348] sm:$0xff]
  %v2574 = vld [vmem:[%s4 + $0x350] sm:$0xff]
  %v2575 = vld [vmem:[%s4 + $0x358] sm:$0xff]
  %v2576 = vld [vmem:[%s4 + $0x360] sm:$0xff]
  %v2577 = vld [vmem:[%s4 + $0x368] sm:$0xff]
  %v2578 = vld [vmem:[%s4 + $0x370] sm:$0xff]
  %v2579 = vld [vmem:[%s4 + $0x378] sm:$0xff]
  %v2580 = vld [vmem:[%s4 + $0x380] sm:$0xff]
  %v2581 = vld [vmem:[%s4 + $0x388] sm:$0xff]
  %v2582 = vld [vmem:[%s4 + $0x390] sm:$0xff]
  %v2583 = vld [vmem:[%s4 + $0x398] sm:$0xff]
  %v2584 = vld [vmem:[%s4 + $0x3a0] sm:$0xff]
  %v2585 = vld [vmem:[%s4 + $0x3a8] sm:$0xff]
  %v2586 = vld [vmem:[%s4 + $0x3b0] sm:$0xff]
  %v2587 = vld [vmem:[%s4 + $0x3b8] sm:$0xff]
  %v2588 = vld [vmem:[%s4 + $0x3c0] sm:$0xff]
  %v2589 = vld [vmem:[%s4 + $0x3c8] sm:$0xff]
  %v2590 = vld [vmem:[%s4 + $0x3d0] sm:$0xff]
  %v2591 = vld [vmem:[%s4 + $0x3d8] sm:$0xff]
  %v2592 = vld [vmem:[%s4 + $0x3e0] sm:$0xff]
  %v2593 = vld [vmem:[%s4 + $0x3e8] sm:$0xff]
  %v2594 = vld [vmem:[%s4 + $0x3f0] sm:$0xff]
  %v2595 = vld [vmem:[%s4 + $0x3f8] sm:$0xff]
  %2596 = vmatprep.subr.mxu0 %v2469
  %2597 = vmatpush1.msra.mxu0 %v2468
  %2598 = vmatprep.subr.mxu0 %v2473
  %2599 = vmatpush1.msra.mxu0 %v2472
  %2600 = vmatprep.subr.mxu0 %v2477
  %2601 = vmatpush1.msra.mxu0 %v2476
  %2602 = vmatprep.subr.mxu0 %v2481
  %2603 = vmatpush1.msra.mxu0 %v2480
  %2604 = vmatprep.subr.mxu0 %v2485
  %2605 = vmatpush1.msra.mxu0 %v2484
  %2606 = vmatprep.subr.mxu0 %v2489
  %2607 = vmatpush1.msra.mxu0 %v2488
  %2608 = vmatprep.subr.mxu0 %v2493
  %2609 = vmatpush1.msra.mxu0 %v2492
  %2610 = vmatprep.subr.mxu0 %v2497
  %2611 = vmatpush1.msra.mxu0 %v2496
  %2612 = vmatprep.subr.mxu0 %v2501
  %2613 = vmatpush1.msra.mxu0 %v2500
  %2614 = vmatprep.subr.mxu0 %v2505
  %2615 = vmatpush1.msra.mxu0 %v2504
  %2616 = vmatprep.subr.mxu0 %v2509
  %2617 = vmatpush1.msra.mxu0 %v2508
  %2618 = vmatprep.subr.mxu0 %v2513
  %2619 = vmatpush1.msra.mxu0 %v2512
  %2620 = vmatprep.subr.mxu0 %v2517
  %2621 = vmatpush1.msra.mxu0 %v2516
  %2622 = vmatprep.subr.mxu0 %v2521
  %2623 = vmatpush1.msra.mxu0 %v2520
  %2624 = vmatprep.subr.mxu0 %v2525
  %2625 = vmatpush1.msra.mxu0 %v2524
  %2626 = vmatprep.subr.mxu0 %v2529
  %2627 = vmatpush1.msra.mxu0 %v2528
  %2628 = vmatprep.subr.mxu0 %v2533
  %2629 = vmatpush1.msra.mxu0 %v2532
  %2630 = vmatprep.subr.mxu0 %v2537
  %2631 = vmatpush1.msra.mxu0 %v2536
  %2632 = vmatprep.subr.mxu0 %v2541
  %2633 = vmatpush1.msra.mxu0 %v2540
  %2634 = vmatprep.subr.mxu0 %v2545
  %2635 = vmatpush1.msra.mxu0 %v2544
  %2636 = vmatprep.subr.mxu0 %v2549
  %2637 = vmatpush1.msra.mxu0 %v2548
  %2638 = vmatprep.subr.mxu0 %v2553
  %2639 = vmatpush1.msra.mxu0 %v2552
  %2640 = vmatprep.subr.mxu0 %v2557
  %2641 = vmatpush1.msra.mxu0 %v2556
  %2642 = vmatprep.subr.mxu0 %v2561
  %2643 = vmatpush1.msra.mxu0 %v2560
  %2644 = vmatprep.subr.mxu0 %v2565
  %2645 = vmatpush1.msra.mxu0 %v2564
  %2646 = vmatprep.subr.mxu0 %v2569
  %2647 = vmatpush1.msra.mxu0 %v2568
  %2648 = vmatprep.subr.mxu0 %v2573
  %2649 = vmatpush1.msra.mxu0 %v2572
  %2650 = vmatprep.subr.mxu0 %v2577
  %2651 = vmatpush1.msra.mxu0 %v2576
  %2652 = vmatprep.subr.mxu0 %v2581
  %2653 = vmatpush1.msra.mxu0 %v2580
  %2654 = vmatprep.subr.mxu0 %v2585
  %2655 = vmatpush1.msra.mxu0 %v2584
  %2656 = vmatprep.subr.mxu0 %v2589
  %2657 = vmatpush1.msra.mxu0 %v2588
  %2658 = vmatprep.subr.mxu0 %v2593
  %2659 = vmatpush1.msra.mxu0 %v2592
  %2660 = vmatprep.mubr.f32.mxu0 %v2222
  %2661 = vmatmul.mubr.f32.gmra.mrb[0].mxu0 %v2467
  %v2662 = vpop.f32.mrb[0].mxu0
  %v2663 = vadd.f32 %v78, %v2662
  %v2664 = vpop.f32.mrb[0].mxu0
  %v2665 = vadd.f32 %v82, %v2664
  %2666 = vdwg.mxu0
  %2667 = vmatprep.subr.mxu0 %v2471
  %2668 = vmatpush1.msra.mxu0 %v2470
  %2669 = vmatprep.subr.mxu0 %v2475
  %2670 = vmatpush1.msra.mxu0 %v2474
  %2671 = vmatprep.subr.mxu0 %v2479
  %2672 = vmatpush1.msra.mxu0 %v2478
  %2673 = vmatprep.subr.mxu0 %v2483
  %2674 = vmatpush1.msra.mxu0 %v2482
  %2675 = vmatprep.subr.mxu0 %v2487
  %2676 = vmatpush1.msra.mxu0 %v2486
  %2677 = vmatprep.subr.mxu0 %v2491
  %2678 = vmatpush1.msra.mxu0 %v2490
  %2679 = vmatprep.subr.mxu0 %v2495
  %2680 = vmatpush1.msra.mxu0 %v2494
  %2681 = vmatprep.subr.mxu0 %v2499
  %2682 = vmatpush1.msra.mxu0 %v2498
  %2683 = vmatprep.subr.mxu0 %v2503
  %2684 = vmatpush1.msra.mxu0 %v2502
  %2685 = vmatprep.subr.mxu0 %v2507
  %2686 = vmatpush1.msra.mxu0 %v2506
  %2687 = vmatprep.subr.mxu0 %v2511
  %2688 = vmatpush1.msra.mxu0 %v2510
  %2689 = vmatprep.subr.mxu0 %v2515
  %2690 = vmatpush1.msra.mxu0 %v2514
  %2691 = vmatprep.subr.mxu0 %v2519
  %2692 = vmatpush1.msra.mxu0 %v2518
  %2693 = vmatprep.subr.mxu0 %v2523
  %2694 = vmatpush1.msra.mxu0 %v2522
  %2695 = vmatprep.subr.mxu0 %v2527
  %2696 = vmatpush1.msra.mxu0 %v2526
  %2697 = vmatprep.subr.mxu0 %v2531
  %2698 = vmatpush1.msra.mxu0 %v2530
  %2699 = vmatprep.subr.mxu0 %v2535
  %2700 = vmatpush1.msra.mxu0 %v2534
  %2701 = vmatprep.subr.mxu0 %v2539
  %2702 = vmatpush1.msra.mxu0 %v2538
  %2703 = vmatprep.subr.mxu0 %v2543
  %2704 = vmatpush1.msra.mxu0 %v2542
  %2705 = vmatprep.subr.mxu0 %v2547
  %2706 = vmatpush1.msra.mxu0 %v2546
  %2707 = vmatprep.subr.mxu0 %v2551
  %2708 = vmatpush1.msra.mxu0 %v2550
  %2709 = vmatprep.subr.mxu0 %v2555
  %2710 = vmatpush1.msra.mxu0 %v2554
  %2711 = vmatprep.subr.mxu0 %v2559
  %2712 = vmatpush1.msra.mxu0 %v2558
  %2713 = vmatprep.subr.mxu0 %v2563
  %2714 = vmatpush1.msra.mxu0 %v2562
  %2715 = vmatprep.subr.mxu0 %v2567
  %2716 = vmatpush1.msra.mxu0 %v2566
  %2717 = vmatprep.subr.mxu0 %v2571
  %2718 = vmatpush1.msra.mxu0 %v2570
  %2719 = vmatprep.subr.mxu0 %v2575
  %2720 = vmatpush1.msra.mxu0 %v2574
  %2721 = vmatprep.subr.mxu0 %v2579
  %2722 = vmatpush1.msra.mxu0 %v2578
  %2723 = vmatprep.subr.mxu0 %v2583
  %2724 = vmatpush1.msra.mxu0 %v2582
  %2725 = vmatprep.subr.mxu0 %v2587
  %2726 = vmatpush1.msra.mxu0 %v2586
  %2727 = vmatprep.subr.mxu0 %v2591
  %2728 = vmatpush1.msra.mxu0 %v2590
  %2729 = vmatprep.subr.mxu0 %v2595
  %2730 = vmatpush1.msra.mxu0 %v2594
  %2731 = vmatprep.mubr.f32.mxu0 %v2222
  %2732 = vmatmul.mubr.f32.gmra.mrb[0].mxu0 %v2467
  %v2733 = vpop.f32.mrb[0].mxu0
  %v2734 = vadd.f32 %v86, %v2733
  %v2735 = vpop.f32.mrb[0].mxu0
  %v2736 = vadd.f32 %v90, %v2735
  %2737 = vdwg.mxu0
  %v2738 = vmul.f32 %v2663, 0.5
  %v2739 = vtanh.pop %v2738
  %v2740 = vadd.f32 %v2739, 1.0
  %v2741 = vmul.f32 %v2740, 0.5
  %v2742 = vmul.f32 %v2665, 0.5
  %v2743 = vtanh.pop %v2742
  %v2744 = vadd.f32 %v2743, 1.0
  %v2745 = vmul.f32 %v2744, 0.5
  %v2746 = vtanh.pop %v2734
  %v2747 = vmul.f32 %v2736, 0.5
  %v2748 = vtanh.pop %v2747
  %v2749 = vadd.f32 %v2748, 1.0
  %v2750 = vmul.f32 %v2749, 0.5
  %v2751 = vmul.f32 %v2745, %v2220
  %v2752 = vmul.f32 %v2741, %v2746
  %v2753 = vadd.f32 %v2751, %v2752
  %v2754 = vtanh.pop %v2753
  %v2755 = vmul.f32 %v2750, %v2754
  %s2756 = scalar_lea.vmem [#allocation2], 32
  %2757 = vst [vmem:[%s2756] sm:$0xff] %v2755
  %s2758 = scalar_lea.vmem %s0, 40
  %v2759 = vld [vmem:[%s2758] sm:$0xff]
  %2761 = vset.pattern.permute.xlu0 0
  %2762 = vperm.xlu0 %2761, %v2759
  %v2763 = vpop.permute.xlu0 %2762
  %v2765 = vmul.f32 %v2763, %v34
  %v2766 = vmul.f32 %v2763, %v38
  %v2767 = vmul.f32 %v2763, %v42
  %v2768 = vmul.f32 %v2763, %v46
  %v2769 = vadd.f32 %v2765, %v56
  %v2770 = vadd.f32 %v2766, %v60
  %v2771 = vadd.f32 %v2767, %v64
  %v2772 = vadd.f32 %v2768, %v68
  %v2773 = vld [vmem:[%s3] sm:$0xff]
  %v2774 = vld [vmem:[%s3 + $0x8] sm:$0xff]
  %v2775 = vld [vmem:[%s3 + $0x10] sm:$0xff]
  %v2776 = vld [vmem:[%s3 + $0x18] sm:$0xff]
  %v2777 = vld [vmem:[%s3 + $0x20] sm:$0xff]
  %v2778 = vld [vmem:[%s3 + $0x28] sm:$0xff]
  %v2779 = vld [vmem:[%s3 + $0x30] sm:$0xff]
  %v2780 = vld [vmem:[%s3 + $0x38] sm:$0xff]
  %v2781 = vld [vmem:[%s3 + $0x40] sm:$0xff]
  %v2782 = vld [vmem:[%s3 + $0x48] sm:$0xff]
  %v2783 = vld [vmem:[%s3 + $0x50] sm:$0xff]
  %v2784 = vld [vmem:[%s3 + $0x58] sm:$0xff]
  %v2785 = vld [vmem:[%s3 + $0x60] sm:$0xff]
  %v2786 = vld [vmem:[%s3 + $0x68] sm:$0xff]
  %v2787 = vld [vmem:[%s3 + $0x70] sm:$0xff]
  %v2788 = vld [vmem:[%s3 + $0x78] sm:$0xff]
  %v2789 = vld [vmem:[%s3 + $0x80] sm:$0xff]
  %v2790 = vld [vmem:[%s3 + $0x88] sm:$0xff]
  %v2791 = vld [vmem:[%s3 + $0x90] sm:$0xff]
  %v2792 = vld [vmem:[%s3 + $0x98] sm:$0xff]
  %v2793 = vld [vmem:[%s3 + $0xa0] sm:$0xff]
  %v2794 = vld [vmem:[%s3 + $0xa8] sm:$0xff]
  %v2795 = vld [vmem:[%s3 + $0xb0] sm:$0xff]
  %v2796 = vld [vmem:[%s3 + $0xb8] sm:$0xff]
  %v2797 = vld [vmem:[%s3 + $0xc0] sm:$0xff]
  %v2798 = vld [vmem:[%s3 + $0xc8] sm:$0xff]
  %v2799 = vld [vmem:[%s3 + $0xd0] sm:$0xff]
  %v2800 = vld [vmem:[%s3 + $0xd8] sm:$0xff]
  %v2801 = vld [vmem:[%s3 + $0xe0] sm:$0xff]
  %v2802 = vld [vmem:[%s3 + $0xe8] sm:$0xff]
  %v2803 = vld [vmem:[%s3 + $0xf0] sm:$0xff]
  %v2804 = vld [vmem:[%s3 + $0xf8] sm:$0xff]
  %v2805 = vld [vmem:[%s3 + $0x100] sm:$0xff]
  %v2806 = vld [vmem:[%s3 + $0x108] sm:$0xff]
  %v2807 = vld [vmem:[%s3 + $0x110] sm:$0xff]
  %v2808 = vld [vmem:[%s3 + $0x118] sm:$0xff]
  %v2809 = vld [vmem:[%s3 + $0x120] sm:$0xff]
  %v2810 = vld [vmem:[%s3 + $0x128] sm:$0xff]
  %v2811 = vld [vmem:[%s3 + $0x130] sm:$0xff]
  %v2812 = vld [vmem:[%s3 + $0x138] sm:$0xff]
  %v2813 = vld [vmem:[%s3 + $0x140] sm:$0xff]
  %v2814 = vld [vmem:[%s3 + $0x148] sm:$0xff]
  %v2815 = vld [vmem:[%s3 + $0x150] sm:$0xff]
  %v2816 = vld [vmem:[%s3 + $0x158] sm:$0xff]
  %v2817 = vld [vmem:[%s3 + $0x160] sm:$0xff]
  %v2818 = vld [vmem:[%s3 + $0x168] sm:$0xff]
  %v2819 = vld [vmem:[%s3 + $0x170] sm:$0xff]
  %v2820 = vld [vmem:[%s3 + $0x178] sm:$0xff]
  %v2821 = vld [vmem:[%s3 + $0x180] sm:$0xff]
  %v2822 = vld [vmem:[%s3 + $0x188] sm:$0xff]
  %v2823 = vld [vmem:[%s3 + $0x190] sm:$0xff]
  %v2824 = vld [vmem:[%s3 + $0x198] sm:$0xff]
  %v2825 = vld [vmem:[%s3 + $0x1a0] sm:$0xff]
  %v2826 = vld [vmem:[%s3 + $0x1a8] sm:$0xff]
  %v2827 = vld [vmem:[%s3 + $0x1b0] sm:$0xff]
  %v2828 = vld [vmem:[%s3 + $0x1b8] sm:$0xff]
  %v2829 = vld [vmem:[%s3 + $0x1c0] sm:$0xff]
  %v2830 = vld [vmem:[%s3 + $0x1c8] sm:$0xff]
  %v2831 = vld [vmem:[%s3 + $0x1d0] sm:$0xff]
  %v2832 = vld [vmem:[%s3 + $0x1d8] sm:$0xff]
  %v2833 = vld [vmem:[%s3 + $0x1e0] sm:$0xff]
  %v2834 = vld [vmem:[%s3 + $0x1e8] sm:$0xff]
  %v2835 = vld [vmem:[%s3 + $0x1f0] sm:$0xff]
  %v2836 = vld [vmem:[%s3 + $0x1f8] sm:$0xff]
  %2837 = vmatprep.subr.mxu0 %v2774
  %2838 = vmatpush1.msra.mxu0 %v2773
  %2839 = vmatprep.subr.mxu0 %v2778
  %2840 = vmatpush1.msra.mxu0 %v2777
  %2841 = vmatprep.subr.mxu0 %v2782
  %2842 = vmatpush1.msra.mxu0 %v2781
  %2843 = vmatprep.subr.mxu0 %v2786
  %2844 = vmatpush1.msra.mxu0 %v2785
  %2845 = vmatprep.subr.mxu0 %v2790
  %2846 = vmatpush1.msra.mxu0 %v2789
  %2847 = vmatprep.subr.mxu0 %v2794
  %2848 = vmatpush1.msra.mxu0 %v2793
  %2849 = vmatprep.subr.mxu0 %v2798
  %2850 = vmatpush1.msra.mxu0 %v2797
  %2851 = vmatprep.subr.mxu0 %v2802
  %2852 = vmatpush1.msra.mxu0 %v2801
  %2853 = vmatprep.subr.mxu0 %v2806
  %2854 = vmatpush1.msra.mxu0 %v2805
  %2855 = vmatprep.subr.mxu0 %v2810
  %2856 = vmatpush1.msra.mxu0 %v2809
  %2857 = vmatprep.subr.mxu0 %v2814
  %2858 = vmatpush1.msra.mxu0 %v2813
  %2859 = vmatprep.subr.mxu0 %v2818
  %2860 = vmatpush1.msra.mxu0 %v2817
  %2861 = vmatprep.subr.mxu0 %v2822
  %2862 = vmatpush1.msra.mxu0 %v2821
  %2863 = vmatprep.subr.mxu0 %v2826
  %2864 = vmatpush1.msra.mxu0 %v2825
  %2865 = vmatprep.subr.mxu0 %v2830
  %2866 = vmatpush1.msra.mxu0 %v2829
  %2867 = vmatprep.subr.mxu0 %v2834
  %2868 = vmatpush1.msra.mxu0 %v2833
  %2869 = vmatprep.subr.mxu0 0.0
  %2870 = vmatpush1.msra.mxu0 0.0
  %2871 = vmatprep.subr.mxu0 0.0
  %2872 = vmatpush1.msra.mxu0 0.0
  %2873 = vmatprep.subr.mxu0 0.0
  %2874 = vmatpush1.msra.mxu0 0.0
  %2875 = vmatprep.subr.mxu0 0.0
  %2876 = vmatpush1.msra.mxu0 0.0
  %2877 = vmatprep.subr.mxu0 0.0
  %2878 = vmatpush1.msra.mxu0 0.0
  %2879 = vmatprep.subr.mxu0 0.0
  %2880 = vmatpush1.msra.mxu0 0.0
  %2881 = vmatprep.subr.mxu0 0.0
  %2882 = vmatpush1.msra.mxu0 0.0
  %2883 = vmatprep.subr.mxu0 0.0
  %2884 = vmatpush1.msra.mxu0 0.0
  %2885 = vmatprep.subr.mxu0 0.0
  %2886 = vmatpush1.msra.mxu0 0.0
  %2887 = vmatprep.subr.mxu0 0.0
  %2888 = vmatpush1.msra.mxu0 0.0
  %2889 = vmatprep.subr.mxu0 0.0
  %2890 = vmatpush1.msra.mxu0 0.0
  %2891 = vmatprep.subr.mxu0 0.0
  %2892 = vmatpush1.msra.mxu0 0.0
  %2893 = vmatprep.subr.mxu0 0.0
  %2894 = vmatpush1.msra.mxu0 0.0
  %2895 = vmatprep.subr.mxu0 0.0
  %2896 = vmatpush1.msra.mxu0 0.0
  %2897 = vmatprep.subr.mxu0 0.0
  %2898 = vmatpush1.msra.mxu0 0.0
  %2899 = vmatprep.subr.mxu0 0.0
  %2900 = vmatpush1.msra.mxu0 0.0
  %2901 = vmatprep.mubr.f32.mxu0 0.0
  %2902 = vmatmul.mubr.f32.gmra.mrb[0].mxu0 %v2467
  %v2903 = vpop.f32.mrb[0].mxu0
  %v2904 = vadd.f32 0.0, %v2903
  %v2905 = vpop.f32.mrb[0].mxu0
  %v2906 = vadd.f32 0.0, %v2905
  %2907 = vdwg.mxu0
  %2908 = vmatprep.subr.mxu0 %v2776
  %2909 = vmatpush1.msra.mxu0 %v2775
  %2910 = vmatprep.subr.mxu0 %v2780
  %2911 = vmatpush1.msra.mxu0 %v2779
  %2912 = vmatprep.subr.mxu0 %v2784
  %2913 = vmatpush1.msra.mxu0 %v2783
  %2914 = vmatprep.subr.mxu0 %v2788
  %2915 = vmatpush1.msra.mxu0 %v2787
  %2916 = vmatprep.subr.mxu0 %v2792
  %2917 = vmatpush1.msra.mxu0 %v2791
  %2918 = vmatprep.subr.mxu0 %v2796
  %2919 = vmatpush1.msra.mxu0 %v2795
  %2920 = vmatprep.subr.mxu0 %v2800
  %2921 = vmatpush1.msra.mxu0 %v2799
  %2922 = vmatprep.subr.mxu0 %v2804
  %2923 = vmatpush1.msra.mxu0 %v2803
  %2924 = vmatprep.subr.mxu0 %v2808
  %2925 = vmatpush1.msra.mxu0 %v2807
  %2926 = vmatprep.subr.mxu0 %v2812
  %2927 = vmatpush1.msra.mxu0 %v2811
  %2928 = vmatprep.subr.mxu0 %v2816
  %2929 = vmatpush1.msra.mxu0 %v2815
  %2930 = vmatprep.subr.mxu0 %v2820
  %2931 = vmatpush1.msra.mxu0 %v2819
  %2932 = vmatprep.subr.mxu0 %v2824
  %2933 = vmatpush1.msra.mxu0 %v2823
  %2934 = vmatprep.subr.mxu0 %v2828
  %2935 = vmatpush1.msra.mxu0 %v2827
  %2936 = vmatprep.subr.mxu0 %v2832
  %2937 = vmatpush1.msra.mxu0 %v2831
  %2938 = vmatprep.subr.mxu0 %v2836
  %2939 = vmatpush1.msra.mxu0 %v2835
  %2940 = vmatprep.subr.mxu0 0.0
  %2941 = vmatpush1.msra.mxu0 0.0
  %2942 = vmatprep.subr.mxu0 0.0
  %2943 = vmatpush1.msra.mxu0 0.0
  %2944 = vmatprep.subr.mxu0 0.0
  %2945 = vmatpush1.msra.mxu0 0.0
  %2946 = vmatprep.subr.mxu0 0.0
  %2947 = vmatpush1.msra.mxu0 0.0
  %2948 = vmatprep.subr.mxu0 0.0
  %2949 = vmatpush1.msra.mxu0 0.0
  %2950 = vmatprep.subr.mxu0 0.0
  %2951 = vmatpush1.msra.mxu0 0.0
  %2952 = vmatprep.subr.mxu0 0.0
  %2953 = vmatpush1.msra.mxu0 0.0
  %2954 = vmatprep.subr.mxu0 0.0
  %2955 = vmatpush1.msra.mxu0 0.0
  %2956 = vmatprep.subr.mxu0 0.0
  %2957 = vmatpush1.msra.mxu0 0.0
  %2958 = vmatprep.subr.mxu0 0.0
  %2959 = vmatpush1.msra.mxu0 0.0
  %2960 = vmatprep.subr.mxu0 0.0
  %2961 = vmatpush1.msra.mxu0 0.0
  %2962 = vmatprep.subr.mxu0 0.0
  %2963 = vmatpush1.msra.mxu0 0.0
  %2964 = vmatprep.subr.mxu0 0.0
  %2965 = vmatpush1.msra.mxu0 0.0
  %2966 = vmatprep.subr.mxu0 0.0
  %2967 = vmatpush1.msra.mxu0 0.0
  %2968 = vmatprep.subr.mxu0 0.0
  %2969 = vmatpush1.msra.mxu0 0.0
  %2970 = vmatprep.subr.mxu0 0.0
  %2971 = vmatpush1.msra.mxu0 0.0
  %2972 = vmatprep.mubr.f32.mxu0 0.0
  %2973 = vmatmul.mubr.f32.gmra.mrb[0].mxu0 %v2467
  %v2974 = vpop.f32.mrb[0].mxu0
  %v2975 = vadd.f32 0.0, %v2974
  %v2976 = vpop.f32.mrb[0].mxu0
  %v2977 = vadd.f32 0.0, %v2976
  %2978 = vdwg.mxu0
  %v2979 = vadd.f32 %v2769, %v2904
  %v2980 = vadd.f32 %v2770, %v2906
  %v2981 = vadd.f32 %v2771, %v2975
  %v2982 = vadd.f32 %v2772, %v2977
  %v2983 = vmul.f32 %v2979, 0.5
  %v2984 = vtanh.pop %v2983
  %v2985 = vadd.f32 %v2984, 1.0
  %v2986 = vmul.f32 %v2985, 0.5
  %v2987 = vmul.f32 %v2980, 0.5
  %v2988 = vtanh.pop %v2987
  %v2989 = vadd.f32 %v2988, 1.0
  %v2990 = vmul.f32 %v2989, 0.5
  %v2991 = vtanh.pop %v2981
  %v2992 = vmul.f32 %v2982, 0.5
  %v2993 = vtanh.pop %v2992
  %v2994 = vadd.f32 %v2993, 1.0
  %v2995 = vmul.f32 %v2994, 0.5
  %v2996 = vmul.f32 %v2990, %v2465
  %v2997 = vmul.f32 %v2986, %v2991
  %v2998 = vadd.f32 %v2996, %v2997
  %v2999 = vtanh.pop %v2998
  %v3000 = vmul.f32 %v2995, %v2999
  %v3001 = vld [vmem:[%s4] sm:$0xff]
  %v3002 = vld [vmem:[%s4 + $0x8] sm:$0xff]
  %v3003 = vld [vmem:[%s4 + $0x10] sm:$0xff]
  %v3004 = vld [vmem:[%s4 + $0x18] sm:$0xff]
  %v3005 = vld [vmem:[%s4 + $0x20] sm:$0xff]
  %v3006 = vld [vmem:[%s4 + $0x28] sm:$0xff]
  %v3007 = vld [vmem:[%s4 + $0x30] sm:$0xff]
  %v3008 = vld [vmem:[%s4 + $0x38] sm:$0xff]
  %v3009 = vld [vmem:[%s4 + $0x40] sm:$0xff]
  %v3010 = vld [vmem:[%s4 + $0x48] sm:$0xff]
  %v3011 = vld [vmem:[%s4 + $0x50] sm:$0xff]
  %v3012 = vld [vmem:[%s4 + $0x58] sm:$0xff]
  %v3013 = vld [vmem:[%s4 + $0x60] sm:$0xff]
  %v3014 = vld [vmem:[%s4 + $0x68] sm:$0xff]
  %v3015 = vld [vmem:[%s4 + $0x70] sm:$0xff]
  %v3016 = vld [vmem:[%s4 + $0x78] sm:$0xff]
  %v3017 = vld [vmem:[%s4 + $0x80] sm:$0xff]
  %v3018 = vld [vmem:[%s4 + $0x88] sm:$0xff]
  %v3019 = vld [vmem:[%s4 + $0x90] sm:$0xff]
  %v3020 = vld [vmem:[%s4 + $0x98] sm:$0xff]
  %v3021 = vld [vmem:[%s4 + $0xa0] sm:$0xff]
  %v3022 = vld [vmem:[%s4 + $0xa8] sm:$0xff]
  %v3023 = vld [vmem:[%s4 + $0xb0] sm:$0xff]
  %v3024 = vld [vmem:[%s4 + $0xb8] sm:$0xff]
  %v3025 = vld [vmem:[%s4 + $0xc0] sm:$0xff]
  %v3026 = vld [vmem:[%s4 + $0xc8] sm:$0xff]
  %v3027 = vld [vmem:[%s4 + $0xd0] sm:$0xff]
  %v3028 = vld [vmem:[%s4 + $0xd8] sm:$0xff]
  %v3029 = vld [vmem:[%s4 + $0xe0] sm:$0xff]
  %v3030 = vld [vmem:[%s4 + $0xe8] sm:$0xff]
  %v3031 = vld [vmem:[%s4 + $0xf0] sm:$0xff]
  %v3032 = vld [vmem:[%s4 + $0xf8] sm:$0xff]
  %v3033 = vld [vmem:[%s4 + $0x100] sm:$0xff]
  %v3034 = vld [vmem:[%s4 + $0x108] sm:$0xff]
  %v3035 = vld [vmem:[%s4 + $0x110] sm:$0xff]
  %v3036 = vld [vmem:[%s4 + $0x118] sm:$0xff]
  %v3037 = vld [vmem:[%s4 + $0x120] sm:$0xff]
  %v3038 = vld [vmem:[%s4 + $0x128] sm:$0xff]
  %v3039 = vld [vmem:[%s4 + $0x130] sm:$0xff]
  %v3040 = vld [vmem:[%s4 + $0x138] sm:$0xff]
  %v3041 = vld [vmem:[%s4 + $0x140] sm:$0xff]
  %v3042 = vld [vmem:[%s4 + $0x148] sm:$0xff]
  %v3043 = vld [vmem:[%s4 + $0x150] sm:$0xff]
  %v3044 = vld [vmem:[%s4 + $0x158] sm:$0xff]
  %v3045 = vld [vmem:[%s4 + $0x160] sm:$0xff]
  %v3046 = vld [vmem:[%s4 + $0x168] sm:$0xff]
  %v3047 = vld [vmem:[%s4 + $0x170] sm:$0xff]
  %v3048 = vld [vmem:[%s4 + $0x178] sm:$0xff]
  %v3049 = vld [vmem:[%s4 + $0x180] sm:$0xff]
  %v3050 = vld [vmem:[%s4 + $0x188] sm:$0xff]
  %v3051 = vld [vmem:[%s4 + $0x190] sm:$0xff]
  %v3052 = vld [vmem:[%s4 + $0x198] sm:$0xff]
  %v3053 = vld [vmem:[%s4 + $0x1a0] sm:$0xff]
  %v3054 = vld [vmem:[%s4 + $0x1a8] sm:$0xff]
  %v3055 = vld [vmem:[%s4 + $0x1b0] sm:$0xff]
  %v3056 = vld [vmem:[%s4 + $0x1b8] sm:$0xff]
  %v3057 = vld [vmem:[%s4 + $0x1c0] sm:$0xff]
  %v3058 = vld [vmem:[%s4 + $0x1c8] sm:$0xff]
  %v3059 = vld [vmem:[%s4 + $0x1d0] sm:$0xff]
  %v3060 = vld [vmem:[%s4 + $0x1d8] sm:$0xff]
  %v3061 = vld [vmem:[%s4 + $0x1e0] sm:$0xff]
  %v3062 = vld [vmem:[%s4 + $0x1e8] sm:$0xff]
  %v3063 = vld [vmem:[%s4 + $0x1f0] sm:$0xff]
  %v3064 = vld [vmem:[%s4 + $0x1f8] sm:$0xff]
  %v3065 = vld [vmem:[%s4 + $0x200] sm:$0xff]
  %v3066 = vld [vmem:[%s4 + $0x208] sm:$0xff]
  %v3067 = vld [vmem:[%s4 + $0x210] sm:$0xff]
  %v3068 = vld [vmem:[%s4 + $0x218] sm:$0xff]
  %v3069 = vld [vmem:[%s4 + $0x220] sm:$0xff]
  %v3070 = vld [vmem:[%s4 + $0x228] sm:$0xff]
  %v3071 = vld [vmem:[%s4 + $0x230] sm:$0xff]
  %v3072 = vld [vmem:[%s4 + $0x238] sm:$0xff]
  %v3073 = vld [vmem:[%s4 + $0x240] sm:$0xff]
  %v3074 = vld [vmem:[%s4 + $0x248] sm:$0xff]
  %v3075 = vld [vmem:[%s4 + $0x250] sm:$0xff]
  %v3076 = vld [vmem:[%s4 + $0x258] sm:$0xff]
  %v3077 = vld [vmem:[%s4 + $0x260] sm:$0xff]
  %v3078 = vld [vmem:[%s4 + $0x268] sm:$0xff]
  %v3079 = vld [vmem:[%s4 + $0x270] sm:$0xff]
  %v3080 = vld [vmem:[%s4 + $0x278] sm:$0xff]
  %v3081 = vld [vmem:[%s4 + $0x280] sm:$0xff]
  %v3082 = vld [vmem:[%s4 + $0x288] sm:$0xff]
  %v3083 = vld [vmem:[%s4 + $0x290] sm:$0xff]
  %v3084 = vld [vmem:[%s4 + $0x298] sm:$0xff]
  %v3085 = vld [vmem:[%s4 + $0x2a0] sm:$0xff]
  %v3086 = vld [vmem:[%s4 + $0x2a8] sm:$0xff]
  %v3087 = vld [vmem:[%s4 + $0x2b0] sm:$0xff]
  %v3088 = vld [vmem:[%s4 + $0x2b8] sm:$0xff]
  %v3089 = vld [vmem:[%s4 + $0x2c0] sm:$0xff]
  %v3090 = vld [vmem:[%s4 + $0x2c8] sm:$0xff]
  %v3091 = vld [vmem:[%s4 + $0x2d0] sm:$0xff]
  %v3092 = vld [vmem:[%s4 + $0x2d8] sm:$0xff]
  %v3093 = vld [vmem:[%s4 + $0x2e0] sm:$0xff]
  %v3094 = vld [vmem:[%s4 + $0x2e8] sm:$0xff]
  %v3095 = vld [vmem:[%s4 + $0x2f0] sm:$0xff]
  %v3096 = vld [vmem:[%s4 + $0x2f8] sm:$0xff]
  %v3097 = vld [vmem:[%s4 + $0x300] sm:$0xff]
  %v3098 = vld [vmem:[%s4 + $0x308] sm:$0xff]
  %v3099 = vld [vmem:[%s4 + $0x310] sm:$0xff]
  %v3100 = vld [vmem:[%s4 + $0x318] sm:$0xff]
  %v3101 = vld [vmem:[%s4 + $0x320] sm:$0xff]
  %v3102 = vld [vmem:[%s4 + $0x328] sm:$0xff]
  %v3103 = vld [vmem:[%s4 + $0x330] sm:$0xff]
  %v3104 = vld [vmem:[%s4 + $0x338] sm:$0xff]
  %v3105 = vld [vmem:[%s4 + $0x340] sm:$0xff]
  %v3106 = vld [vmem:[%s4 + $0x348] sm:$0xff]
  %v3107 = vld [vmem:[%s4 + $0x350] sm:$0xff]
  %v3108 = vld [vmem:[%s4 + $0x358] sm:$0xff]
  %v3109 = vld [vmem:[%s4 + $0x360] sm:$0xff]
  %v3110 = vld [vmem:[%s4 + $0x368] sm:$0xff]
  %v3111 = vld [vmem:[%s4 + $0x370] sm:$0xff]
  %v3112 = vld [vmem:[%s4 + $0x378] sm:$0xff]
  %v3113 = vld [vmem:[%s4 + $0x380] sm:$0xff]
  %v3114 = vld [vmem:[%s4 + $0x388] sm:$0xff]
  %v3115 = vld [vmem:[%s4 + $0x390] sm:$0xff]
  %v3116 = vld [vmem:[%s4 + $0x398] sm:$0xff]
  %v3117 = vld [vmem:[%s4 + $0x3a0] sm:$0xff]
  %v3118 = vld [vmem:[%s4 + $0x3a8] sm:$0xff]
  %v3119 = vld [vmem:[%s4 + $0x3b0] sm:$0xff]
  %v3120 = vld [vmem:[%s4 + $0x3b8] sm:$0xff]
  %v3121 = vld [vmem:[%s4 + $0x3c0] sm:$0xff]
  %v3122 = vld [vmem:[%s4 + $0x3c8] sm:$0xff]
  %v3123 = vld [vmem:[%s4 + $0x3d0] sm:$0xff]
  %v3124 = vld [vmem:[%s4 + $0x3d8] sm:$0xff]
  %v3125 = vld [vmem:[%s4 + $0x3e0] sm:$0xff]
  %v3126 = vld [vmem:[%s4 + $0x3e8] sm:$0xff]
  %v3127 = vld [vmem:[%s4 + $0x3f0] sm:$0xff]
  %v3128 = vld [vmem:[%s4 + $0x3f8] sm:$0xff]
  %3129 = vmatprep.subr.mxu0 %v3002
  %3130 = vmatpush1.msra.mxu0 %v3001
  %3131 = vmatprep.subr.mxu0 %v3006
  %3132 = vmatpush1.msra.mxu0 %v3005
  %3133 = vmatprep.subr.mxu0 %v3010
  %3134 = vmatpush1.msra.mxu0 %v3009
  %3135 = vmatprep.subr.mxu0 %v3014
  %3136 = vmatpush1.msra.mxu0 %v3013
  %3137 = vmatprep.subr.mxu0 %v3018
  %3138 = vmatpush1.msra.mxu0 %v3017
  %3139 = vmatprep.subr.mxu0 %v3022
  %3140 = vmatpush1.msra.mxu0 %v3021
  %3141 = vmatprep.subr.mxu0 %v3026
  %3142 = vmatpush1.msra.mxu0 %v3025
  %3143 = vmatprep.subr.mxu0 %v3030
  %3144 = vmatpush1.msra.mxu0 %v3029
  %3145 = vmatprep.subr.mxu0 %v3034
  %3146 = vmatpush1.msra.mxu0 %v3033
  %3147 = vmatprep.subr.mxu0 %v3038
  %3148 = vmatpush1.msra.mxu0 %v3037
  %3149 = vmatprep.subr.mxu0 %v3042
  %3150 = vmatpush1.msra.mxu0 %v3041
  %3151 = vmatprep.subr.mxu0 %v3046
  %3152 = vmatpush1.msra.mxu0 %v3045
  %3153 = vmatprep.subr.mxu0 %v3050
  %3154 = vmatpush1.msra.mxu0 %v3049
  %3155 = vmatprep.subr.mxu0 %v3054
  %3156 = vmatpush1.msra.mxu0 %v3053
  %3157 = vmatprep.subr.mxu0 %v3058
  %3158 = vmatpush1.msra.mxu0 %v3057
  %3159 = vmatprep.subr.mxu0 %v3062
  %3160 = vmatpush1.msra.mxu0 %v3061
  %3161 = vmatprep.subr.mxu0 %v3066
  %3162 = vmatpush1.msra.mxu0 %v3065
  %3163 = vmatprep.subr.mxu0 %v3070
  %3164 = vmatpush1.msra.mxu0 %v3069
  %3165 = vmatprep.subr.mxu0 %v3074
  %3166 = vmatpush1.msra.mxu0 %v3073
  %3167 = vmatprep.subr.mxu0 %v3078
  %3168 = vmatpush1.msra.mxu0 %v3077
  %3169 = vmatprep.subr.mxu0 %v3082
  %3170 = vmatpush1.msra.mxu0 %v3081
  %3171 = vmatprep.subr.mxu0 %v3086
  %3172 = vmatpush1.msra.mxu0 %v3085
  %3173 = vmatprep.subr.mxu0 %v3090
  %3174 = vmatpush1.msra.mxu0 %v3089
  %3175 = vmatprep.subr.mxu0 %v3094
  %3176 = vmatpush1.msra.mxu0 %v3093
  %3177 = vmatprep.subr.mxu0 %v3098
  %3178 = vmatpush1.msra.mxu0 %v3097
  %3179 = vmatprep.subr.mxu0 %v3102
  %3180 = vmatpush1.msra.mxu0 %v3101
  %3181 = vmatprep.subr.mxu0 %v3106
  %3182 = vmatpush1.msra.mxu0 %v3105
  %3183 = vmatprep.subr.mxu0 %v3110
  %3184 = vmatpush1.msra.mxu0 %v3109
  %3185 = vmatprep.subr.mxu0 %v3114
  %3186 = vmatpush1.msra.mxu0 %v3113
  %3187 = vmatprep.subr.mxu0 %v3118
  %3188 = vmatpush1.msra.mxu0 %v3117
  %3189 = vmatprep.subr.mxu0 %v3122
  %3190 = vmatpush1.msra.mxu0 %v3121
  %3191 = vmatprep.subr.mxu0 %v3126
  %3192 = vmatpush1.msra.mxu0 %v3125
  %3193 = vmatprep.mubr.f32.mxu0 %v2755
  %3194 = vmatmul.mubr.f32.gmra.mrb[0].mxu0 %v3000
  %v3195 = vpop.f32.mrb[0].mxu0
  %v3196 = vadd.f32 %v78, %v3195
  %v3197 = vpop.f32.mrb[0].mxu0
  %v3198 = vadd.f32 %v82, %v3197
  %3199 = vdwg.mxu0
  %3200 = vmatprep.subr.mxu0 %v3004
  %3201 = vmatpush1.msra.mxu0 %v3003
  %3202 = vmatprep.subr.mxu0 %v3008
  %3203 = vmatpush1.msra.mxu0 %v3007
  %3204 = vmatprep.subr.mxu0 %v3012
  %3205 = vmatpush1.msra.mxu0 %v3011
  %3206 = vmatprep.subr.mxu0 %v3016
  %3207 = vmatpush1.msra.mxu0 %v3015
  %3208 = vmatprep.subr.mxu0 %v3020
  %3209 = vmatpush1.msra.mxu0 %v3019
  %3210 = vmatprep.subr.mxu0 %v3024
  %3211 = vmatpush1.msra.mxu0 %v3023
  %3212 = vmatprep.subr.mxu0 %v3028
  %3213 = vmatpush1.msra.mxu0 %v3027
  %3214 = vmatprep.subr.mxu0 %v3032
  %3215 = vmatpush1.msra.mxu0 %v3031
  %3216 = vmatprep.subr.mxu0 %v3036
  %3217 = vmatpush1.msra.mxu0 %v3035
  %3218 = vmatprep.subr.mxu0 %v3040
  %3219 = vmatpush1.msra.mxu0 %v3039
  %3220 = vmatprep.subr.mxu0 %v3044
  %3221 = vmatpush1.msra.mxu0 %v3043
  %3222 = vmatprep.subr.mxu0 %v3048
  %3223 = vmatpush1.msra.mxu0 %v3047
  %3224 = vmatprep.subr.mxu0 %v3052
  %3225 = vmatpush1.msra.mxu0 %v3051
  %3226 = vmatprep.subr.mxu0 %v3056
  %3227 = vmatpush1.msra.mxu0 %v3055
  %3228 = vmatprep.subr.mxu0 %v3060
  %3229 = vmatpush1.msra.mxu0 %v3059
  %3230 = vmatprep.subr.mxu0 %v3064
  %3231 = vmatpush1.msra.mxu0 %v3063
  %3232 = vmatprep.subr.mxu0 %v3068
  %3233 = vmatpush1.msra.mxu0 %v3067
  %3234 = vmatprep.subr.mxu0 %v3072
  %3235 = vmatpush1.msra.mxu0 %v3071
  %3236 = vmatprep.subr.mxu0 %v3076
  %3237 = vmatpush1.msra.mxu0 %v3075
  %3238 = vmatprep.subr.mxu0 %v3080
  %3239 = vmatpush1.msra.mxu0 %v3079
  %3240 = vmatprep.subr.mxu0 %v3084
  %3241 = vmatpush1.msra.mxu0 %v3083
  %3242 = vmatprep.subr.mxu0 %v3088
  %3243 = vmatpush1.msra.mxu0 %v3087
  %3244 = vmatprep.subr.mxu0 %v3092
  %3245 = vmatpush1.msra.mxu0 %v3091
  %3246 = vmatprep.subr.mxu0 %v3096
  %3247 = vmatpush1.msra.mxu0 %v3095
  %3248 = vmatprep.subr.mxu0 %v3100
  %3249 = vmatpush1.msra.mxu0 %v3099
  %3250 = vmatprep.subr.mxu0 %v3104
  %3251 = vmatpush1.msra.mxu0 %v3103
  %3252 = vmatprep.subr.mxu0 %v3108
  %3253 = vmatpush1.msra.mxu0 %v3107
  %3254 = vmatprep.subr.mxu0 %v3112
  %3255 = vmatpush1.msra.mxu0 %v3111
  %3256 = vmatprep.subr.mxu0 %v3116
  %3257 = vmatpush1.msra.mxu0 %v3115
  %3258 = vmatprep.subr.mxu0 %v3120
  %3259 = vmatpush1.msra.mxu0 %v3119
  %3260 = vmatprep.subr.mxu0 %v3124
  %3261 = vmatpush1.msra.mxu0 %v3123
  %3262 = vmatprep.subr.mxu0 %v3128
  %3263 = vmatpush1.msra.mxu0 %v3127
  %3264 = vmatprep.mubr.f32.mxu0 %v2755
  %3265 = vmatmul.mubr.f32.gmra.mrb[0].mxu0 %v3000
  %v3266 = vpop.f32.mrb[0].mxu0
  %v3267 = vadd.f32 %v86, %v3266
  %v3268 = vpop.f32.mrb[0].mxu0
  %v3269 = vadd.f32 %v90, %v3268
  %3270 = vdwg.mxu0
  %v3271 = vmul.f32 %v3196, 0.5
  %v3272 = vtanh.pop %v3271
  %v3273 = vadd.f32 %v3272, 1.0
  %v3274 = vmul.f32 %v3273, 0.5
  %v3275 = vmul.f32 %v3198, 0.5
  %v3276 = vtanh.pop %v3275
  %v3277 = vadd.f32 %v3276, 1.0
  %v3278 = vmul.f32 %v3277, 0.5
  %v3279 = vtanh.pop %v3267
  %v3280 = vmul.f32 %v3269, 0.5
  %v3281 = vtanh.pop %v3280
  %v3282 = vadd.f32 %v3281, 1.0
  %v3283 = vmul.f32 %v3282, 0.5
  %v3284 = vmul.f32 %v3278, %v2753
  %v3285 = vmul.f32 %v3274, %v3279
  %v3286 = vadd.f32 %v3284, %v3285
  %v3287 = vtanh.pop %v3286
  %v3288 = vmul.f32 %v3283, %v3287
  %s3289 = scalar_lea.vmem [#allocation2], 40
  %3290 = vst [vmem:[%s3289] sm:$0xff] %v3288
  %s3291 = scalar_lea.vmem %s0, 48
  %v3292 = vld [vmem:[%s3291] sm:$0xff]
  %3294 = vset.pattern.permute.xlu0 0
  %3295 = vperm.xlu0 %3294, %v3292
  %v3296 = vpop.permute.xlu0 %3295
  %v3298 = vmul.f32 %v3296, %v34
  %v3299 = vmul.f32 %v3296, %v38
  %v3300 = vmul.f32 %v3296, %v42
  %v3301 = vmul.f32 %v3296, %v46
  %v3302 = vadd.f32 %v3298, %v56
  %v3303 = vadd.f32 %v3299, %v60
  %v3304 = vadd.f32 %v3300, %v64
  %v3305 = vadd.f32 %v3301, %v68
  %v3306 = vld [vmem:[%s3] sm:$0xff]
  %v3307 = vld [vmem:[%s3 + $0x8] sm:$0xff]
  %v3308 = vld [vmem:[%s3 + $0x10] sm:$0xff]
  %v3309 = vld [vmem:[%s3 + $0x18] sm:$0xff]
  %v3310 = vld [vmem:[%s3 + $0x20] sm:$0xff]
  %v3311 = vld [vmem:[%s3 + $0x28] sm:$0xff]
  %v3312 = vld [vmem:[%s3 + $0x30] sm:$0xff]
  %v3313 = vld [vmem:[%s3 + $0x38] sm:$0xff]
  %v3314 = vld [vmem:[%s3 + $0x40] sm:$0xff]
  %v3315 = vld [vmem:[%s3 + $0x48] sm:$0xff]
  %v3316 = vld [vmem:[%s3 + $0x50] sm:$0xff]
  %v3317 = vld [vmem:[%s3 + $0x58] sm:$0xff]
  %v3318 = vld [vmem:[%s3 + $0x60] sm:$0xff]
  %v3319 = vld [vmem:[%s3 + $0x68] sm:$0xff]
  %v3320 = vld [vmem:[%s3 + $0x70] sm:$0xff]
  %v3321 = vld [vmem:[%s3 + $0x78] sm:$0xff]
  %v3322 = vld [vmem:[%s3 + $0x80] sm:$0xff]
  %v3323 = vld [vmem:[%s3 + $0x88] sm:$0xff]
  %v3324 = vld [vmem:[%s3 + $0x90] sm:$0xff]
  %v3325 = vld [vmem:[%s3 + $0x98] sm:$0xff]
  %v3326 = vld [vmem:[%s3 + $0xa0] sm:$0xff]
  %v3327 = vld [vmem:[%s3 + $0xa8] sm:$0xff]
  %v3328 = vld [vmem:[%s3 + $0xb0] sm:$0xff]
  %v3329 = vld [vmem:[%s3 + $0xb8] sm:$0xff]
  %v3330 = vld [vmem:[%s3 + $0xc0] sm:$0xff]
  %v3331 = vld [vmem:[%s3 + $0xc8] sm:$0xff]
  %v3332 = vld [vmem:[%s3 + $0xd0] sm:$0xff]
  %v3333 = vld [vmem:[%s3 + $0xd8] sm:$0xff]
  %v3334 = vld [vmem:[%s3 + $0xe0] sm:$0xff]
  %v3335 = vld [vmem:[%s3 + $0xe8] sm:$0xff]
  %v3336 = vld [vmem:[%s3 + $0xf0] sm:$0xff]
  %v3337 = vld [vmem:[%s3 + $0xf8] sm:$0xff]
  %v3338 = vld [vmem:[%s3 + $0x100] sm:$0xff]
  %v3339 = vld [vmem:[%s3 + $0x108] sm:$0xff]
  %v3340 = vld [vmem:[%s3 + $0x110] sm:$0xff]
  %v3341 = vld [vmem:[%s3 + $0x118] sm:$0xff]
  %v3342 = vld [vmem:[%s3 + $0x120] sm:$0xff]
  %v3343 = vld [vmem:[%s3 + $0x128] sm:$0xff]
  %v3344 = vld [vmem:[%s3 + $0x130] sm:$0xff]
  %v3345 = vld [vmem:[%s3 + $0x138] sm:$0xff]
  %v3346 = vld [vmem:[%s3 + $0x140] sm:$0xff]
  %v3347 = vld [vmem:[%s3 + $0x148] sm:$0xff]
  %v3348 = vld [vmem:[%s3 + $0x150] sm:$0xff]
  %v3349 = vld [vmem:[%s3 + $0x158] sm:$0xff]
  %v3350 = vld [vmem:[%s3 + $0x160] sm:$0xff]
  %v3351 = vld [vmem:[%s3 + $0x168] sm:$0xff]
  %v3352 = vld [vmem:[%s3 + $0x170] sm:$0xff]
  %v3353 = vld [vmem:[%s3 + $0x178] sm:$0xff]
  %v3354 = vld [vmem:[%s3 + $0x180] sm:$0xff]
  %v3355 = vld [vmem:[%s3 + $0x188] sm:$0xff]
  %v3356 = vld [vmem:[%s3 + $0x190] sm:$0xff]
  %v3357 = vld [vmem:[%s3 + $0x198] sm:$0xff]
  %v3358 = vld [vmem:[%s3 + $0x1a0] sm:$0xff]
  %v3359 = vld [vmem:[%s3 + $0x1a8] sm:$0xff]
  %v3360 = vld [vmem:[%s3 + $0x1b0] sm:$0xff]
  %v3361 = vld [vmem:[%s3 + $0x1b8] sm:$0xff]
  %v3362 = vld [vmem:[%s3 + $0x1c0] sm:$0xff]
  %v3363 = vld [vmem:[%s3 + $0x1c8] sm:$0xff]
  %v3364 = vld [vmem:[%s3 + $0x1d0] sm:$0xff]
  %v3365 = vld [vmem:[%s3 + $0x1d8] sm:$0xff]
  %v3366 = vld [vmem:[%s3 + $0x1e0] sm:$0xff]
  %v3367 = vld [vmem:[%s3 + $0x1e8] sm:$0xff]
  %v3368 = vld [vmem:[%s3 + $0x1f0] sm:$0xff]
  %v3369 = vld [vmem:[%s3 + $0x1f8] sm:$0xff]
  %3370 = vmatprep.subr.mxu0 %v3307
  %3371 = vmatpush1.msra.mxu0 %v3306
  %3372 = vmatprep.subr.mxu0 %v3311
  %3373 = vmatpush1.msra.mxu0 %v3310
  %3374 = vmatprep.subr.mxu0 %v3315
  %3375 = vmatpush1.msra.mxu0 %v3314
  %3376 = vmatprep.subr.mxu0 %v3319
  %3377 = vmatpush1.msra.mxu0 %v3318
  %3378 = vmatprep.subr.mxu0 %v3323
  %3379 = vmatpush1.msra.mxu0 %v3322
  %3380 = vmatprep.subr.mxu0 %v3327
  %3381 = vmatpush1.msra.mxu0 %v3326
  %3382 = vmatprep.subr.mxu0 %v3331
  %3383 = vmatpush1.msra.mxu0 %v3330
  %3384 = vmatprep.subr.mxu0 %v3335
  %3385 = vmatpush1.msra.mxu0 %v3334
  %3386 = vmatprep.subr.mxu0 %v3339
  %3387 = vmatpush1.msra.mxu0 %v3338
  %3388 = vmatprep.subr.mxu0 %v3343
  %3389 = vmatpush1.msra.mxu0 %v3342
  %3390 = vmatprep.subr.mxu0 %v3347
  %3391 = vmatpush1.msra.mxu0 %v3346
  %3392 = vmatprep.subr.mxu0 %v3351
  %3393 = vmatpush1.msra.mxu0 %v3350
  %3394 = vmatprep.subr.mxu0 %v3355
  %3395 = vmatpush1.msra.mxu0 %v3354
  %3396 = vmatprep.subr.mxu0 %v3359
  %3397 = vmatpush1.msra.mxu0 %v3358
  %3398 = vmatprep.subr.mxu0 %v3363
  %3399 = vmatpush1.msra.mxu0 %v3362
  %3400 = vmatprep.subr.mxu0 %v3367
  %3401 = vmatpush1.msra.mxu0 %v3366
  %3402 = vmatprep.subr.mxu0 0.0
  %3403 = vmatpush1.msra.mxu0 0.0
  %3404 = vmatprep.subr.mxu0 0.0
  %3405 = vmatpush1.msra.mxu0 0.0
  %3406 = vmatprep.subr.mxu0 0.0
  %3407 = vmatpush1.msra.mxu0 0.0
  %3408 = vmatprep.subr.mxu0 0.0
  %3409 = vmatpush1.msra.mxu0 0.0
  %3410 = vmatprep.subr.mxu0 0.0
  %3411 = vmatpush1.msra.mxu0 0.0
  %3412 = vmatprep.subr.mxu0 0.0
  %3413 = vmatpush1.msra.mxu0 0.0
  %3414 = vmatprep.subr.mxu0 0.0
  %3415 = vmatpush1.msra.mxu0 0.0
  %3416 = vmatprep.subr.mxu0 0.0
  %3417 = vmatpush1.msra.mxu0 0.0
  %3418 = vmatprep.subr.mxu0 0.0
  %3419 = vmatpush1.msra.mxu0 0.0
  %3420 = vmatprep.subr.mxu0 0.0
  %3421 = vmatpush1.msra.mxu0 0.0
  %3422 = vmatprep.subr.mxu0 0.0
  %3423 = vmatpush1.msra.mxu0 0.0
  %3424 = vmatprep.subr.mxu0 0.0
  %3425 = vmatpush1.msra.mxu0 0.0
  %3426 = vmatprep.subr.mxu0 0.0
  %3427 = vmatpush1.msra.mxu0 0.0
  %3428 = vmatprep.subr.mxu0 0.0
  %3429 = vmatpush1.msra.mxu0 0.0
  %3430 = vmatprep.subr.mxu0 0.0
  %3431 = vmatpush1.msra.mxu0 0.0
  %3432 = vmatprep.subr.mxu0 0.0
  %3433 = vmatpush1.msra.mxu0 0.0
  %3434 = vmatprep.mubr.f32.mxu0 0.0
  %3435 = vmatmul.mubr.f32.gmra.mrb[0].mxu0 %v3000
  %v3436 = vpop.f32.mrb[0].mxu0
  %v3437 = vadd.f32 0.0, %v3436
  %v3438 = vpop.f32.mrb[0].mxu0
  %v3439 = vadd.f32 0.0, %v3438
  %3440 = vdwg.mxu0
  %3441 = vmatprep.subr.mxu0 %v3309
  %3442 = vmatpush1.msra.mxu0 %v3308
  %3443 = vmatprep.subr.mxu0 %v3313
  %3444 = vmatpush1.msra.mxu0 %v3312
  %3445 = vmatprep.subr.mxu0 %v3317
  %3446 = vmatpush1.msra.mxu0 %v3316
  %3447 = vmatprep.subr.mxu0 %v3321
  %3448 = vmatpush1.msra.mxu0 %v3320
  %3449 = vmatprep.subr.mxu0 %v3325
  %3450 = vmatpush1.msra.mxu0 %v3324
  %3451 = vmatprep.subr.mxu0 %v3329
  %3452 = vmatpush1.msra.mxu0 %v3328
  %3453 = vmatprep.subr.mxu0 %v3333
  %3454 = vmatpush1.msra.mxu0 %v3332
  %3455 = vmatprep.subr.mxu0 %v3337
  %3456 = vmatpush1.msra.mxu0 %v3336
  %3457 = vmatprep.subr.mxu0 %v3341
  %3458 = vmatpush1.msra.mxu0 %v3340
  %3459 = vmatprep.subr.mxu0 %v3345
  %3460 = vmatpush1.msra.mxu0 %v3344
  %3461 = vmatprep.subr.mxu0 %v3349
  %3462 = vmatpush1.msra.mxu0 %v3348
  %3463 = vmatprep.subr.mxu0 %v3353
  %3464 = vmatpush1.msra.mxu0 %v3352
  %3465 = vmatprep.subr.mxu0 %v3357
  %3466 = vmatpush1.msra.mxu0 %v3356
  %3467 = vmatprep.subr.mxu0 %v3361
  %3468 = vmatpush1.msra.mxu0 %v3360
  %3469 = vmatprep.subr.mxu0 %v3365
  %3470 = vmatpush1.msra.mxu0 %v3364
  %3471 = vmatprep.subr.mxu0 %v3369
  %3472 = vmatpush1.msra.mxu0 %v3368
  %3473 = vmatprep.subr.mxu0 0.0
  %3474 = vmatpush1.msra.mxu0 0.0
  %3475 = vmatprep.subr.mxu0 0.0
  %3476 = vmatpush1.msra.mxu0 0.0
  %3477 = vmatprep.subr.mxu0 0.0
  %3478 = vmatpush1.msra.mxu0 0.0
  %3479 = vmatprep.subr.mxu0 0.0
  %3480 = vmatpush1.msra.mxu0 0.0
  %3481 = vmatprep.subr.mxu0 0.0
  %3482 = vmatpush1.msra.mxu0 0.0
  %3483 = vmatprep.subr.mxu0 0.0
  %3484 = vmatpush1.msra.mxu0 0.0
  %3485 = vmatprep.subr.mxu0 0.0
  %3486 = vmatpush1.msra.mxu0 0.0
  %3487 = vmatprep.subr.mxu0 0.0
  %3488 = vmatpush1.msra.mxu0 0.0
  %3489 = vmatprep.subr.mxu0 0.0
  %3490 = vmatpush1.msra.mxu0 0.0
  %3491 = vmatprep.subr.mxu0 0.0
  %3492 = vmatpush1.msra.mxu0 0.0
  %3493 = vmatprep.subr.mxu0 0.0
  %3494 = vmatpush1.msra.mxu0 0.0
  %3495 = vmatprep.subr.mxu0 0.0
  %3496 = vmatpush1.msra.mxu0 0.0
  %3497 = vmatprep.subr.mxu0 0.0
  %3498 = vmatpush1.msra.mxu0 0.0
  %3499 = vmatprep.subr.mxu0 0.0
  %3500 = vmatpush1.msra.mxu0 0.0
  %3501 = vmatprep.subr.mxu0 0.0
  %3502 = vmatpush1.msra.mxu0 0.0
  %3503 = vmatprep.subr.mxu0 0.0
  %3504 = vmatpush1.msra.mxu0 0.0
  %3505 = vmatprep.mubr.f32.mxu0 0.0
  %3506 = vmatmul.mubr.f32.gmra.mrb[0].mxu0 %v3000
  %v3507 = vpop.f32.mrb[0].mxu0
  %v3508 = vadd.f32 0.0, %v3507
  %v3509 = vpop.f32.mrb[0].mxu0
  %v3510 = vadd.f32 0.0, %v3509
  %3511 = vdwg.mxu0
  %v3512 = vadd.f32 %v3302, %v3437
  %v3513 = vadd.f32 %v3303, %v3439
  %v3514 = vadd.f32 %v3304, %v3508
  %v3515 = vadd.f32 %v3305, %v3510
  %v3516 = vmul.f32 %v3512, 0.5
  %v3517 = vtanh.pop %v3516
  %v3518 = vadd.f32 %v3517, 1.0
  %v3519 = vmul.f32 %v3518, 0.5
  %v3520 = vmul.f32 %v3513, 0.5
  %v3521 = vtanh.pop %v3520
  %v3522 = vadd.f32 %v3521, 1.0
  %v3523 = vmul.f32 %v3522, 0.5
  %v3524 = vtanh.pop %v3514
  %v3525 = vmul.f32 %v3515, 0.5
  %v3526 = vtanh.pop %v3525
  %v3527 = vadd.f32 %v3526, 1.0
  %v3528 = vmul.f32 %v3527, 0.5
  %v3529 = vmul.f32 %v3523, %v2998
  %v3530 = vmul.f32 %v3519, %v3524
  %v3531 = vadd.f32 %v3529, %v3530
  %v3532 = vtanh.pop %v3531
  %v3533 = vmul.f32 %v3528, %v3532
  %v3534 = vld [vmem:[%s4] sm:$0xff]
  %v3535 = vld [vmem:[%s4 + $0x8] sm:$0xff]
  %v3536 = vld [vmem:[%s4 + $0x10] sm:$0xff]
  %v3537 = vld [vmem:[%s4 + $0x18] sm:$0xff]
  %v3538 = vld [vmem:[%s4 + $0x20] sm:$0xff]
  %v3539 = vld [vmem:[%s4 + $0x28] sm:$0xff]
  %v3540 = vld [vmem:[%s4 + $0x30] sm:$0xff]
  %v3541 = vld [vmem:[%s4 + $0x38] sm:$0xff]
  %v3542 = vld [vmem:[%s4 + $0x40] sm:$0xff]
  %v3543 = vld [vmem:[%s4 + $0x48] sm:$0xff]
  %v3544 = vld [vmem:[%s4 + $0x50] sm:$0xff]
  %v3545 = vld [vmem:[%s4 + $0x58] sm:$0xff]
  %v3546 = vld [vmem:[%s4 + $0x60] sm:$0xff]
  %v3547 = vld [vmem:[%s4 + $0x68] sm:$0xff]
  %v3548 = vld [vmem:[%s4 + $0x70] sm:$0xff]
  %v3549 = vld [vmem:[%s4 + $0x78] sm:$0xff]
  %v3550 = vld [vmem:[%s4 + $0x80] sm:$0xff]
  %v3551 = vld [vmem:[%s4 + $0x88] sm:$0xff]
  %v3552 = vld [vmem:[%s4 + $0x90] sm:$0xff]
  %v3553 = vld [vmem:[%s4 + $0x98] sm:$0xff]
  %v3554 = vld [vmem:[%s4 + $0xa0] sm:$0xff]
  %v3555 = vld [vmem:[%s4 + $0xa8] sm:$0xff]
  %v3556 = vld [vmem:[%s4 + $0xb0] sm:$0xff]
  %v3557 = vld [vmem:[%s4 + $0xb8] sm:$0xff]
  %v3558 = vld [vmem:[%s4 + $0xc0] sm:$0xff]
  %v3559 = vld [vmem:[%s4 + $0xc8] sm:$0xff]
  %v3560 = vld [vmem:[%s4 + $0xd0] sm:$0xff]
  %v3561 = vld [vmem:[%s4 + $0xd8] sm:$0xff]
  %v3562 = vld [vmem:[%s4 + $0xe0] sm:$0xff]
  %v3563 = vld [vmem:[%s4 + $0xe8] sm:$0xff]
  %v3564 = vld [vmem:[%s4 + $0xf0] sm:$0xff]
  %v3565 = vld [vmem:[%s4 + $0xf8] sm:$0xff]
  %v3566 = vld [vmem:[%s4 + $0x100] sm:$0xff]
  %v3567 = vld [vmem:[%s4 + $0x108] sm:$0xff]
  %v3568 = vld [vmem:[%s4 + $0x110] sm:$0xff]
  %v3569 = vld [vmem:[%s4 + $0x118] sm:$0xff]
  %v3570 = vld [vmem:[%s4 + $0x120] sm:$0xff]
  %v3571 = vld [vmem:[%s4 + $0x128] sm:$0xff]
  %v3572 = vld [vmem:[%s4 + $0x130] sm:$0xff]
  %v3573 = vld [vmem:[%s4 + $0x138] sm:$0xff]
  %v3574 = vld [vmem:[%s4 + $0x140] sm:$0xff]
  %v3575 = vld [vmem:[%s4 + $0x148] sm:$0xff]
  %v3576 = vld [vmem:[%s4 + $0x150] sm:$0xff]
  %v3577 = vld [vmem:[%s4 + $0x158] sm:$0xff]
  %v3578 = vld [vmem:[%s4 + $0x160] sm:$0xff]
  %v3579 = vld [vmem:[%s4 + $0x168] sm:$0xff]
  %v3580 = vld [vmem:[%s4 + $0x170] sm:$0xff]
  %v3581 = vld [vmem:[%s4 + $0x178] sm:$0xff]
  %v3582 = vld [vmem:[%s4 + $0x180] sm:$0xff]
  %v3583 = vld [vmem:[%s4 + $0x188] sm:$0xff]
  %v3584 = vld [vmem:[%s4 + $0x190] sm:$0xff]
  %v3585 = vld [vmem:[%s4 + $0x198] sm:$0xff]
  %v3586 = vld [vmem:[%s4 + $0x1a0] sm:$0xff]
  %v3587 = vld [vmem:[%s4 + $0x1a8] sm:$0xff]
  %v3588 = vld [vmem:[%s4 + $0x1b0] sm:$0xff]
  %v3589 = vld [vmem:[%s4 + $0x1b8] sm:$0xff]
  %v3590 = vld [vmem:[%s4 + $0x1c0] sm:$0xff]
  %v3591 = vld [vmem:[%s4 + $0x1c8] sm:$0xff]
  %v3592 = vld [vmem:[%s4 + $0x1d0] sm:$0xff]
  %v3593 = vld [vmem:[%s4 + $0x1d8] sm:$0xff]
  %v3594 = vld [vmem:[%s4 + $0x1e0] sm:$0xff]
  %v3595 = vld [vmem:[%s4 + $0x1e8] sm:$0xff]
  %v3596 = vld [vmem:[%s4 + $0x1f0] sm:$0xff]
  %v3597 = vld [vmem:[%s4 + $0x1f8] sm:$0xff]
  %v3598 = vld [vmem:[%s4 + $0x200] sm:$0xff]
  %v3599 = vld [vmem:[%s4 + $0x208] sm:$0xff]
  %v3600 = vld [vmem:[%s4 + $0x210] sm:$0xff]
  %v3601 = vld [vmem:[%s4 + $0x218] sm:$0xff]
  %v3602 = vld [vmem:[%s4 + $0x220] sm:$0xff]
  %v3603 = vld [vmem:[%s4 + $0x228] sm:$0xff]
  %v3604 = vld [vmem:[%s4 + $0x230] sm:$0xff]
  %v3605 = vld [vmem:[%s4 + $0x238] sm:$0xff]
  %v3606 = vld [vmem:[%s4 + $0x240] sm:$0xff]
  %v3607 = vld [vmem:[%s4 + $0x248] sm:$0xff]
  %v3608 = vld [vmem:[%s4 + $0x250] sm:$0xff]
  %v3609 = vld [vmem:[%s4 + $0x258] sm:$0xff]
  %v3610 = vld [vmem:[%s4 + $0x260] sm:$0xff]
  %v3611 = vld [vmem:[%s4 + $0x268] sm:$0xff]
  %v3612 = vld [vmem:[%s4 + $0x270] sm:$0xff]
  %v3613 = vld [vmem:[%s4 + $0x278] sm:$0xff]
  %v3614 = vld [vmem:[%s4 + $0x280] sm:$0xff]
  %v3615 = vld [vmem:[%s4 + $0x288] sm:$0xff]
  %v3616 = vld [vmem:[%s4 + $0x290] sm:$0xff]
  %v3617 = vld [vmem:[%s4 + $0x298] sm:$0xff]
  %v3618 = vld [vmem:[%s4 + $0x2a0] sm:$0xff]
  %v3619 = vld [vmem:[%s4 + $0x2a8] sm:$0xff]
  %v3620 = vld [vmem:[%s4 + $0x2b0] sm:$0xff]
  %v3621 = vld [vmem:[%s4 + $0x2b8] sm:$0xff]
  %v3622 = vld [vmem:[%s4 + $0x2c0] sm:$0xff]
  %v3623 = vld [vmem:[%s4 + $0x2c8] sm:$0xff]
  %v3624 = vld [vmem:[%s4 + $0x2d0] sm:$0xff]
  %v3625 = vld [vmem:[%s4 + $0x2d8] sm:$0xff]
  %v3626 = vld [vmem:[%s4 + $0x2e0] sm:$0xff]
  %v3627 = vld [vmem:[%s4 + $0x2e8] sm:$0xff]
  %v3628 = vld [vmem:[%s4 + $0x2f0] sm:$0xff]
  %v3629 = vld [vmem:[%s4 + $0x2f8] sm:$0xff]
  %v3630 = vld [vmem:[%s4 + $0x300] sm:$0xff]
  %v3631 = vld [vmem:[%s4 + $0x308] sm:$0xff]
  %v3632 = vld [vmem:[%s4 + $0x310] sm:$0xff]
  %v3633 = vld [vmem:[%s4 + $0x318] sm:$0xff]
  %v3634 = vld [vmem:[%s4 + $0x320] sm:$0xff]
  %v3635 = vld [vmem:[%s4 + $0x328] sm:$0xff]
  %v3636 = vld [vmem:[%s4 + $0x330] sm:$0xff]
  %v3637 = vld [vmem:[%s4 + $0x338] sm:$0xff]
  %v3638 = vld [vmem:[%s4 + $0x340] sm:$0xff]
  %v3639 = vld [vmem:[%s4 + $0x348] sm:$0xff]
  %v3640 = vld [vmem:[%s4 + $0x350] sm:$0xff]
  %v3641 = vld [vmem:[%s4 + $0x358] sm:$0xff]
  %v3642 = vld [vmem:[%s4 + $0x360] sm:$0xff]
  %v3643 = vld [vmem:[%s4 + $0x368] sm:$0xff]
  %v3644 = vld [vmem:[%s4 + $0x370] sm:$0xff]
  %v3645 = vld [vmem:[%s4 + $0x378] sm:$0xff]
  %v3646 = vld [vmem:[%s4 + $0x380] sm:$0xff]
  %v3647 = vld [vmem:[%s4 + $0x388] sm:$0xff]
  %v3648 = vld [vmem:[%s4 + $0x390] sm:$0xff]
  %v3649 = vld [vmem:[%s4 + $0x398] sm:$0xff]
  %v3650 = vld [vmem:[%s4 + $0x3a0] sm:$0xff]
  %v3651 = vld [vmem:[%s4 + $0x3a8] sm:$0xff]
  %v3652 = vld [vmem:[%s4 + $0x3b0] sm:$0xff]
  %v3653 = vld [vmem:[%s4 + $0x3b8] sm:$0xff]
  %v3654 = vld [vmem:[%s4 + $0x3c0] sm:$0xff]
  %v3655 = vld [vmem:[%s4 + $0x3c8] sm:$0xff]
  %v3656 = vld [vmem:[%s4 + $0x3d0] sm:$0xff]
  %v3657 = vld [vmem:[%s4 + $0x3d8] sm:$0xff]
  %v3658 = vld [vmem:[%s4 + $0x3e0] sm:$0xff]
  %v3659 = vld [vmem:[%s4 + $0x3e8] sm:$0xff]
  %v3660 = vld [vmem:[%s4 + $0x3f0] sm:$0xff]
  %v3661 = vld [vmem:[%s4 + $0x3f8] sm:$0xff]
  %3662 = vmatprep.subr.mxu0 %v3535
  %3663 = vmatpush1.msra.mxu0 %v3534
  %3664 = vmatprep.subr.mxu0 %v3539
  %3665 = vmatpush1.msra.mxu0 %v3538
  %3666 = vmatprep.subr.mxu0 %v3543
  %3667 = vmatpush1.msra.mxu0 %v3542
  %3668 = vmatprep.subr.mxu0 %v3547
  %3669 = vmatpush1.msra.mxu0 %v3546
  %3670 = vmatprep.subr.mxu0 %v3551
  %3671 = vmatpush1.msra.mxu0 %v3550
  %3672 = vmatprep.subr.mxu0 %v3555
  %3673 = vmatpush1.msra.mxu0 %v3554
  %3674 = vmatprep.subr.mxu0 %v3559
  %3675 = vmatpush1.msra.mxu0 %v3558
  %3676 = vmatprep.subr.mxu0 %v3563
  %3677 = vmatpush1.msra.mxu0 %v3562
  %3678 = vmatprep.subr.mxu0 %v3567
  %3679 = vmatpush1.msra.mxu0 %v3566
  %3680 = vmatprep.subr.mxu0 %v3571
  %3681 = vmatpush1.msra.mxu0 %v3570
  %3682 = vmatprep.subr.mxu0 %v3575
  %3683 = vmatpush1.msra.mxu0 %v3574
  %3684 = vmatprep.subr.mxu0 %v3579
  %3685 = vmatpush1.msra.mxu0 %v3578
  %3686 = vmatprep.subr.mxu0 %v3583
  %3687 = vmatpush1.msra.mxu0 %v3582
  %3688 = vmatprep.subr.mxu0 %v3587
  %3689 = vmatpush1.msra.mxu0 %v3586
  %3690 = vmatprep.subr.mxu0 %v3591
  %3691 = vmatpush1.msra.mxu0 %v3590
  %3692 = vmatprep.subr.mxu0 %v3595
  %3693 = vmatpush1.msra.mxu0 %v3594
  %3694 = vmatprep.subr.mxu0 %v3599
  %3695 = vmatpush1.msra.mxu0 %v3598
  %3696 = vmatprep.subr.mxu0 %v3603
  %3697 = vmatpush1.msra.mxu0 %v3602
  %3698 = vmatprep.subr.mxu0 %v3607
  %3699 = vmatpush1.msra.mxu0 %v3606
  %3700 = vmatprep.subr.mxu0 %v3611
  %3701 = vmatpush1.msra.mxu0 %v3610
  %3702 = vmatprep.subr.mxu0 %v3615
  %3703 = vmatpush1.msra.mxu0 %v3614
  %3704 = vmatprep.subr.mxu0 %v3619
  %3705 = vmatpush1.msra.mxu0 %v3618
  %3706 = vmatprep.subr.mxu0 %v3623
  %3707 = vmatpush1.msra.mxu0 %v3622
  %3708 = vmatprep.subr.mxu0 %v3627
  %3709 = vmatpush1.msra.mxu0 %v3626
  %3710 = vmatprep.subr.mxu0 %v3631
  %3711 = vmatpush1.msra.mxu0 %v3630
  %3712 = vmatprep.subr.mxu0 %v3635
  %3713 = vmatpush1.msra.mxu0 %v3634
  %3714 = vmatprep.subr.mxu0 %v3639
  %3715 = vmatpush1.msra.mxu0 %v3638
  %3716 = vmatprep.subr.mxu0 %v3643
  %3717 = vmatpush1.msra.mxu0 %v3642
  %3718 = vmatprep.subr.mxu0 %v3647
  %3719 = vmatpush1.msra.mxu0 %v3646
  %3720 = vmatprep.subr.mxu0 %v3651
  %3721 = vmatpush1.msra.mxu0 %v3650
  %3722 = vmatprep.subr.mxu0 %v3655
  %3723 = vmatpush1.msra.mxu0 %v3654
  %3724 = vmatprep.subr.mxu0 %v3659
  %3725 = vmatpush1.msra.mxu0 %v3658
  %3726 = vmatprep.mubr.f32.mxu0 %v3288
  %3727 = vmatmul.mubr.f32.gmra.mrb[0].mxu0 %v3533
  %v3728 = vpop.f32.mrb[0].mxu0
  %v3729 = vadd.f32 %v78, %v3728
  %v3730 = vpop.f32.mrb[0].mxu0
  %v3731 = vadd.f32 %v82, %v3730
  %3732 = vdwg.mxu0
  %3733 = vmatprep.subr.mxu0 %v3537
  %3734 = vmatpush1.msra.mxu0 %v3536
  %3735 = vmatprep.subr.mxu0 %v3541
  %3736 = vmatpush1.msra.mxu0 %v3540
  %3737 = vmatprep.subr.mxu0 %v3545
  %3738 = vmatpush1.msra.mxu0 %v3544
  %3739 = vmatprep.subr.mxu0 %v3549
  %3740 = vmatpush1.msra.mxu0 %v3548
  %3741 = vmatprep.subr.mxu0 %v3553
  %3742 = vmatpush1.msra.mxu0 %v3552
  %3743 = vmatprep.subr.mxu0 %v3557
  %3744 = vmatpush1.msra.mxu0 %v3556
  %3745 = vmatprep.subr.mxu0 %v3561
  %3746 = vmatpush1.msra.mxu0 %v3560
  %3747 = vmatprep.subr.mxu0 %v3565
  %3748 = vmatpush1.msra.mxu0 %v3564
  %3749 = vmatprep.subr.mxu0 %v3569
  %3750 = vmatpush1.msra.mxu0 %v3568
  %3751 = vmatprep.subr.mxu0 %v3573
  %3752 = vmatpush1.msra.mxu0 %v3572
  %3753 = vmatprep.subr.mxu0 %v3577
  %3754 = vmatpush1.msra.mxu0 %v3576
  %3755 = vmatprep.subr.mxu0 %v3581
  %3756 = vmatpush1.msra.mxu0 %v3580
  %3757 = vmatprep.subr.mxu0 %v3585
  %3758 = vmatpush1.msra.mxu0 %v3584
  %3759 = vmatprep.subr.mxu0 %v3589
  %3760 = vmatpush1.msra.mxu0 %v3588
  %3761 = vmatprep.subr.mxu0 %v3593
  %3762 = vmatpush1.msra.mxu0 %v3592
  %3763 = vmatprep.subr.mxu0 %v3597
  %3764 = vmatpush1.msra.mxu0 %v3596
  %3765 = vmatprep.subr.mxu0 %v3601
  %3766 = vmatpush1.msra.mxu0 %v3600
  %3767 = vmatprep.subr.mxu0 %v3605
  %3768 = vmatpush1.msra.mxu0 %v3604
  %3769 = vmatprep.subr.mxu0 %v3609
  %3770 = vmatpush1.msra.mxu0 %v3608
  %3771 = vmatprep.subr.mxu0 %v3613
  %3772 = vmatpush1.msra.mxu0 %v3612
  %3773 = vmatprep.subr.mxu0 %v3617
  %3774 = vmatpush1.msra.mxu0 %v3616
  %3775 = vmatprep.subr.mxu0 %v3621
  %3776 = vmatpush1.msra.mxu0 %v3620
  %3777 = vmatprep.subr.mxu0 %v3625
  %3778 = vmatpush1.msra.mxu0 %v3624
  %3779 = vmatprep.subr.mxu0 %v3629
  %3780 = vmatpush1.msra.mxu0 %v3628
  %3781 = vmatprep.subr.mxu0 %v3633
  %3782 = vmatpush1.msra.mxu0 %v3632
  %3783 = vmatprep.subr.mxu0 %v3637
  %3784 = vmatpush1.msra.mxu0 %v3636
  %3785 = vmatprep.subr.mxu0 %v3641
  %3786 = vmatpush1.msra.mxu0 %v3640
  %3787 = vmatprep.subr.mxu0 %v3645
  %3788 = vmatpush1.msra.mxu0 %v3644
  %3789 = vmatprep.subr.mxu0 %v3649
  %3790 = vmatpush1.msra.mxu0 %v3648
  %3791 = vmatprep.subr.mxu0 %v3653
  %3792 = vmatpush1.msra.mxu0 %v3652
  %3793 = vmatprep.subr.mxu0 %v3657
  %3794 = vmatpush1.msra.mxu0 %v3656
  %3795 = vmatprep.subr.mxu0 %v3661
  %3796 = vmatpush1.msra.mxu0 %v3660
  %3797 = vmatprep.mubr.f32.mxu0 %v3288
  %3798 = vmatmul.mubr.f32.gmra.mrb[0].mxu0 %v3533
  %v3799 = vpop.f32.mrb[0].mxu0
  %v3800 = vadd.f32 %v86, %v3799
  %v3801 = vpop.f32.mrb[0].mxu0
  %v3802 = vadd.f32 %v90, %v3801
  %3803 = vdwg.mxu0
  %v3804 = vmul.f32 %v3729, 0.5
  %v3805 = vtanh.pop %v3804
  %v3806 = vadd.f32 %v3805, 1.0
  %v3807 = vmul.f32 %v3806, 0.5
  %v3808 = vmul.f32 %v3731, 0.5
  %v3809 = vtanh.pop %v3808
  %v3810 = vadd.f32 %v3809, 1.0
  %v3811 = vmul.f32 %v3810, 0.5
  %v3812 = vtanh.pop %v3800
  %v3813 = vmul.f32 %v3802, 0.5
  %v3814 = vtanh.pop %v3813
  %v3815 = vadd.f32 %v3814, 1.0
  %v3816 = vmul.f32 %v3815, 0.5
  %v3817 = vmul.f32 %v3811, %v3286
  %v3818 = vmul.f32 %v3807, %v3812
  %v3819 = vadd.f32 %v3817, %v3818
  %v3820 = vtanh.pop %v3819
  %v3821 = vmul.f32 %v3816, %v3820
  %s3822 = scalar_lea.vmem [#allocation2], 48
  %3823 = vst [vmem:[%s3822] sm:$0xff] %v3821
  %s3824 = scalar_lea.vmem %s0, 56
  %v3825 = vld [vmem:[%s3824] sm:$0xff]
  %3827 = vset.pattern.permute.xlu0 0
  %3828 = vperm.xlu0 %3827, %v3825
  %v3829 = vpop.permute.xlu0 %3828
  %v3831 = vmul.f32 %v3829, %v34
  %v3832 = vmul.f32 %v3829, %v38
  %v3833 = vmul.f32 %v3829, %v42
  %v3834 = vmul.f32 %v3829, %v46
  %v3835 = vadd.f32 %v3831, %v56
  %v3836 = vadd.f32 %v3832, %v60
  %v3837 = vadd.f32 %v3833, %v64
  %v3838 = vadd.f32 %v3834, %v68
  %v3839 = vld [vmem:[%s3] sm:$0xff]
  %v3840 = vld [vmem:[%s3 + $0x8] sm:$0xff]
  %v3841 = vld [vmem:[%s3 + $0x10] sm:$0xff]
  %v3842 = vld [vmem:[%s3 + $0x18] sm:$0xff]
  %v3843 = vld [vmem:[%s3 + $0x20] sm:$0xff]
  %v3844 = vld [vmem:[%s3 + $0x28] sm:$0xff]
  %v3845 = vld [vmem:[%s3 + $0x30] sm:$0xff]
  %v3846 = vld [vmem:[%s3 + $0x38] sm:$0xff]
  %v3847 = vld [vmem:[%s3 + $0x40] sm:$0xff]
  %v3848 = vld [vmem:[%s3 + $0x48] sm:$0xff]
  %v3849 = vld [vmem:[%s3 + $0x50] sm:$0xff]
  %v3850 = vld [vmem:[%s3 + $0x58] sm:$0xff]
  %v3851 = vld [vmem:[%s3 + $0x60] sm:$0xff]
  %v3852 = vld [vmem:[%s3 + $0x68] sm:$0xff]
  %v3853 = vld [vmem:[%s3 + $0x70] sm:$0xff]
  %v3854 = vld [vmem:[%s3 + $0x78] sm:$0xff]
  %v3855 = vld [vmem:[%s3 + $0x80] sm:$0xff]
  %v3856 = vld [vmem:[%s3 + $0x88] sm:$0xff]
  %v3857 = vld [vmem:[%s3 + $0x90] sm:$0xff]
  %v3858 = vld [vmem:[%s3 + $0x98] sm:$0xff]
  %v3859 = vld [vmem:[%s3 + $0xa0] sm:$0xff]
  %v3860 = vld [vmem:[%s3 + $0xa8] sm:$0xff]
  %v3861 = vld [vmem:[%s3 + $0xb0] sm:$0xff]
  %v3862 = vld [vmem:[%s3 + $0xb8] sm:$0xff]
  %v3863 = vld [vmem:[%s3 + $0xc0] sm:$0xff]
  %v3864 = vld [vmem:[%s3 + $0xc8] sm:$0xff]
  %v3865 = vld [vmem:[%s3 + $0xd0] sm:$0xff]
  %v3866 = vld [vmem:[%s3 + $0xd8] sm:$0xff]
  %v3867 = vld [vmem:[%s3 + $0xe0] sm:$0xff]
  %v3868 = vld [vmem:[%s3 + $0xe8] sm:$0xff]
  %v3869 = vld [vmem:[%s3 + $0xf0] sm:$0xff]
  %v3870 = vld [vmem:[%s3 + $0xf8] sm:$0xff]
  %v3871 = vld [vmem:[%s3 + $0x100] sm:$0xff]
  %v3872 = vld [vmem:[%s3 + $0x108] sm:$0xff]
  %v3873 = vld [vmem:[%s3 + $0x110] sm:$0xff]
  %v3874 = vld [vmem:[%s3 + $0x118] sm:$0xff]
  %v3875 = vld [vmem:[%s3 + $0x120] sm:$0xff]
  %v3876 = vld [vmem:[%s3 + $0x128] sm:$0xff]
  %v3877 = vld [vmem:[%s3 + $0x130] sm:$0xff]
  %v3878 = vld [vmem:[%s3 + $0x138] sm:$0xff]
  %v3879 = vld [vmem:[%s3 + $0x140] sm:$0xff]
  %v3880 = vld [vmem:[%s3 + $0x148] sm:$0xff]
  %v3881 = vld [vmem:[%s3 + $0x150] sm:$0xff]
  %v3882 = vld [vmem:[%s3 + $0x158] sm:$0xff]
  %v3883 = vld [vmem:[%s3 + $0x160] sm:$0xff]
  %v3884 = vld [vmem:[%s3 + $0x168] sm:$0xff]
  %v3885 = vld [vmem:[%s3 + $0x170] sm:$0xff]
  %v3886 = vld [vmem:[%s3 + $0x178] sm:$0xff]
  %v3887 = vld [vmem:[%s3 + $0x180] sm:$0xff]
  %v3888 = vld [vmem:[%s3 + $0x188] sm:$0xff]
  %v3889 = vld [vmem:[%s3 + $0x190] sm:$0xff]
  %v3890 = vld [vmem:[%s3 + $0x198] sm:$0xff]
  %v3891 = vld [vmem:[%s3 + $0x1a0] sm:$0xff]
  %v3892 = vld [vmem:[%s3 + $0x1a8] sm:$0xff]
  %v3893 = vld [vmem:[%s3 + $0x1b0] sm:$0xff]
  %v3894 = vld [vmem:[%s3 + $0x1b8] sm:$0xff]
  %v3895 = vld [vmem:[%s3 + $0x1c0] sm:$0xff]
  %v3896 = vld [vmem:[%s3 + $0x1c8] sm:$0xff]
  %v3897 = vld [vmem:[%s3 + $0x1d0] sm:$0xff]
  %v3898 = vld [vmem:[%s3 + $0x1d8] sm:$0xff]
  %v3899 = vld [vmem:[%s3 + $0x1e0] sm:$0xff]
  %v3900 = vld [vmem:[%s3 + $0x1e8] sm:$0xff]
  %v3901 = vld [vmem:[%s3 + $0x1f0] sm:$0xff]
  %v3902 = vld [vmem:[%s3 + $0x1f8] sm:$0xff]
  %3903 = vmatprep.subr.mxu0 %v3840
  %3904 = vmatpush1.msra.mxu0 %v3839
  %3905 = vmatprep.subr.mxu0 %v3844
  %3906 = vmatpush1.msra.mxu0 %v3843
  %3907 = vmatprep.subr.mxu0 %v3848
  %3908 = vmatpush1.msra.mxu0 %v3847
  %3909 = vmatprep.subr.mxu0 %v3852
  %3910 = vmatpush1.msra.mxu0 %v3851
  %3911 = vmatprep.subr.mxu0 %v3856
  %3912 = vmatpush1.msra.mxu0 %v3855
  %3913 = vmatprep.subr.mxu0 %v3860
  %3914 = vmatpush1.msra.mxu0 %v3859
  %3915 = vmatprep.subr.mxu0 %v3864
  %3916 = vmatpush1.msra.mxu0 %v3863
  %3917 = vmatprep.subr.mxu0 %v3868
  %3918 = vmatpush1.msra.mxu0 %v3867
  %3919 = vmatprep.subr.mxu0 %v3872
  %3920 = vmatpush1.msra.mxu0 %v3871
  %3921 = vmatprep.subr.mxu0 %v3876
  %3922 = vmatpush1.msra.mxu0 %v3875
  %3923 = vmatprep.subr.mxu0 %v3880
  %3924 = vmatpush1.msra.mxu0 %v3879
  %3925 = vmatprep.subr.mxu0 %v3884
  %3926 = vmatpush1.msra.mxu0 %v3883
  %3927 = vmatprep.subr.mxu0 %v3888
  %3928 = vmatpush1.msra.mxu0 %v3887
  %3929 = vmatprep.subr.mxu0 %v3892
  %3930 = vmatpush1.msra.mxu0 %v3891
  %3931 = vmatprep.subr.mxu0 %v3896
  %3932 = vmatpush1.msra.mxu0 %v3895
  %3933 = vmatprep.subr.mxu0 %v3900
  %3934 = vmatpush1.msra.mxu0 %v3899
  %3935 = vmatprep.subr.mxu0 0.0
  %3936 = vmatpush1.msra.mxu0 0.0
  %3937 = vmatprep.subr.mxu0 0.0
  %3938 = vmatpush1.msra.mxu0 0.0
  %3939 = vmatprep.subr.mxu0 0.0
  %3940 = vmatpush1.msra.mxu0 0.0
  %3941 = vmatprep.subr.mxu0 0.0
  %3942 = vmatpush1.msra.mxu0 0.0
  %3943 = vmatprep.subr.mxu0 0.0
  %3944 = vmatpush1.msra.mxu0 0.0
  %3945 = vmatprep.subr.mxu0 0.0
  %3946 = vmatpush1.msra.mxu0 0.0
  %3947 = vmatprep.subr.mxu0 0.0
  %3948 = vmatpush1.msra.mxu0 0.0
  %3949 = vmatprep.subr.mxu0 0.0
  %3950 = vmatpush1.msra.mxu0 0.0
  %3951 = vmatprep.subr.mxu0 0.0
  %3952 = vmatpush1.msra.mxu0 0.0
  %3953 = vmatprep.subr.mxu0 0.0
  %3954 = vmatpush1.msra.mxu0 0.0
  %3955 = vmatprep.subr.mxu0 0.0
  %3956 = vmatpush1.msra.mxu0 0.0
  %3957 = vmatprep.subr.mxu0 0.0
  %3958 = vmatpush1.msra.mxu0 0.0
  %3959 = vmatprep.subr.mxu0 0.0
  %3960 = vmatpush1.msra.mxu0 0.0
  %3961 = vmatprep.subr.mxu0 0.0
  %3962 = vmatpush1.msra.mxu0 0.0
  %3963 = vmatprep.subr.mxu0 0.0
  %3964 = vmatpush1.msra.mxu0 0.0
  %3965 = vmatprep.subr.mxu0 0.0
  %3966 = vmatpush1.msra.mxu0 0.0
  %3967 = vmatprep.mubr.f32.mxu0 0.0
  %3968 = vmatmul.mubr.f32.gmra.mrb[0].mxu0 %v3533
  %v3969 = vpop.f32.mrb[0].mxu0
  %v3970 = vadd.f32 0.0, %v3969
  %v3971 = vpop.f32.mrb[0].mxu0
  %v3972 = vadd.f32 0.0, %v3971
  %3973 = vdwg.mxu0
  %3974 = vmatprep.subr.mxu0 %v3842
  %3975 = vmatpush1.msra.mxu0 %v3841
  %3976 = vmatprep.subr.mxu0 %v3846
  %3977 = vmatpush1.msra.mxu0 %v3845
  %3978 = vmatprep.subr.mxu0 %v3850
  %3979 = vmatpush1.msra.mxu0 %v3849
  %3980 = vmatprep.subr.mxu0 %v3854
  %3981 = vmatpush1.msra.mxu0 %v3853
  %3982 = vmatprep.subr.mxu0 %v3858
  %3983 = vmatpush1.msra.mxu0 %v3857
  %3984 = vmatprep.subr.mxu0 %v3862
  %3985 = vmatpush1.msra.mxu0 %v3861
  %3986 = vmatprep.subr.mxu0 %v3866
  %3987 = vmatpush1.msra.mxu0 %v3865
  %3988 = vmatprep.subr.mxu0 %v3870
  %3989 = vmatpush1.msra.mxu0 %v3869
  %3990 = vmatprep.subr.mxu0 %v3874
  %3991 = vmatpush1.msra.mxu0 %v3873
  %3992 = vmatprep.subr.mxu0 %v3878
  %3993 = vmatpush1.msra.mxu0 %v3877
  %3994 = vmatprep.subr.mxu0 %v3882
  %3995 = vmatpush1.msra.mxu0 %v3881
  %3996 = vmatprep.subr.mxu0 %v3886
  %3997 = vmatpush1.msra.mxu0 %v3885
  %3998 = vmatprep.subr.mxu0 %v3890
  %3999 = vmatpush1.msra.mxu0 %v3889
  %4000 = vmatprep.subr.mxu0 %v3894
  %4001 = vmatpush1.msra.mxu0 %v3893
  %4002 = vmatprep.subr.mxu0 %v3898
  %4003 = vmatpush1.msra.mxu0 %v3897
  %4004 = vmatprep.subr.mxu0 %v3902
  %4005 = vmatpush1.msra.mxu0 %v3901
  %4006 = vmatprep.subr.mxu0 0.0
  %4007 = vmatpush1.msra.mxu0 0.0
  %4008 = vmatprep.subr.mxu0 0.0
  %4009 = vmatpush1.msra.mxu0 0.0
  %4010 = vmatprep.subr.mxu0 0.0
  %4011 = vmatpush1.msra.mxu0 0.0
  %4012 = vmatprep.subr.mxu0 0.0
  %4013 = vmatpush1.msra.mxu0 0.0
  %4014 = vmatprep.subr.mxu0 0.0
  %4015 = vmatpush1.msra.mxu0 0.0
  %4016 = vmatprep.subr.mxu0 0.0
  %4017 = vmatpush1.msra.mxu0 0.0
  %4018 = vmatprep.subr.mxu0 0.0
  %4019 = vmatpush1.msra.mxu0 0.0
  %4020 = vmatprep.subr.mxu0 0.0
  %4021 = vmatpush1.msra.mxu0 0.0
  %4022 = vmatprep.subr.mxu0 0.0
  %4023 = vmatpush1.msra.mxu0 0.0
  %4024 = vmatprep.subr.mxu0 0.0
  %4025 = vmatpush1.msra.mxu0 0.0
  %4026 = vmatprep.subr.mxu0 0.0
  %4027 = vmatpush1.msra.mxu0 0.0
  %4028 = vmatprep.subr.mxu0 0.0
  %4029 = vmatpush1.msra.mxu0 0.0
  %4030 = vmatprep.subr.mxu0 0.0
  %4031 = vmatpush1.msra.mxu0 0.0
  %4032 = vmatprep.subr.mxu0 0.0
  %4033 = vmatpush1.msra.mxu0 0.0
  %4034 = vmatprep.subr.mxu0 0.0
  %4035 = vmatpush1.msra.mxu0 0.0
  %4036 = vmatprep.subr.mxu0 0.0
  %4037 = vmatpush1.msra.mxu0 0.0
  %4038 = vmatprep.mubr.f32.mxu0 0.0
  %4039 = vmatmul.mubr.f32.gmra.mrb[0].mxu0 %v3533
  %v4040 = vpop.f32.mrb[0].mxu0
  %v4041 = vadd.f32 0.0, %v4040
  %v4042 = vpop.f32.mrb[0].mxu0
  %v4043 = vadd.f32 0.0, %v4042
  %4044 = vdwg.mxu0
  %v4045 = vadd.f32 %v3835, %v3970
  %v4046 = vadd.f32 %v3836, %v3972
  %v4047 = vadd.f32 %v3837, %v4041
  %v4048 = vadd.f32 %v3838, %v4043
  %v4049 = vmul.f32 %v4045, 0.5
  %v4050 = vtanh.pop %v4049
  %v4051 = vadd.f32 %v4050, 1.0
  %v4052 = vmul.f32 %v4051, 0.5
  %v4053 = vmul.f32 %v4046, 0.5
  %v4054 = vtanh.pop %v4053
  %v4055 = vadd.f32 %v4054, 1.0
  %v4056 = vmul.f32 %v4055, 0.5
  %v4057 = vtanh.pop %v4047
  %v4058 = vmul.f32 %v4048, 0.5
  %v4059 = vtanh.pop %v4058
  %v4060 = vadd.f32 %v4059, 1.0
  %v4061 = vmul.f32 %v4060, 0.5
  %v4062 = vmul.f32 %v4056, %v3531
  %v4063 = vmul.f32 %v4052, %v4057
  %v4064 = vadd.f32 %v4062, %v4063
  %v4065 = vtanh.pop %v4064
  %v4066 = vmul.f32 %v4061, %v4065
  %v4067 = vld [vmem:[%s4] sm:$0xff]
  %v4068 = vld [vmem:[%s4 + $0x8] sm:$0xff]
  %v4069 = vld [vmem:[%s4 + $0x10] sm:$0xff]
  %v4070 = vld [vmem:[%s4 + $0x18] sm:$0xff]
  %v4071 = vld [vmem:[%s4 + $0x20] sm:$0xff]
  %v4072 = vld [vmem:[%s4 + $0x28] sm:$0xff]
  %v4073 = vld [vmem:[%s4 + $0x30] sm:$0xff]
  %v4074 = vld [vmem:[%s4 + $0x38] sm:$0xff]
  %v4075 = vld [vmem:[%s4 + $0x40] sm:$0xff]
  %v4076 = vld [vmem:[%s4 + $0x48] sm:$0xff]
  %v4077 = vld [vmem:[%s4 + $0x50] sm:$0xff]
  %v4078 = vld [vmem:[%s4 + $0x58] sm:$0xff]
  %v4079 = vld [vmem:[%s4 + $0x60] sm:$0xff]
  %v4080 = vld [vmem:[%s4 + $0x68] sm:$0xff]
  %v4081 = vld [vmem:[%s4 + $0x70] sm:$0xff]
  %v4082 = vld [vmem:[%s4 + $0x78] sm:$0xff]
  %v4083 = vld [vmem:[%s4 + $0x80] sm:$0xff]
  %v4084 = vld [vmem:[%s4 + $0x88] sm:$0xff]
  %v4085 = vld [vmem:[%s4 + $0x90] sm:$0xff]
  %v4086 = vld [vmem:[%s4 + $0x98] sm:$0xff]
  %v4087 = vld [vmem:[%s4 + $0xa0] sm:$0xff]
  %v4088 = vld [vmem:[%s4 + $0xa8] sm:$0xff]
  %v4089 = vld [vmem:[%s4 + $0xb0] sm:$0xff]
  %v4090 = vld [vmem:[%s4 + $0xb8] sm:$0xff]
  %v4091 = vld [vmem:[%s4 + $0xc0] sm:$0xff]
  %v4092 = vld [vmem:[%s4 + $0xc8] sm:$0xff]
  %v4093 = vld [vmem:[%s4 + $0xd0] sm:$0xff]
  %v4094 = vld [vmem:[%s4 + $0xd8] sm:$0xff]
  %v4095 = vld [vmem:[%s4 + $0xe0] sm:$0xff]
  %v4096 = vld [vmem:[%s4 + $0xe8] sm:$0xff]
  %v4097 = vld [vmem:[%s4 + $0xf0] sm:$0xff]
  %v4098 = vld [vmem:[%s4 + $0xf8] sm:$0xff]
  %v4099 = vld [vmem:[%s4 + $0x100] sm:$0xff]
  %v4100 = vld [vmem:[%s4 + $0x108] sm:$0xff]
  %v4101 = vld [vmem:[%s4 + $0x110] sm:$0xff]
  %v4102 = vld [vmem:[%s4 + $0x118] sm:$0xff]
  %v4103 = vld [vmem:[%s4 + $0x120] sm:$0xff]
  %v4104 = vld [vmem:[%s4 + $0x128] sm:$0xff]
  %v4105 = vld [vmem:[%s4 + $0x130] sm:$0xff]
  %v4106 = vld [vmem:[%s4 + $0x138] sm:$0xff]
  %v4107 = vld [vmem:[%s4 + $0x140] sm:$0xff]
  %v4108 = vld [vmem:[%s4 + $0x148] sm:$0xff]
  %v4109 = vld [vmem:[%s4 + $0x150] sm:$0xff]
  %v4110 = vld [vmem:[%s4 + $0x158] sm:$0xff]
  %v4111 = vld [vmem:[%s4 + $0x160] sm:$0xff]
  %v4112 = vld [vmem:[%s4 + $0x168] sm:$0xff]
  %v4113 = vld [vmem:[%s4 + $0x170] sm:$0xff]
  %v4114 = vld [vmem:[%s4 + $0x178] sm:$0xff]
  %v4115 = vld [vmem:[%s4 + $0x180] sm:$0xff]
  %v4116 = vld [vmem:[%s4 + $0x188] sm:$0xff]
  %v4117 = vld [vmem:[%s4 + $0x190] sm:$0xff]
  %v4118 = vld [vmem:[%s4 + $0x198] sm:$0xff]
  %v4119 = vld [vmem:[%s4 + $0x1a0] sm:$0xff]
  %v4120 = vld [vmem:[%s4 + $0x1a8] sm:$0xff]
  %v4121 = vld [vmem:[%s4 + $0x1b0] sm:$0xff]
  %v4122 = vld [vmem:[%s4 + $0x1b8] sm:$0xff]
  %v4123 = vld [vmem:[%s4 + $0x1c0] sm:$0xff]
  %v4124 = vld [vmem:[%s4 + $0x1c8] sm:$0xff]
  %v4125 = vld [vmem:[%s4 + $0x1d0] sm:$0xff]
  %v4126 = vld [vmem:[%s4 + $0x1d8] sm:$0xff]
  %v4127 = vld [vmem:[%s4 + $0x1e0] sm:$0xff]
  %v4128 = vld [vmem:[%s4 + $0x1e8] sm:$0xff]
  %v4129 = vld [vmem:[%s4 + $0x1f0] sm:$0xff]
  %v4130 = vld [vmem:[%s4 + $0x1f8] sm:$0xff]
  %v4131 = vld [vmem:[%s4 + $0x200] sm:$0xff]
  %v4132 = vld [vmem:[%s4 + $0x208] sm:$0xff]
  %v4133 = vld [vmem:[%s4 + $0x210] sm:$0xff]
  %v4134 = vld [vmem:[%s4 + $0x218] sm:$0xff]
  %v4135 = vld [vmem:[%s4 + $0x220] sm:$0xff]
  %v4136 = vld [vmem:[%s4 + $0x228] sm:$0xff]
  %v4137 = vld [vmem:[%s4 + $0x230] sm:$0xff]
  %v4138 = vld [vmem:[%s4 + $0x238] sm:$0xff]
  %v4139 = vld [vmem:[%s4 + $0x240] sm:$0xff]
  %v4140 = vld [vmem:[%s4 + $0x248] sm:$0xff]
  %v4141 = vld [vmem:[%s4 + $0x250] sm:$0xff]
  %v4142 = vld [vmem:[%s4 + $0x258] sm:$0xff]
  %v4143 = vld [vmem:[%s4 + $0x260] sm:$0xff]
  %v4144 = vld [vmem:[%s4 + $0x268] sm:$0xff]
  %v4145 = vld [vmem:[%s4 + $0x270] sm:$0xff]
  %v4146 = vld [vmem:[%s4 + $0x278] sm:$0xff]
  %v4147 = vld [vmem:[%s4 + $0x280] sm:$0xff]
  %v4148 = vld [vmem:[%s4 + $0x288] sm:$0xff]
  %v4149 = vld [vmem:[%s4 + $0x290] sm:$0xff]
  %v4150 = vld [vmem:[%s4 + $0x298] sm:$0xff]
  %v4151 = vld [vmem:[%s4 + $0x2a0] sm:$0xff]
  %v4152 = vld [vmem:[%s4 + $0x2a8] sm:$0xff]
  %v4153 = vld [vmem:[%s4 + $0x2b0] sm:$0xff]
  %v4154 = vld [vmem:[%s4 + $0x2b8] sm:$0xff]
  %v4155 = vld [vmem:[%s4 + $0x2c0] sm:$0xff]
  %v4156 = vld [vmem:[%s4 + $0x2c8] sm:$0xff]
  %v4157 = vld [vmem:[%s4 + $0x2d0] sm:$0xff]
  %v4158 = vld [vmem:[%s4 + $0x2d8] sm:$0xff]
  %v4159 = vld [vmem:[%s4 + $0x2e0] sm:$0xff]
  %v4160 = vld [vmem:[%s4 + $0x2e8] sm:$0xff]
  %v4161 = vld [vmem:[%s4 + $0x2f0] sm:$0xff]
  %v4162 = vld [vmem:[%s4 + $0x2f8] sm:$0xff]
  %v4163 = vld [vmem:[%s4 + $0x300] sm:$0xff]
  %v4164 = vld [vmem:[%s4 + $0x308] sm:$0xff]
  %v4165 = vld [vmem:[%s4 + $0x310] sm:$0xff]
  %v4166 = vld [vmem:[%s4 + $0x318] sm:$0xff]
  %v4167 = vld [vmem:[%s4 + $0x320] sm:$0xff]
  %v4168 = vld [vmem:[%s4 + $0x328] sm:$0xff]
  %v4169 = vld [vmem:[%s4 + $0x330] sm:$0xff]
  %v4170 = vld [vmem:[%s4 + $0x338] sm:$0xff]
  %v4171 = vld [vmem:[%s4 + $0x340] sm:$0xff]
  %v4172 = vld [vmem:[%s4 + $0x348] sm:$0xff]
  %v4173 = vld [vmem:[%s4 + $0x350] sm:$0xff]
  %v4174 = vld [vmem:[%s4 + $0x358] sm:$0xff]
  %v4175 = vld [vmem:[%s4 + $0x360] sm:$0xff]
  %v4176 = vld [vmem:[%s4 + $0x368] sm:$0xff]
  %v4177 = vld [vmem:[%s4 + $0x370] sm:$0xff]
  %v4178 = vld [vmem:[%s4 + $0x378] sm:$0xff]
  %v4179 = vld [vmem:[%s4 + $0x380] sm:$0xff]
  %v4180 = vld [vmem:[%s4 + $0x388] sm:$0xff]
  %v4181 = vld [vmem:[%s4 + $0x390] sm:$0xff]
  %v4182 = vld [vmem:[%s4 + $0x398] sm:$0xff]
  %v4183 = vld [vmem:[%s4 + $0x3a0] sm:$0xff]
  %v4184 = vld [vmem:[%s4 + $0x3a8] sm:$0xff]
  %v4185 = vld [vmem:[%s4 + $0x3b0] sm:$0xff]
  %v4186 = vld [vmem:[%s4 + $0x3b8] sm:$0xff]
  %v4187 = vld [vmem:[%s4 + $0x3c0] sm:$0xff]
  %v4188 = vld [vmem:[%s4 + $0x3c8] sm:$0xff]
  %v4189 = vld [vmem:[%s4 + $0x3d0] sm:$0xff]
  %v4190 = vld [vmem:[%s4 + $0x3d8] sm:$0xff]
  %v4191 = vld [vmem:[%s4 + $0x3e0] sm:$0xff]
  %v4192 = vld [vmem:[%s4 + $0x3e8] sm:$0xff]
  %v4193 = vld [vmem:[%s4 + $0x3f0] sm:$0xff]
  %v4194 = vld [vmem:[%s4 + $0x3f8] sm:$0xff]
  %4195 = vmatprep.subr.mxu0 %v4068
  %4196 = vmatpush1.msra.mxu0 %v4067
  %4197 = vmatprep.subr.mxu0 %v4072
  %4198 = vmatpush1.msra.mxu0 %v4071
  %4199 = vmatprep.subr.mxu0 %v4076
  %4200 = vmatpush1.msra.mxu0 %v4075
  %4201 = vmatprep.subr.mxu0 %v4080
  %4202 = vmatpush1.msra.mxu0 %v4079
  %4203 = vmatprep.subr.mxu0 %v4084
  %4204 = vmatpush1.msra.mxu0 %v4083
  %4205 = vmatprep.subr.mxu0 %v4088
  %4206 = vmatpush1.msra.mxu0 %v4087
  %4207 = vmatprep.subr.mxu0 %v4092
  %4208 = vmatpush1.msra.mxu0 %v4091
  %4209 = vmatprep.subr.mxu0 %v4096
  %4210 = vmatpush1.msra.mxu0 %v4095
  %4211 = vmatprep.subr.mxu0 %v4100
  %4212 = vmatpush1.msra.mxu0 %v4099
  %4213 = vmatprep.subr.mxu0 %v4104
  %4214 = vmatpush1.msra.mxu0 %v4103
  %4215 = vmatprep.subr.mxu0 %v4108
  %4216 = vmatpush1.msra.mxu0 %v4107
  %4217 = vmatprep.subr.mxu0 %v4112
  %4218 = vmatpush1.msra.mxu0 %v4111
  %4219 = vmatprep.subr.mxu0 %v4116
  %4220 = vmatpush1.msra.mxu0 %v4115
  %4221 = vmatprep.subr.mxu0 %v4120
  %4222 = vmatpush1.msra.mxu0 %v4119
  %4223 = vmatprep.subr.mxu0 %v4124
  %4224 = vmatpush1.msra.mxu0 %v4123
  %4225 = vmatprep.subr.mxu0 %v4128
  %4226 = vmatpush1.msra.mxu0 %v4127
  %4227 = vmatprep.subr.mxu0 %v4132
  %4228 = vmatpush1.msra.mxu0 %v4131
  %4229 = vmatprep.subr.mxu0 %v4136
  %4230 = vmatpush1.msra.mxu0 %v4135
  %4231 = vmatprep.subr.mxu0 %v4140
  %4232 = vmatpush1.msra.mxu0 %v4139
  %4233 = vmatprep.subr.mxu0 %v4144
  %4234 = vmatpush1.msra.mxu0 %v4143
  %4235 = vmatprep.subr.mxu0 %v4148
  %4236 = vmatpush1.msra.mxu0 %v4147
  %4237 = vmatprep.subr.mxu0 %v4152
  %4238 = vmatpush1.msra.mxu0 %v4151
  %4239 = vmatprep.subr.mxu0 %v4156
  %4240 = vmatpush1.msra.mxu0 %v4155
  %4241 = vmatprep.subr.mxu0 %v4160
  %4242 = vmatpush1.msra.mxu0 %v4159
  %4243 = vmatprep.subr.mxu0 %v4164
  %4244 = vmatpush1.msra.mxu0 %v4163
  %4245 = vmatprep.subr.mxu0 %v4168
  %4246 = vmatpush1.msra.mxu0 %v4167
  %4247 = vmatprep.subr.mxu0 %v4172
  %4248 = vmatpush1.msra.mxu0 %v4171
  %4249 = vmatprep.subr.mxu0 %v4176
  %4250 = vmatpush1.msra.mxu0 %v4175
  %4251 = vmatprep.subr.mxu0 %v4180
  %4252 = vmatpush1.msra.mxu0 %v4179
  %4253 = vmatprep.subr.mxu0 %v4184
  %4254 = vmatpush1.msra.mxu0 %v4183
  %4255 = vmatprep.subr.mxu0 %v4188
  %4256 = vmatpush1.msra.mxu0 %v4187
  %4257 = vmatprep.subr.mxu0 %v4192
  %4258 = vmatpush1.msra.mxu0 %v4191
  %4259 = vmatprep.mubr.f32.mxu0 %v3821
  %4260 = vmatmul.mubr.f32.gmra.mrb[0].mxu0 %v4066
  %v4261 = vpop.f32.mrb[0].mxu0
  %v4262 = vadd.f32 %v78, %v4261
  %v4263 = vpop.f32.mrb[0].mxu0
  %v4264 = vadd.f32 %v82, %v4263
  %4265 = vdwg.mxu0
  %4266 = vmatprep.subr.mxu0 %v4070
  %4267 = vmatpush1.msra.mxu0 %v4069
  %4268 = vmatprep.subr.mxu0 %v4074
  %4269 = vmatpush1.msra.mxu0 %v4073
  %4270 = vmatprep.subr.mxu0 %v4078
  %4271 = vmatpush1.msra.mxu0 %v4077
  %4272 = vmatprep.subr.mxu0 %v4082
  %4273 = vmatpush1.msra.mxu0 %v4081
  %4274 = vmatprep.subr.mxu0 %v4086
  %4275 = vmatpush1.msra.mxu0 %v4085
  %4276 = vmatprep.subr.mxu0 %v4090
  %4277 = vmatpush1.msra.mxu0 %v4089
  %4278 = vmatprep.subr.mxu0 %v4094
  %4279 = vmatpush1.msra.mxu0 %v4093
  %4280 = vmatprep.subr.mxu0 %v4098
  %4281 = vmatpush1.msra.mxu0 %v4097
  %4282 = vmatprep.subr.mxu0 %v4102
  %4283 = vmatpush1.msra.mxu0 %v4101
  %4284 = vmatprep.subr.mxu0 %v4106
  %4285 = vmatpush1.msra.mxu0 %v4105
  %4286 = vmatprep.subr.mxu0 %v4110
  %4287 = vmatpush1.msra.mxu0 %v4109
  %4288 = vmatprep.subr.mxu0 %v4114
  %4289 = vmatpush1.msra.mxu0 %v4113
  %4290 = vmatprep.subr.mxu0 %v4118
  %4291 = vmatpush1.msra.mxu0 %v4117
  %4292 = vmatprep.subr.mxu0 %v4122
  %4293 = vmatpush1.msra.mxu0 %v4121
  %4294 = vmatprep.subr.mxu0 %v4126
  %4295 = vmatpush1.msra.mxu0 %v4125
  %4296 = vmatprep.subr.mxu0 %v4130
  %4297 = vmatpush1.msra.mxu0 %v4129
  %4298 = vmatprep.subr.mxu0 %v4134
  %4299 = vmatpush1.msra.mxu0 %v4133
  %4300 = vmatprep.subr.mxu0 %v4138
  %4301 = vmatpush1.msra.mxu0 %v4137
  %4302 = vmatprep.subr.mxu0 %v4142
  %4303 = vmatpush1.msra.mxu0 %v4141
  %4304 = vmatprep.subr.mxu0 %v4146
  %4305 = vmatpush1.msra.mxu0 %v4145
  %4306 = vmatprep.subr.mxu0 %v4150
  %4307 = vmatpush1.msra.mxu0 %v4149
  %4308 = vmatprep.subr.mxu0 %v4154
  %4309 = vmatpush1.msra.mxu0 %v4153
  %4310 = vmatprep.subr.mxu0 %v4158
  %4311 = vmatpush1.msra.mxu0 %v4157
  %4312 = vmatprep.subr.mxu0 %v4162
  %4313 = vmatpush1.msra.mxu0 %v4161
  %4314 = vmatprep.subr.mxu0 %v4166
  %4315 = vmatpush1.msra.mxu0 %v4165
  %4316 = vmatprep.subr.mxu0 %v4170
  %4317 = vmatpush1.msra.mxu0 %v4169
  %4318 = vmatprep.subr.mxu0 %v4174
  %4319 = vmatpush1.msra.mxu0 %v4173
  %4320 = vmatprep.subr.mxu0 %v4178
  %4321 = vmatpush1.msra.mxu0 %v4177
  %4322 = vmatprep.subr.mxu0 %v4182
  %4323 = vmatpush1.msra.mxu0 %v4181
  %4324 = vmatprep.subr.mxu0 %v4186
  %4325 = vmatpush1.msra.mxu0 %v4185
  %4326 = vmatprep.subr.mxu0 %v4190
  %4327 = vmatpush1.msra.mxu0 %v4189
  %4328 = vmatprep.subr.mxu0 %v4194
  %4329 = vmatpush1.msra.mxu0 %v4193
  %4330 = vmatprep.mubr.f32.mxu0 %v3821
  %4331 = vmatmul.mubr.f32.gmra.mrb[0].mxu0 %v4066
  %v4332 = vpop.f32.mrb[0].mxu0
  %v4333 = vadd.f32 %v86, %v4332
  %v4334 = vpop.f32.mrb[0].mxu0
  %v4335 = vadd.f32 %v90, %v4334
  %4336 = vdwg.mxu0
  %v4337 = vmul.f32 %v4262, 0.5
  %v4338 = vtanh.pop %v4337
  %v4339 = vadd.f32 %v4338, 1.0
  %v4340 = vmul.f32 %v4339, 0.5
  %v4341 = vmul.f32 %v4264, 0.5
  %v4342 = vtanh.pop %v4341
  %v4343 = vadd.f32 %v4342, 1.0
  %v4344 = vmul.f32 %v4343, 0.5
  %v4345 = vtanh.pop %v4333
  %v4346 = vmul.f32 %v4335, 0.5
  %v4347 = vtanh.pop %v4346
  %v4348 = vadd.f32 %v4347, 1.0
  %v4349 = vmul.f32 %v4348, 0.5
  %v4350 = vmul.f32 %v4344, %v3819
  %v4351 = vmul.f32 %v4340, %v4345
  %v4352 = vadd.f32 %v4350, %v4351
  %v4353 = vtanh.pop %v4352
  %v4354 = vmul.f32 %v4349, %v4353
  %s4355 = scalar_lea.vmem [#allocation2], 56
  %4356 = vst [vmem:[%s4355] sm:$0xff] %v4354
  %v4357 = vld [vmem:[#allocation2] sm:$0xff]
  %v4358 = vld [vmem:[#allocation2 + $0x8] sm:$0xff]
  %v4359 = vld [vmem:[#allocation2 + $0x10] sm:$0xff]
  %v4360 = vld [vmem:[#allocation2 + $0x18] sm:$0xff]
  %v4361 = vld [vmem:[#allocation2 + $0x20] sm:$0xff]
  %v4362 = vld [vmem:[#allocation2 + $0x28] sm:$0xff]
  %v4363 = vld [vmem:[#allocation2 + $0x30] sm:$0xff]
  %v4364 = vld [vmem:[#allocation2 + $0x38] sm:$0xff]
  %v4365 = vld [vmem:[%s6] sm:$0xff]
  %v4366 = vld [vmem:[%s6 + $0x8] sm:$0xff]
  %v4367 = vld [vmem:[%s6 + $0x10] sm:$0xff]
  %v4368 = vld [vmem:[%s6 + $0x18] sm:$0xff]
  %v4369 = vld [vmem:[%s6 + $0x20] sm:$0xff]
  %v4370 = vld [vmem:[%s6 + $0x28] sm:$0xff]
  %v4371 = vld [vmem:[%s6 + $0x30] sm:$0xff]
  %v4372 = vld [vmem:[%s6 + $0x38] sm:$0xff]
  %v4373 = vld [vmem:[%s6 + $0x40] sm:$0xff]
  %v4374 = vld [vmem:[%s6 + $0x48] sm:$0xff]
  %v4375 = vld [vmem:[%s6 + $0x50] sm:$0xff]
  %v4376 = vld [vmem:[%s6 + $0x58] sm:$0xff]
  %v4377 = vld [vmem:[%s6 + $0x60] sm:$0xff]
  %v4378 = vld [vmem:[%s6 + $0x68] sm:$0xff]
  %v4379 = vld [vmem:[%s6 + $0x70] sm:$0xff]
  %v4380 = vld [vmem:[%s6 + $0x78] sm:$0xff]
  %v4381 = vld [vmem:[%s7] sm:$0x1]
  %v4383 = vlaneseq
  %v4384 = vshrl.u32 %v4383, 7
  %v4385 = vsub.s32 0, %v4384
  %v4386 = vrot.slane %v4381, %v4385
  %4388 = vmatprep.subr.mxu0 0.0
  %4389 = vmatpush1.msra.mxu0 %v4365
  %4390 = vmatprep.subr.mxu0 0.0
  %4391 = vmatpush1.msra.mxu0 %v4366
  %4392 = vmatprep.subr.mxu0 0.0
  %4393 = vmatpush1.msra.mxu0 %v4367
  %4394 = vmatprep.subr.mxu0 0.0
  %4395 = vmatpush1.msra.mxu0 %v4368
  %4396 = vmatprep.subr.mxu0 0.0
  %4397 = vmatpush1.msra.mxu0 %v4369
  %4398 = vmatprep.subr.mxu0 0.0
  %4399 = vmatpush1.msra.mxu0 %v4370
  %4400 = vmatprep.subr.mxu0 0.0
  %4401 = vmatpush1.msra.mxu0 %v4371
  %4402 = vmatprep.subr.mxu0 0.0
  %4403 = vmatpush1.msra.mxu0 %v4372
  %4404 = vmatprep.subr.mxu0 0.0
  %4405 = vmatpush1.msra.mxu0 %v4373
  %4406 = vmatprep.subr.mxu0 0.0
  %4407 = vmatpush1.msra.mxu0 %v4374
  %4408 = vmatprep.subr.mxu0 0.0
  %4409 = vmatpush1.msra.mxu0 %v4375
  %4410 = vmatprep.subr.mxu0 0.0
  %4411 = vmatpush1.msra.mxu0 %v4376
  %4412 = vmatprep.subr.mxu0 0.0
  %4413 = vmatpush1.msra.mxu0 %v4377
  %4414 = vmatprep.subr.mxu0 0.0
  %4415 = vmatpush1.msra.mxu0 %v4378
  %4416 = vmatprep.subr.mxu0 0.0
  %4417 = vmatpush1.msra.mxu0 %v4379
  %4418 = vmatprep.subr.mxu0 0.0
  %4419 = vmatpush1.msra.mxu0 %v4380
  %4420 = vmatprep.subr.mxu0 0.0
  %4421 = vmatpush1.msra.mxu0 0.0
  %4422 = vmatprep.subr.mxu0 0.0
  %4423 = vmatpush1.msra.mxu0 0.0
  %4424 = vmatprep.subr.mxu0 0.0
  %4425 = vmatpush1.msra.mxu0 0.0
  %4426 = vmatprep.subr.mxu0 0.0
  %4427 = vmatpush1.msra.mxu0 0.0
  %4428 = vmatprep.subr.mxu0 0.0
  %4429 = vmatpush1.msra.mxu0 0.0
  %4430 = vmatprep.subr.mxu0 0.0
  %4431 = vmatpush1.msra.mxu0 0.0
  %4432 = vmatprep.subr.mxu0 0.0
  %4433 = vmatpush1.msra.mxu0 0.0
  %4434 = vmatprep.subr.mxu0 0.0
  %4435 = vmatpush1.msra.mxu0 0.0
  %4436 = vmatprep.subr.mxu0 0.0
  %4437 = vmatpush1.msra.mxu0 0.0
  %4438 = vmatprep.subr.mxu0 0.0
  %4439 = vmatpush1.msra.mxu0 0.0
  %4440 = vmatprep.subr.mxu0 0.0
  %4441 = vmatpush1.msra.mxu0 0.0
  %4442 = vmatprep.subr.mxu0 0.0
  %4443 = vmatpush1.msra.mxu0 0.0
  %4444 = vmatprep.subr.mxu0 0.0
  %4445 = vmatpush1.msra.mxu0 0.0
  %4446 = vmatprep.subr.mxu0 0.0
  %4447 = vmatpush1.msra.mxu0 0.0
  %4448 = vmatprep.subr.mxu0 0.0
  %4449 = vmatpush1.msra.mxu0 0.0
  %4450 = vmatprep.subr.mxu0 0.0
  %4451 = vmatpush1.msra.mxu0 0.0
  %4452 = vmatprep.mubr.f32.mxu0 0.0
  %4453 = vmatmul.mubr.f32.gmra.mrb[0].mxu0 %v4357
  %v4454 = vpop.f32.mrb[0].mxu0
  %v4455 = vadd.f32 %v4386, %v4454
  %v4456 = vpop.f32.mrb[0].mxu0
  %4457 = vmatprep.mubr.f32.mxu0 0.0
  %4458 = vmatmul.mubr.f32.gmra.mrb[0].mxu0 %v4358
  %v4459 = vpop.f32.mrb[0].mxu0
  %v4460 = vadd.f32 %v4386, %v4459
  %v4461 = vpop.f32.mrb[0].mxu0
  %4462 = vmatprep.mubr.f32.mxu0 0.0
  %4463 = vmatmul.mubr.f32.gmra.mrb[0].mxu0 %v4359
  %v4464 = vpop.f32.mrb[0].mxu0
  %v4465 = vadd.f32 %v4386, %v4464
  %v4466 = vpop.f32.mrb[0].mxu0
  %4467 = vmatprep.mubr.f32.mxu0 0.0
  %4468 = vmatmul.mubr.f32.gmra.mrb[0].mxu0 %v4360
  %v4469 = vpop.f32.mrb[0].mxu0
  %v4470 = vadd.f32 %v4386, %v4469
  %v4471 = vpop.f32.mrb[0].mxu0
  %4472 = vmatprep.mubr.f32.mxu0 0.0
  %4473 = vmatmul.mubr.f32.gmra.mrb[0].mxu0 %v4361
  %v4474 = vpop.f32.mrb[0].mxu0
  %v4475 = vadd.f32 %v4386, %v4474
  %v4476 = vpop.f32.mrb[0].mxu0
  %4477 = vmatprep.mubr.f32.mxu0 0.0
  %4478 = vmatmul.mubr.f32.gmra.mrb[0].mxu0 %v4362
  %v4479 = vpop.f32.mrb[0].mxu0
  %v4480 = vadd.f32 %v4386, %v4479
  %v4481 = vpop.f32.mrb[0].mxu0
  %4482 = vmatprep.mubr.f32.mxu0 0.0
  %4483 = vmatmul.mubr.f32.gmra.mrb[0].mxu0 %v4363
  %v4484 = vpop.f32.mrb[0].mxu0
  %v4485 = vadd.f32 %v4386, %v4484
  %v4486 = vpop.f32.mrb[0].mxu0
  %4487 = vmatprep.mubr.f32.mxu0 0.0
  %4488 = vmatmul.mubr.f32.gmra.mrb[0].mxu0 %v4364
  %v4489 = vpop.f32.mrb[0].mxu0
  %v4490 = vadd.f32 %v4386, %v4489
  %v4491 = vpop.f32.mrb[0].mxu0
  %4492 = vdwg.mxu0
  %4493 = vst [vmem:[%s8] sm:$0xff] %v4455
  %4494 = vst [vmem:[%s8 + $0x8] sm:$0xff] %v4460
  %4495 = vst [vmem:[%s8 + $0x10] sm:$0xff] %v4465
  %4496 = vst [vmem:[%s8 + $0x18] sm:$0xff] %v4470
  %4497 = vst [vmem:[%s8 + $0x20] sm:$0xff] %v4475
  %4498 = vst [vmem:[%s8 + $0x28] sm:$0xff] %v4480
  %4499 = vst [vmem:[%s8 + $0x30] sm:$0xff] %v4485
  %4500 = vst [vmem:[%s8 + $0x38] sm:$0xff] %v4490
  // Predicated region
  $region34: #{lstm_text_model_forward.1} parent=0 // pred_check
    _
  $region35: #{lstm_text_model_forward.1} parent=0 // pred_check_branch
    %4502 = sbr.rel (0) target = $region37
  $region36: #{lstm_text_model_forward.1} parent=0 // pred_region
    _
  $region37: #{lstm_text_model_forward.1} parent=0 // pred_fallthru
    _
  // Predicated region
  $region38: #{lstm_text_model_forward.1} parent=0 // pred_check
    _
  $region39: #{lstm_text_model_forward.1} parent=0 // pred_check_branch
    %4504 = sbr.rel (0) target = $region41
  $region40: #{lstm_text_model_forward.1} parent=0 // pred_region
    _
  $region41: #{lstm_text_model_forward.1} parent=0 // pred_fallthru
    _

</llo_original>
